<compile_context>
chip_gen: v7x
topology: tpu7x:2x2x1
jax: 0.10.0
libtpu: 0.0.40
codegen_flags: <defaults>
</compile_context>

<pallas_src>
import math
from functools import partial

import jax
import jax.numpy as jnp
from jax import lax
from jax.experimental import pallas as pl
from jax.experimental.pallas import tpu as pltpu


LN_EPS = 1e-6  # the PyTorch module uses partial(nn.LayerNorm, eps=1e-06)


# ----------------------------- math helpers (used in-kernel and in reference) -------

def _layernorm(v, w, b, eps=LN_EPS):
    mu = jnp.mean(v, axis=-1, keepdims=True)
    var = jnp.mean((v - mu) ** 2, axis=-1, keepdims=True)
    return (v - mu) * lax.rsqrt(var + eps) * w + b


def _gelu_tanh(x):
    # tanh GELU (EUP-friendly). torch.nn.GELU() is erf-based; max abs diff ~1e-3.
    c = math.sqrt(2.0 / math.pi)
    return 0.5 * x * (1.0 + jnp.tanh(c * (x + 0.044715 * x * x * x)))


# ----------------------------- Pallas kernels ---------------------------------------

def linear_kernel(x_ref, w_ref, b_ref, o_ref):
    # x: (M, K) bf16, w: (K, N) bf16, b: (1, N) f32  ->  o: (M, N) f32
    o_ref[...] = (jnp.dot(x_ref[...], w_ref[...], preferred_element_type=jnp.float32)
                  + b_ref[...]).astype(o_ref.dtype)


def linear_pallas(x2d, w_t, b_row, *, block_m=512):
    M, K = x2d.shape
    N = w_t.shape[1]
    out_shape = jax.ShapeDtypeStruct((M, N), jnp.float32)
    if M <= block_m or M % block_m != 0:
        # small problem: single block, no grid
        return pl.pallas_call(linear_kernel, out_shape=out_shape)(x2d, w_t, b_row)
    # realistic patch-embedding sizes: tile rows, keep K/N whole, parallel over rows
    return pl.pallas_call(
        linear_kernel,
        grid=(M // block_m,),
        in_specs=[pl.BlockSpec((block_m, K), lambda i: (i, 0)),
                  pl.BlockSpec((K, N), lambda i: (0, 0)),
                  pl.BlockSpec((1, N), lambda i: (0, 0))],
        out_specs=pl.BlockSpec((block_m, N), lambda i: (i, 0)),
        out_shape=out_shape,
        compiler_params=pltpu.CompilerParams(
            dimension_semantics=("parallel",),
            vmem_limit_bytes=64 * 1024 * 1024),
    )(x2d, w_t, b_row)


def hit_block_kernel(*refs, B, S, num_heads, has_pool, has_head):
    """One EncoderBlockHiT for the whole batch.

    Optional fusions (static flags): `has_pool` prepends the PoolingTokens Linear
    (bias-free projection of tokens and cls), `has_head` appends the final
    LayerNorm + classification head on the updated class token.
    """
    it = iter(refs)
    pool_w_ref = next(it) if has_pool else None
    tok_ref = next(it)        # (B*S, Cin) f32
    cls_ref = next(it)        # (B, Cin)   f32
    ln1w = next(it); ln1b = next(it)
    wq = next(it); bq = next(it)          # (D, D) bf16, (1, D) f32
    wkv = next(it); bkv = next(it)        # (D, 2D) bf16, (1, 2D) f32
    wo = next(it); bo = next(it)          # (D, D) bf16, (1, D) f32
    ln2w = next(it); ln2b = next(it)
    w1 = next(it); b1 = next(it)          # (D, M) bf16, (1, M) f32
    w2 = next(it); b2 = next(it)          # (M, D) bf16, (1, D) f32
    hsel = next(it); hselt = next(it)     # (D, H), (H, D) f32 head-selector masks
    if has_head:
        lnfw = next(it); lnfb = next(it)
        hw = next(it); hb = next(it)      # (D, Npad) bf16, (1, Npad) f32
    tok_out = next(it)
    cls_out = next(it)
    logits_out = next(it) if has_head else None

    tokens = tok_ref[...]                 # f32
    cls = cls_ref[...]                    # f32
    if has_pool:
        pw = pool_w_ref[...]              # (Cin, D) bf16, bias-free Linear
        tokens = jnp.dot(tokens.astype(jnp.bfloat16), pw,
                         preferred_element_type=jnp.float32)
        cls = jnp.dot(cls.astype(jnp.bfloat16), pw,
                      preferred_element_type=jnp.float32)

    D = wq.shape[1]
    hd = D // num_heads
    scale = 1.0 / math.sqrt(hd)

    # ---- cross-attention: class token (query) attends over the image tokens ----
    l1w = ln1w[...]; l1b = ln1b[...]
    kv = _layernorm(tokens, l1w, l1b).astype(jnp.bfloat16)     # (B*S, D)
    qn = _layernorm(cls, l1w, l1b).astype(jnp.bfloat16)        # (B, D)

    q = jnp.dot(qn, wq[...], preferred_element_type=jnp.float32) + bq[...]      # (B, D)
    kvp = jnp.dot(kv, wkv[...], preferred_element_type=jnp.float32) + bkv[...]  # (B*S, 2D)
    k2 = kvp[:, :D]
    v2 = kvp[:, D:]

    sel = hsel[...]      # (D, H): sel[d, h] = 1 iff feature d belongs to head h
    selt = hselt[...]    # (H, D)

    # TODO(synk): the score/softmax/context part is unrolled over the (small) batch;
    # for large B vectorize it via a (B*H, S) score layout instead of a Python loop.
    ctx_rows = []
    for b in range(B):
        k_b = k2[b * S:(b + 1) * S, :]                                   # (S, D)
        v_b = v2[b * S:(b + 1) * S, :]                                   # (S, D)
        prod = q[b:b + 1, :] * k_b                                       # (S, D)
        s_bh = jnp.dot(prod, sel, preferred_element_type=jnp.float32) * scale   # (S, H)
        s_bh = s_bh - jnp.max(s_bh, axis=0, keepdims=True)
        p = jnp.exp(s_bh)
        p = p * pl.reciprocal(jnp.sum(p, axis=0, keepdims=True), approx=True)   # (S, H)
        p_full = jnp.dot(p, selt, preferred_element_type=jnp.float32)           # (S, D)
        ctx_rows.append(jnp.sum(p_full * v_b, axis=0, keepdims=True))           # (1, D)
    ctx = jnp.concatenate(ctx_rows, axis=0).astype(jnp.bfloat16)                # (B, D)

    attn = jnp.dot(ctx, wo[...], preferred_element_type=jnp.float32) + bo[...]  # (B, D)
    new_cls = cls + attn
    cls_out[...] = new_cls.astype(cls_out.dtype)

    # ---- token MLP (HiT: applied to image tokens only) over all B*S rows --------
    y = _layernorm(tokens, ln2w[...], ln2b[...]).astype(jnp.bfloat16)
    h1 = jnp.dot(y, w1[...], preferred_element_type=jnp.float32) + b1[...]
    h1 = _gelu_tanh(h1).astype(jnp.bfloat16)
    h2 = jnp.dot(h1, w2[...], preferred_element_type=jnp.float32) + b2[...]
    tok_out[...] = (tokens + h2).astype(tok_out.dtype)

    # ---- fused final LayerNorm + classification head (last block only) ----------
    if has_head:
        z = _layernorm(new_cls, lnfw[...], lnfb[...]).astype(jnp.bfloat16)
        logits_out[...] = (jnp.dot(z, hw[...], preferred_element_type=jnp.float32)
                           + hb[...]).astype(logits_out.dtype)


def hit_block_pallas(tokens2d, cls2d, blk, *, B, S, num_heads, pool_w=None, head=None):
    inputs = []
    if pool_w is not None:
        inputs.append(pool_w)
    inputs += [tokens2d, cls2d,
               blk['ln1w'], blk['ln1b'], blk['wq'], blk['bq'], blk['wkv'], blk['bkv'],
               blk['wo'], blk['bo'], blk['ln2w'], blk['ln2b'],
               blk['w1'], blk['b1'], blk['w2'], blk['b2'],
               blk['hsel'], blk['hselt']]
    if head is not None:
        inputs += [head['ln_w'], head['ln_b'], head['w_t'], head['b']]

    D = blk['wq'].shape[1]
    out_shape = [jax.ShapeDtypeStruct((B * S, D), jnp.float32),
                 jax.ShapeDtypeStruct((B, D), jnp.float32)]
    if head is not None:
        out_shape.append(jax.ShapeDtypeStruct((B, head['w_t'].shape[1]), jnp.float32))

    return pl.pallas_call(
        partial(hit_block_kernel, B=B, S=S, num_heads=num_heads,
                has_pool=pool_w is not None, has_head=head is not None),
        out_shape=tuple(out_shape),
        compiler_params=pltpu.CompilerParams(vmem_limit_bytes=64 * 1024 * 1024),
    )(*inputs)


# ----------------------------- parameter construction -------------------------------

def init_block(key, D, num_heads, mlp_ratio):
    hd = D // num_heads
    M = mlp_ratio * D
    ks = jax.random.split(key, 5)
    in_proj_w = jax.random.normal(ks[0], (3 * D, D), jnp.float32) * 0.05
    in_proj_b = jax.random.normal(ks[1], (3 * D,), jnp.float32) * 0.02
    out_proj_w = jax.random.normal(ks[2], (D, D), jnp.float32) * 0.05
    out_proj_b = jnp.zeros((D,), jnp.float32)
    w1 = jax.random.normal(ks[3], (M, D), jnp.float32) * 0.05
    b1 = jnp.zeros((M,), jnp.float32)
    w2 = jax.random.normal(ks[4], (D, M), jnp.float32) * 0.05
    b2 = jnp.zeros((D,), jnp.float32)

    # torch MultiheadAttention layout: q|k|v stacked in in_proj, head h owns rows
    # h*hd:(h+1)*hd of each projection.  We pre-transpose so every in-kernel matmul
    # is (rows, K) @ (K, N), and fuse K and V into one (D, 2D) weight.
    wq_t = in_proj_w[:D].T                                              # (D, D)
    wkv_t = jnp.concatenate([in_proj_w[D:2 * D].T, in_proj_w[2 * D:].T], axis=1)  # (D, 2D)
    bq = in_proj_b[:D].reshape(1, D)
    bkv = in_proj_b[D:].reshape(1, 2 * D)

    d_idx = jnp.arange(D)[:, None]
    h_idx = jnp.arange(num_heads)[None, :]
    hsel = (d_idx // hd == h_idx).astype(jnp.float32)                   # (D, H)

    return dict(
        ln1w=jnp.ones((1, D), jnp.float32), ln1b=jnp.zeros((1, D), jnp.float32),
        wq=wq_t.astype(jnp.bfloat16), bq=bq,
        wkv=wkv_t.astype(jnp.bfloat16), bkv=bkv,
        wo=out_proj_w.T.astype(jnp.bfloat16), bo=out_proj_b.reshape(1, D),
        ln2w=jnp.ones((1, D), jnp.float32), ln2b=jnp.zeros((1, D), jnp.float32),
        w1=w1.T.astype(jnp.bfloat16), b1=b1.reshape(1, M),
        w2=w2.T.astype(jnp.bfloat16), b2=b2.reshape(1, D),
        hsel=hsel, hselt=hsel.T,
    )


def init_params(key, cfg):
    p = cfg['patch_size']
    dims = cfg['block_dims']
    H = cfg['num_heads']
    D0, Dl = dims[0], dims[-1]
    seq_len = (cfg['image_size'] // p) ** 2 + 1

    k_conv, k_pos, k_rest = jax.random.split(key, 3)
    fan_in = 3 * p * p
    conv_w = jax.random.normal(k_conv, (D0, 3, p, p), jnp.float32) * math.sqrt(1.0 / fan_in)
    pos_emb = jax.random.normal(k_pos, (1, seq_len, D0), jnp.float32) * 0.02
    class_token = jnp.zeros((1, 1, D0), jnp.float32)

    stages = []
    last_dim = D0
    for idx, (nl, D) in enumerate(zip(cfg['blocks'], dims)):
        k_stage = jax.random.fold_in(k_rest, idx)
        stage = {}
        if idx != 0:
            k_pool, k_stage = jax.random.split(k_stage)
            pw = jax.random.normal(k_pool, (D, last_dim), jnp.float32) * 0.05
            stage['pool_w'] = pw.T.astype(jnp.bfloat16)     # (last_dim, D), Linear(bias=False)
        else:
            stage['pool_w'] = None                          # factor==1, in==out -> Identity
        stage['blocks'] = [init_block(jax.random.fold_in(k_stage, j), D, H, cfg['mlp_ratio'])
                           for j in range(nl)]
        last_dim = D
        stages.append(stage)

    ncls = cfg['num_classes']
    npad = ((ncls + 127) // 128) * 128                      # lane-dense head output
    head = dict(
        ln_w=jnp.ones((1, Dl), jnp.float32), ln_b=jnp.zeros((1, Dl), jnp.float32),
        # heads.head is zero-initialized in the PyTorch module
        w_t=jnp.zeros((Dl, npad), jnp.bfloat16),
        b=jnp.zeros((1, npad), jnp.float32),
    )

    return dict(
        conv_w_t=conv_w.reshape(D0, 3 * p * p).T.astype(jnp.bfloat16),
        conv_b=jnp.zeros((1, D0), jnp.float32),
        pos_emb=pos_emb, class_token=class_token,
        stages=stages, head=head,
    )


# ----------------------------- forward pass (Pallas) --------------------------------

def model_forward(x_img, params, cfg):
    B = x_img.shape[0]
    p = cfg['patch_size']
    D0 = cfg['block_dims'][0]
    nh = cfg['image_size'] // p
    S = nh * nh

    # _process_input: Conv2d(kernel=stride=patch) == matmul over flattened patches
    xp = (x_img.reshape(B, 3, nh, p, nh, p)
          .transpose(0, 2, 4, 1, 3, 5)
          .reshape(B * S, 3 * p * p)).astype(jnp.bfloat16)
    tokens = linear_pallas(xp, params['conv_w_t'], params['conv_b'])     # (B*S, D0) f32
    tokens = tokens.reshape(B, S, D0) + params['pos_emb'][:, 1:]
    cls = (jnp.broadcast_to(params['class_token'][:, 0], (B, D0))
           + params['pos_emb'][:, 0])                                    # (B, D0)

    n_stages = len(params['stages'])
    logits_pad = None
    for idx, stage in enumerate(params['stages']):
        if idx != 0:
            # PoolingTokens(factor=2): 2x2 avg-pool on the token grid (layout glue in
            # plain JAX); its Linear is fused into the first block kernel below.
            _, Sc, C = tokens.shape
            sS = int(math.sqrt(Sc))
            tokens = tokens.reshape(B, sS // 2, 2, sS // 2, 2, C).mean(axis=(2, 4))
            S = (sS // 2) ** 2
            tokens = tokens.reshape(B, S, C)
        tokens2d = tokens.reshape(B * S, tokens.shape[-1])
        n_blocks = len(stage['blocks'])
        for j, blk in enumerate(stage['blocks']):
            pool_w = stage['pool_w'] if (idx != 0 and j == 0) else None
            is_last = (idx == n_stages - 1) and (j == n_blocks - 1)
            head = params['head'] if is_last else None
            outs = hit_block_pallas(tokens2d, cls, blk, B=B, S=S,
                                    num_heads=cfg['num_heads'],
                                    pool_w=pool_w, head=head)
            if is_last:
                tokens2d, cls, logits_pad = outs
            else:
                tokens2d, cls = outs
        tokens = tokens2d.reshape(B, S, tokens2d.shape[-1])

    logits = logits_pad[:, :cfg['num_classes']]
    return logits, cls, tokens


# ----------------------------- pure-JAX reference (same numerics) -------------------

def _ref_dot(a, w):
    return jnp.dot(a.astype(jnp.bfloat16), w, preferred_element_type=jnp.float32)


def _ref_block(tokens2d, cls, blk, B, S, num_heads, pool_w=None):
    if pool_w is not None:
        tokens2d = _ref_dot(tokens2d, pool_w)
        cls = _ref_dot(cls, pool_w)
    D = blk['wq'].shape[1]
    hd = D // num_heads
    kv = _layernorm(tokens2d, blk['ln1w'], blk['ln1b'])
    qn = _layernorm(cls, blk['ln1w'], blk['ln1b'])
    q = _ref_dot(qn, blk['wq']) + blk['bq']
    kvp = _ref_dot(kv, blk['wkv']) + blk['bkv']
    k = kvp[:, :D].reshape(B, S, num_heads, hd)
    v = kvp[:, D:].reshape(B, S, num_heads, hd)
    qh = q.reshape(B, 1, num_heads, hd)
    scores = jnp.sum(qh * k, axis=-1) / math.sqrt(hd)        # (B, S, H)
    pmat = jax.nn.softmax(scores, axis=1)
    ctx = jnp.sum(pmat[..., None] * v, axis=1).reshape(B, D)
    new_cls = cls + _ref_dot(ctx, blk['wo']) + blk['bo']
    y = _layernorm(tokens2d, blk['ln2w'], blk['ln2b'])
    h1 = _ref_dot(y, blk['w1']) + blk['b1']
    h2 = _ref_dot(_gelu_tanh(h1), blk['w2']) + blk['b2']
    return tokens2d + h2, new_cls


def model_forward_ref(x_img, params, cfg):
    B = x_img.shape[0]
    p = cfg['patch_size']
    D0 = cfg['block_dims'][0]
    nh = cfg['image_size'] // p
    S = nh * nh
    xp = (x_img.reshape(B, 3, nh, p, nh, p)
          .transpose(0, 2, 4, 1, 3, 5)
          .reshape(B * S, 3 * p * p))
    tokens = _ref_dot(xp, params['conv_w_t']) + params['conv_b']
    tokens = tokens.reshape(B, S, D0) + params['pos_emb'][:, 1:]
    cls = (jnp.broadcast_to(params['class_token'][:, 0], (B, D0))
           + params['pos_emb'][:, 0])
    for idx, stage in enumerate(params['stages']):
        if idx != 0:
            _, Sc, C = tokens.shape
            sS = int(math.sqrt(Sc))
            tokens = tokens.reshape(B, sS // 2, 2, sS // 2, 2, C).mean(axis=(2, 4))
            S = (sS // 2) ** 2
            tokens = tokens.reshape(B, S, C)
        tokens2d = tokens.reshape(B * S, tokens.shape[-1])
        for j, blk in enumerate(stage['blocks']):
            pw = stage['pool_w'] if (idx != 0 and j == 0) else None
            tokens2d, cls = _ref_block(tokens2d, cls, blk, B, S, cfg['num_heads'], pool_w=pw)
        tokens = tokens2d.reshape(B, S, tokens2d.shape[-1])
    z = _layernorm(cls, params['head']['ln_w'], params['head']['ln_b'])
    logits = (_ref_dot(z, params['head']['w_t']) + params['head']['b'])[:, :cfg['num_classes']]
    return logits, cls, tokens


# ----------------------------- main --------------------------------------------------

if __name__ == "__main__":
    cfg = dict(image_size=16, patch_size=4, num_heads=4, mlp_ratio=2,
               num_classes=10, blocks=[2, 2], block_dims=[32, 64], batch=2)

    key = jax.random.PRNGKey(0)
    k_img, k_par = jax.random.split(key)
    x = jax.random.normal(k_img, (cfg['batch'], 3, cfg['image_size'], cfg['image_size']),
                          jnp.float32)
    params = init_params(k_par, cfg)

    fwd = jax.jit(lambda xx, pp: model_forward(xx, pp, cfg))
    logits, cls_feat, tok_feat = fwd(x, params)
    logits = jax.block_until_ready(logits)

    assert logits.shape == (cfg['batch'], cfg['num_classes'])
    assert bool(jnp.all(jnp.isfinite(logits)))

    # validate attention / MLP math against a pure-JAX reference with matching
    # numerics (head weight is zero-init per the module, so compare the features)
    ref_logits, ref_cls, ref_tok = jax.jit(
        lambda xx, pp: model_forward_ref(xx, pp, cfg))(x, params)
    assert bool(jnp.allclose(cls_feat, ref_cls, atol=2e-2, rtol=2e-2))
    assert bool(jnp.allclose(tok_feat, ref_tok, atol=2e-2, rtol=2e-2))

    print("KERNEL_OK")
</pallas_src>

<mosaic_0001>
module attributes {stable_mosaic.version = 11 : i64} {
  func.func @linear_kernel(%arg0: memref<32x48xbf16, #tpu.memory_space<vmem>>, %arg1: memref<48x32xbf16, #tpu.memory_space<vmem>>, %arg2: memref<1x32xf32, #tpu.memory_space<vmem>>, %arg3: memref<32x32xf32, #tpu.memory_space<vmem>>) attributes {dimension_semantics = [], scalar_prefetch = 0 : i64, scratch_operands = 0 : i64, tpu.core_type = #tpu.core_type<tc>} {
    %c0 = arith.constant 0 : index
    %c0_0 = arith.constant 0 : index
    %0 = vector.load %arg0[%c0, %c0_0] : memref<32x48xbf16, #tpu.memory_space<vmem>>, vector<32x48xbf16>
    %c0_1 = arith.constant 0 : index
    %c0_2 = arith.constant 0 : index
    %1 = vector.load %arg1[%c0_1, %c0_2] : memref<48x32xbf16, #tpu.memory_space<vmem>>, vector<48x32xbf16>
    %cst = arith.constant dense<0.000000e+00> : vector<32x32xf32>
    %2 = tpu.matmul %0, %1, %cst {dimension_numbers = #tpu.dot_dimension_numbers<[1], [0], [0], [1], [0, 0, 1, 1], [], []>} : vector<32x48xbf16>, vector<48x32xbf16>, vector<32x32xf32> -> vector<32x32xf32>
    %c0_3 = arith.constant 0 : index
    %c0_4 = arith.constant 0 : index
    %3 = vector.load %arg2[%c0_3, %c0_4] : memref<1x32xf32, #tpu.memory_space<vmem>>, vector<1x32xf32>
    %4 = vector.broadcast %3 : vector<1x32xf32> to vector<32x32xf32>
    %5 = arith.addf %2, %4 : vector<32x32xf32>
    %c0_5 = arith.constant 0 : index
    %c0_6 = arith.constant 0 : index
    %6 = vector.load %arg3[%c0_5, %c0_6] : memref<32x32xf32, #tpu.memory_space<vmem>>, vector<32x32xf32>
    tpu.vector_store %arg3[%c0_5, %c0_6], %5 {strides = array<i32>} : memref<32x32xf32, #tpu.memory_space<vmem>>, vector<32x32xf32>,
    return
  }
}

module attributes {stable_mosaic.version = 11 : i64} {
  func.func @hit_block_kernel(%arg0: memref<32x32xf32, #tpu.memory_space<vmem>>, %arg1: memref<2x32xf32, #tpu.memory_space<vmem>>, %arg2: memref<1x32xf32, #tpu.memory_space<vmem>>, %arg3: memref<1x32xf32, #tpu.memory_space<vmem>>, %arg4: memref<32x32xbf16, #tpu.memory_space<vmem>>, %arg5: memref<1x32xf32, #tpu.memory_space<vmem>>, %arg6: memref<32x64xbf16, #tpu.memory_space<vmem>>, %arg7: memref<1x64xf32, #tpu.memory_space<vmem>>, %arg8: memref<32x32xbf16, #tpu.memory_space<vmem>>, %arg9: memref<1x32xf32, #tpu.memory_space<vmem>>, %arg10: memref<1x32xf32, #tpu.memory_space<vmem>>, %arg11: memref<1x32xf32, #tpu.memory_space<vmem>>, %arg12: memref<32x64xbf16, #tpu.memory_space<vmem>>, %arg13: memref<1x64xf32, #tpu.memory_space<vmem>>, %arg14: memref<64x32xbf16, #tpu.memory_space<vmem>>, %arg15: memref<1x32xf32, #tpu.memory_space<vmem>>, %arg16: memref<32x4xf32, #tpu.memory_space<vmem>>, %arg17: memref<4x32xf32, #tpu.memory_space<vmem>>, %arg18: memref<32x32xf32, #tpu.memory_space<vmem>>, %arg19: memref<2x32xf32, #tpu.memory_space<vmem>>) attributes {dimension_semantics = [], scalar_prefetch = 0 : i64, scratch_operands = 0 : i64, tpu.core_type = #tpu.core_type<tc>} {
    %c0 = arith.constant 0 : index
    %c0_0 = arith.constant 0 : index
    %0 = vector.load %arg0[%c0, %c0_0] : memref<32x32xf32, #tpu.memory_space<vmem>>, vector<32x32xf32>
    %c0_1 = arith.constant 0 : index
    %c0_2 = arith.constant 0 : index
    %1 = vector.load %arg1[%c0_1, %c0_2] : memref<2x32xf32, #tpu.memory_space<vmem>>, vector<2x32xf32>
    %c0_3 = arith.constant 0 : index
    %c0_4 = arith.constant 0 : index
    %2 = vector.load %arg2[%c0_3, %c0_4] : memref<1x32xf32, #tpu.memory_space<vmem>>, vector<1x32xf32>
    %c0_5 = arith.constant 0 : index
    %c0_6 = arith.constant 0 : index
    %3 = vector.load %arg3[%c0_5, %c0_6] : memref<1x32xf32, #tpu.memory_space<vmem>>, vector<1x32xf32>
    %cst = arith.constant dense<0.000000e+00> : vector<32xf32>
    %4 = vector.multi_reduction <add>, %0, %cst [1] : vector<32x32xf32> to vector<32xf32>
    %5 = vector.shape_cast %4 : vector<32xf32> to vector<32x1xf32>
    %cst_7 = arith.constant 3.200000e+01 : f32
    %6 = vector.broadcast %cst_7 : f32 to vector<32x1xf32>
    %7 = arith.divf %5, %6 : vector<32x1xf32>
    %8 = vector.broadcast %7 : vector<32x1xf32> to vector<32x32xf32>
    %9 = arith.subf %0, %8 : vector<32x32xf32>
    %10 = arith.mulf %9, %9 : vector<32x32xf32>
    %cst_8 = arith.constant dense<0.000000e+00> : vector<32xf32>
    %11 = vector.multi_reduction <add>, %10, %cst_8 [1] : vector<32x32xf32> to vector<32xf32>
    %12 = vector.shape_cast %11 : vector<32xf32> to vector<32x1xf32>
    %cst_9 = arith.constant 3.200000e+01 : f32
    %13 = vector.broadcast %cst_9 : f32 to vector<32x1xf32>
    %14 = arith.divf %12, %13 : vector<32x1xf32>
    %15 = vector.broadcast %7 : vector<32x1xf32> to vector<32x32xf32>
    %16 = arith.subf %0, %15 : vector<32x32xf32>
    %cst_10 = arith.constant 9.99999997E-7 : f32
    %17 = vector.broadcast %cst_10 : f32 to vector<32x1xf32>
    %18 = arith.addf %14, %17 : vector<32x1xf32>
    %19 = math.rsqrt %18 : vector<32x1xf32>
    %20 = vector.broadcast %19 : vector<32x1xf32> to vector<32x32xf32>
    %21 = arith.mulf %16, %20 : vector<32x32xf32>
    %22 = vector.broadcast %2 : vector<1x32xf32> to vector<32x32xf32>
    %23 = arith.mulf %21, %22 : vector<32x32xf32>
    %24 = vector.broadcast %3 : vector<1x32xf32> to vector<32x32xf32>
    %25 = arith.addf %23, %24 : vector<32x32xf32>
    %26 = arith.truncf %25 : vector<32x32xf32> to vector<32x32xbf16>
    %cst_11 = arith.constant dense<0.000000e+00> : vector<2xf32>
    %27 = vector.multi_reduction <add>, %1, %cst_11 [1] : vector<2x32xf32> to vector<2xf32>
    %28 = vector.shape_cast %27 : vector<2xf32> to vector<2x1xf32>
    %cst_12 = arith.constant 3.200000e+01 : f32
    %29 = vector.broadcast %cst_12 : f32 to vector<2x1xf32>
    %30 = arith.divf %28, %29 : vector<2x1xf32>
    %31 = vector.broadcast %30 : vector<2x1xf32> to vector<2x32xf32>
    %32 = arith.subf %1, %31 : vector<2x32xf32>
    %33 = arith.mulf %32, %32 : vector<2x32xf32>
    %cst_13 = arith.constant dense<0.000000e+00> : vector<2xf32>
    %34 = vector.multi_reduction <add>, %33, %cst_13 [1] : vector<2x32xf32> to vector<2xf32>
    %35 = vector.shape_cast %34 : vector<2xf32> to vector<2x1xf32>
    %cst_14 = arith.constant 3.200000e+01 : f32
    %36 = vector.broadcast %cst_14 : f32 to vector<2x1xf32>
    %37 = arith.divf %35, %36 : vector<2x1xf32>
    %38 = vector.broadcast %30 : vector<2x1xf32> to vector<2x32xf32>
    %39 = arith.subf %1, %38 : vector<2x32xf32>
    %cst_15 = arith.constant 9.99999997E-7 : f32
    %40 = vector.broadcast %cst_15 : f32 to vector<2x1xf32>
    %41 = arith.addf %37, %40 : vector<2x1xf32>
    %42 = math.rsqrt %41 : vector<2x1xf32>
    %43 = vector.broadcast %42 : vector<2x1xf32> to vector<2x32xf32>
    %44 = arith.mulf %39, %43 : vector<2x32xf32>
    %45 = vector.broadcast %2 : vector<1x32xf32> to vector<2x32xf32>
    %46 = arith.mulf %44, %45 : vector<2x32xf32>
    %47 = vector.broadcast %3 : vector<1x32xf32> to vector<2x32xf32>
    %48 = arith.addf %46, %47 : vector<2x32xf32>
    %49 = arith.truncf %48 : vector<2x32xf32> to vector<2x32xbf16>
    %c0_16 = arith.constant 0 : index
    %c0_17 = arith.constant 0 : index
    %50 = vector.load %arg4[%c0_16, %c0_17] : memref<32x32xbf16, #tpu.memory_space<vmem>>, vector<32x32xbf16>
    %cst_18 = arith.constant dense<0.000000e+00> : vector<2x32xf32>
    %51 = tpu.matmul %49, %50, %cst_18 {dimension_numbers = #tpu.dot_dimension_numbers<[1], [0], [0], [1], [0, 0, 1, 1], [], []>} : vector<2x32xbf16>, vector<32x32xbf16>, vector<2x32xf32> -> vector<2x32xf32>
    %c0_19 = arith.constant 0 : index
    %c0_20 = arith.constant 0 : index
    %52 = vector.load %arg5[%c0_19, %c0_20] : memref<1x32xf32, #tpu.memory_space<vmem>>, vector<1x32xf32>
    %53 = vector.broadcast %52 : vector<1x32xf32> to vector<2x32xf32>
    %54 = arith.addf %51, %53 : vector<2x32xf32>
    %c0_21 = arith.constant 0 : index
    %c0_22 = arith.constant 0 : index
    %55 = vector.load %arg6[%c0_21, %c0_22] : memref<32x64xbf16, #tpu.memory_space<vmem>>, vector<32x64xbf16>
    %cst_23 = arith.constant dense<0.000000e+00> : vector<32x64xf32>
    %56 = tpu.matmul %26, %55, %cst_23 {dimension_numbers = #tpu.dot_dimension_numbers<[1], [0], [0], [1], [0, 0, 1, 1], [], []>} : vector<32x32xbf16>, vector<32x64xbf16>, vector<32x64xf32> -> vector<32x64xf32>
    %c0_24 = arith.constant 0 : index
    %c0_25 = arith.constant 0 : index
    %57 = vector.load %arg7[%c0_24, %c0_25] : memref<1x64xf32, #tpu.memory_space<vmem>>, vector<1x64xf32>
    %58 = vector.broadcast %57 : vector<1x64xf32> to vector<32x64xf32>
    %59 = arith.addf %56, %58 : vector<32x64xf32>
    %60 = vector.extract_strided_slice %59 {offsets = [0, 0], sizes = [32, 32], strides = [1, 1]} : vector<32x64xf32> to vector<32x32xf32>
    %61 = vector.extract_strided_slice %59 {offsets = [0, 32], sizes = [32, 32], strides = [1, 1]} : vector<32x64xf32> to vector<32x32xf32>
    %c0_26 = arith.constant 0 : index
    %c0_27 = arith.constant 0 : index
    %62 = vector.load %arg16[%c0_26, %c0_27] : memref<32x4xf32, #tpu.memory_space<vmem>>, vector<32x4xf32>
    %c0_28 = arith.constant 0 : index
    %c0_29 = arith.constant 0 : index
    %63 = vector.load %arg17[%c0_28, %c0_29] : memref<4x32xf32, #tpu.memory_space<vmem>>, vector<4x32xf32>
    %64 = vector.extract_strided_slice %60 {offsets = [0, 0], sizes = [16, 32], strides = [1, 1]} : vector<32x32xf32> to vector<16x32xf32>
    %65 = vector.extract_strided_slice %61 {offsets = [0, 0], sizes = [16, 32], strides = [1, 1]} : vector<32x32xf32> to vector<16x32xf32>
    %66 = vector.extract_strided_slice %54 {offsets = [0, 0], sizes = [1, 32], strides = [1, 1]} : vector<2x32xf32> to vector<1x32xf32>
    %67 = vector.broadcast %66 : vector<1x32xf32> to vector<16x32xf32>
    %68 = arith.mulf %67, %64 : vector<16x32xf32>
    %cst_30 = arith.constant dense<0.000000e+00> : vector<16x4xf32>
    %69 = tpu.matmul %68, %62, %cst_30 {dimension_numbers = #tpu.dot_dimension_numbers<[1], [0], [0], [1], [0, 0, 1, 1], [], []>} : vector<16x32xf32>, vector<32x4xf32>, vector<16x4xf32> -> vector<16x4xf32>
    %cst_31 = arith.constant 0.353553385 : f32
    %70 = vector.broadcast %cst_31 : f32 to vector<16x4xf32>
    %71 = arith.mulf %69, %70 : vector<16x4xf32>
    %cst_32 = arith.constant dense<0xFF800000> : vector<4xf32>
    %72 = vector.multi_reduction <maximumf>, %71, %cst_32 [0] : vector<16x4xf32> to vector<4xf32>
    %73 = vector.shape_cast %72 : vector<4xf32> to vector<1x4xf32>
    %74 = vector.broadcast %73 : vector<1x4xf32> to vector<16x4xf32>
    %75 = arith.subf %71, %74 : vector<16x4xf32>
    %76 = math.exp %75 : vector<16x4xf32>
    %cst_33 = arith.constant dense<0.000000e+00> : vector<4xf32>
    %77 = vector.multi_reduction <add>, %76, %cst_33 [0] : vector<16x4xf32> to vector<4xf32>
    %78 = vector.shape_cast %77 : vector<4xf32> to vector<1x4xf32>
    %79 = tpu.reciprocal %78 {approx = true} : vector<1x4xf32> -> vector<1x4xf32>
    %80 = vector.broadcast %79 : vector<1x4xf32> to vector<16x4xf32>
    %81 = arith.mulf %76, %80 : vector<16x4xf32>
    %cst_34 = arith.constant dense<0.000000e+00> : vector<16x32xf32>
    %82 = tpu.matmul %81, %63, %cst_34 {dimension_numbers = #tpu.dot_dimension_numbers<[1], [0], [0], [1], [0, 0, 1, 1], [], []>} : vector<16x4xf32>, vector<4x32xf32>, vector<16x32xf32> -> vector<16x32xf32>
    %83 = arith.mulf %82, %65 : vector<16x32xf32>
    %cst_35 = arith.constant dense<0.000000e+00> : vector<32xf32>
    %84 = vector.multi_reduction <add>, %83, %cst_35 [0] : vector<16x32xf32> to vector<32xf32>
    %85 = vector.shape_cast %84 : vector<32xf32> to vector<1x32xf32>
    %86 = vector.extract_strided_slice %60 {offsets = [16, 0], sizes = [16, 32], strides = [1, 1]} : vector<32x32xf32> to vector<16x32xf32>
    %87 = vector.extract_strided_slice %61 {offsets = [16, 0], sizes = [16, 32], strides = [1, 1]} : vector<32x32xf32> to vector<16x32xf32>
    %88 = vector.extract_strided_slice %54 {offsets = [1, 0], sizes = [1, 32], strides = [1, 1]} : vector<2x32xf32> to vector<1x32xf32>
    %89 = vector.broadcast %88 : vector<1x32xf32> to vector<16x32xf32>
    %90 = arith.mulf %89, %86 : vector<16x32xf32>
    %cst_36 = arith.constant dense<0.000000e+00> : vector<16x4xf32>
    %91 = tpu.matmul %90, %62, %cst_36 {dimension_numbers = #tpu.dot_dimension_numbers<[1], [0], [0], [1], [0, 0, 1, 1], [], []>} : vector<16x32xf32>, vector<32x4xf32>, vector<16x4xf32> -> vector<16x4xf32>
    %cst_37 = arith.constant 0.353553385 : f32
    %92 = vector.broadcast %cst_37 : f32 to vector<16x4xf32>
    %93 = arith.mulf %91, %92 : vector<16x4xf32>
    %cst_38 = arith.constant dense<0xFF800000> : vector<4xf32>
    %94 = vector.multi_reduction <maximumf>, %93, %cst_38 [0] : vector<16x4xf32> to vector<4xf32>
    %95 = vector.shape_cast %94 : vector<4xf32> to vector<1x4xf32>
    %96 = vector.broadcast %95 : vector<1x4xf32> to vector<16x4xf32>
    %97 = arith.subf %93, %96 : vector<16x4xf32>
    %98 = math.exp %97 : vector<16x4xf32>
    %cst_39 = arith.constant dense<0.000000e+00> : vector<4xf32>
    %99 = vector.multi_reduction <add>, %98, %cst_39 [0] : vector<16x4xf32> to vector<4xf32>
    %100 = vector.shape_cast %99 : vector<4xf32> to vector<1x4xf32>
    %101 = tpu.reciprocal %100 {approx = true} : vector<1x4xf32> -> vector<1x4xf32>
    %102 = vector.broadcast %101 : vector<1x4xf32> to vector<16x4xf32>
    %103 = arith.mulf %98, %102 : vector<16x4xf32>
    %cst_40 = arith.constant dense<0.000000e+00> : vector<16x32xf32>
    %104 = tpu.matmul %103, %63, %cst_40 {dimension_numbers = #tpu.dot_dimension_numbers<[1], [0], [0], [1], [0, 0, 1, 1], [], []>} : vector<16x4xf32>, vector<4x32xf32>, vector<16x32xf32> -> vector<16x32xf32>
    %105 = arith.mulf %104, %87 : vector<16x32xf32>
    %cst_41 = arith.constant dense<0.000000e+00> : vector<32xf32>
    %106 = vector.multi_reduction <add>, %105, %cst_41 [0] : vector<16x32xf32> to vector<32xf32>
    %107 = vector.shape_cast %106 : vector<32xf32> to vector<1x32xf32>
    %108 = tpu.concatenate %85, %107 in 0 : vector<1x32xf32>, vector<1x32xf32> -> vector<2x32xf32>
    %109 = arith.truncf %108 : vector<2x32xf32> to vector<2x32xbf16>
    %c0_42 = arith.constant 0 : index
    %c0_43 = arith.constant 0 : index
    %110 = vector.load %arg8[%c0_42, %c0_43] : memref<32x32xbf16, #tpu.memory_space<vmem>>, vector<32x32xbf16>
    %cst_44 = arith.constant dense<0.000000e+00> : vector<2x32xf32>
    %111 = tpu.matmul %109, %110, %cst_44 {dimension_numbers = #tpu.dot_dimension_numbers<[1], [0], [0], [1], [0, 0, 1, 1], [], []>} : vector<2x32xbf16>, vector<32x32xbf16>, vector<2x32xf32> -> vector<2x32xf32>
    %c0_45 = arith.constant 0 : index
    %c0_46 = arith.constant 0 : index
    %112 = vector.load %arg9[%c0_45, %c0_46] : memref<1x32xf32, #tpu.memory_space<vmem>>, vector<1x32xf32>
    %113 = vector.broadcast %112 : vector<1x32xf32> to vector<2x32xf32>
    %114 = arith.addf %111, %113 : vector<2x32xf32>
    %115 = arith.addf %1, %114 : vector<2x32xf32>
    %c0_47 = arith.constant 0 : index
    %c0_48 = arith.constant 0 : index
    %116 = vector.load %arg19[%c0_47, %c0_48] : memref<2x32xf32, #tpu.memory_space<vmem>>, vector<2x32xf32>
    tpu.vector_store %arg19[%c0_47, %c0_48], %115 {strides = array<i32>} : memref<2x32xf32, #tpu.memory_space<vmem>>, vector<2x32xf32>,
    %c0_49 = arith.constant 0 : index
    %c0_50 = arith.constant 0 : index
    %117 = vector.load %arg10[%c0_49, %c0_50] : memref<1x32xf32, #tpu.memory_space<vmem>>, vector<1x32xf32>
    %c0_51 = arith.constant 0 : index
    %c0_52 = arith.constant 0 : index
    %118 = vector.load %arg11[%c0_51, %c0_52] : memref<1x32xf32, #tpu.memory_space<vmem>>, vector<1x32xf32>
    %cst_53 = arith.constant dense<0.000000e+00> : vector<32xf32>
    %119 = vector.multi_reduction <add>, %0, %cst_53 [1] : vector<32x32xf32> to vector<32xf32>
    %120 = vector.shape_cast %119 : vector<32xf32> to vector<32x1xf32>
    %cst_54 = arith.constant 3.200000e+01 : f32
    %121 = vector.broadcast %cst_54 : f32 to vector<32x1xf32>
    %122 = arith.divf %120, %121 : vector<32x1xf32>
    %123 = vector.broadcast %122 : vector<32x1xf32> to vector<32x32xf32>
    %124 = arith.subf %0, %123 : vector<32x32xf32>
    %125 = arith.mulf %124, %124 : vector<32x32xf32>
    %cst_55 = arith.constant dense<0.000000e+00> : vector<32xf32>
    %126 = vector.multi_reduction <add>, %125, %cst_55 [1] : vector<32x32xf32> to vector<32xf32>
    %127 = vector.shape_cast %126 : vector<32xf32> to vector<32x1xf32>
    %cst_56 = arith.constant 3.200000e+01 : f32
    %128 = vector.broadcast %cst_56 : f32 to vector<32x1xf32>
    %129 = arith.divf %127, %128 : vector<32x1xf32>
    %130 = vector.broadcast %122 : vector<32x1xf32> to vector<32x32xf32>
    %131 = arith.subf %0, %130 : vector<32x32xf32>
    %cst_57 = arith.constant 9.99999997E-7 : f32
    %132 = vector.broadcast %cst_57 : f32 to vector<32x1xf32>
    %133 = arith.addf %129, %132 : vector<32x1xf32>
    %134 = math.rsqrt %133 : vector<32x1xf32>
    %135 = vector.broadcast %134 : vector<32x1xf32> to vector<32x32xf32>
    %136 = arith.mulf %131, %135 : vector<32x32xf32>
    %137 = vector.broadcast %117 : vector<1x32xf32> to vector<32x32xf32>
    %138 = arith.mulf %136, %137 : vector<32x32xf32>
    %139 = vector.broadcast %118 : vector<1x32xf32> to vector<32x32xf32>
    %140 = arith.addf %138, %139 : vector<32x32xf32>
    %141 = arith.truncf %140 : vector<32x32xf32> to vector<32x32xbf16>
    %c0_58 = arith.constant 0 : index
    %c0_59 = arith.constant 0 : index
    %142 = vector.load %arg12[%c0_58, %c0_59] : memref<32x64xbf16, #tpu.memory_space<vmem>>, vector<32x64xbf16>
    %cst_60 = arith.constant dense<0.000000e+00> : vector<32x64xf32>
    %143 = tpu.matmul %141, %142, %cst_60 {dimension_numbers = #tpu.dot_dimension_numbers<[1], [0], [0], [1], [0, 0, 1, 1], [], []>} : vector<32x32xbf16>, vector<32x64xbf16>, vector<32x64xf32> -> vector<32x64xf32>
    %c0_61 = arith.constant 0 : index
    %c0_62 = arith.constant 0 : index
    %144 = vector.load %arg13[%c0_61, %c0_62] : memref<1x64xf32, #tpu.memory_space<vmem>>, vector<1x64xf32>
    %145 = vector.broadcast %144 : vector<1x64xf32> to vector<32x64xf32>
    %146 = arith.addf %143, %145 : vector<32x64xf32>
    %cst_63 = arith.constant 5.000000e-01 : f32
    %147 = vector.broadcast %cst_63 : f32 to vector<32x64xf32>
    %148 = arith.mulf %147, %146 : vector<32x64xf32>
    %cst_64 = arith.constant 4.471500e-02 : f32
    %149 = vector.broadcast %cst_64 : f32 to vector<32x64xf32>
    %150 = arith.mulf %149, %146 : vector<32x64xf32>
    %151 = arith.mulf %150, %146 : vector<32x64xf32>
    %152 = arith.mulf %151, %146 : vector<32x64xf32>
    %153 = arith.addf %146, %152 : vector<32x64xf32>
    %cst_65 = arith.constant 0.797884583 : f32
    %154 = vector.broadcast %cst_65 : f32 to vector<32x64xf32>
    %155 = arith.mulf %154, %153 : vector<32x64xf32>
    %156 = math.tanh %155 : vector<32x64xf32>
    %cst_66 = arith.constant 1.000000e+00 : f32
    %157 = vector.broadcast %cst_66 : f32 to vector<32x64xf32>
    %158 = arith.addf %157, %156 : vector<32x64xf32>
    %159 = arith.mulf %148, %158 : vector<32x64xf32>
    %160 = arith.truncf %159 : vector<32x64xf32> to vector<32x64xbf16>
    %c0_67 = arith.constant 0 : index
    %c0_68 = arith.constant 0 : index
    %161 = vector.load %arg14[%c0_67, %c0_68] : memref<64x32xbf16, #tpu.memory_space<vmem>>, vector<64x32xbf16>
    %cst_69 = arith.constant dense<0.000000e+00> : vector<32x32xf32>
    %162 = tpu.matmul %160, %161, %cst_69 {dimension_numbers = #tpu.dot_dimension_numbers<[1], [0], [0], [1], [0, 0, 1, 1], [], []>} : vector<32x64xbf16>, vector<64x32xbf16>, vector<32x32xf32> -> vector<32x32xf32>
    %c0_70 = arith.constant 0 : index
    %c0_71 = arith.constant 0 : index
    %163 = vector.load %arg15[%c0_70, %c0_71] : memref<1x32xf32, #tpu.memory_space<vmem>>, vector<1x32xf32>
    %164 = vector.broadcast %163 : vector<1x32xf32> to vector<32x32xf32>
    %165 = arith.addf %162, %164 : vector<32x32xf32>
    %166 = arith.addf %0, %165 : vector<32x32xf32>
    %c0_72 = arith.constant 0 : index
    %c0_73 = arith.constant 0 : index
    %167 = vector.load %arg18[%c0_72, %c0_73] : memref<32x32xf32, #tpu.memory_space<vmem>>, vector<32x32xf32>
    tpu.vector_store %arg18[%c0_72, %c0_73], %166 {strides = array<i32>} : memref<32x32xf32, #tpu.memory_space<vmem>>, vector<32x32xf32>,
    return
  }
}

module attributes {stable_mosaic.version = 11 : i64} {
  func.func @hit_block_kernel(%arg0: memref<32x64xbf16, #tpu.memory_space<vmem>>, %arg1: memref<8x32xf32, #tpu.memory_space<vmem>>, %arg2: memref<2x32xf32, #tpu.memory_space<vmem>>, %arg3: memref<1x64xf32, #tpu.memory_space<vmem>>, %arg4: memref<1x64xf32, #tpu.memory_space<vmem>>, %arg5: memref<64x64xbf16, #tpu.memory_space<vmem>>, %arg6: memref<1x64xf32, #tpu.memory_space<vmem>>, %arg7: memref<64x128xbf16, #tpu.memory_space<vmem>>, %arg8: memref<1x128xf32, #tpu.memory_space<vmem>>, %arg9: memref<64x64xbf16, #tpu.memory_space<vmem>>, %arg10: memref<1x64xf32, #tpu.memory_space<vmem>>, %arg11: memref<1x64xf32, #tpu.memory_space<vmem>>, %arg12: memref<1x64xf32, #tpu.memory_space<vmem>>, %arg13: memref<64x128xbf16, #tpu.memory_space<vmem>>, %arg14: memref<1x128xf32, #tpu.memory_space<vmem>>, %arg15: memref<128x64xbf16, #tpu.memory_space<vmem>>, %arg16: memref<1x64xf32, #tpu.memory_space<vmem>>, %arg17: memref<64x4xf32, #tpu.memory_space<vmem>>, %arg18: memref<4x64xf32, #tpu.memory_space<vmem>>, %arg19: memref<8x64xf32, #tpu.memory_space<vmem>>, %arg20: memref<2x64xf32, #tpu.memory_space<vmem>>) attributes {dimension_semantics = [], scalar_prefetch = 0 : i64, scratch_operands = 0 : i64, tpu.core_type = #tpu.core_type<tc>} {
    %c0 = arith.constant 0 : index
    %c0_0 = arith.constant 0 : index
    %0 = vector.load %arg1[%c0, %c0_0] : memref<8x32xf32, #tpu.memory_space<vmem>>, vector<8x32xf32>
    %c0_1 = arith.constant 0 : index
    %c0_2 = arith.constant 0 : index
    %1 = vector.load %arg2[%c0_1, %c0_2] : memref<2x32xf32, #tpu.memory_space<vmem>>, vector<2x32xf32>
    %c0_3 = arith.constant 0 : index
    %c0_4 = arith.constant 0 : index
    %2 = vector.load %arg0[%c0_3, %c0_4] : memref<32x64xbf16, #tpu.memory_space<vmem>>, vector<32x64xbf16>
    %3 = arith.truncf %0 : vector<8x32xf32> to vector<8x32xbf16>
    %cst = arith.constant dense<0.000000e+00> : vector<8x64xf32>
    %4 = tpu.matmul %3, %2, %cst {dimension_numbers = #tpu.dot_dimension_numbers<[1], [0], [0], [1], [0, 0, 1, 1], [], []>} : vector<8x32xbf16>, vector<32x64xbf16>, vector<8x64xf32> -> vector<8x64xf32>
    %5 = arith.truncf %1 : vector<2x32xf32> to vector<2x32xbf16>
    %cst_5 = arith.constant dense<0.000000e+00> : vector<2x64xf32>
    %6 = tpu.matmul %5, %2, %cst_5 {dimension_numbers = #tpu.dot_dimension_numbers<[1], [0], [0], [1], [0, 0, 1, 1], [], []>} : vector<2x32xbf16>, vector<32x64xbf16>, vector<2x64xf32> -> vector<2x64xf32>
    %c0_6 = arith.constant 0 : index
    %c0_7 = arith.constant 0 : index
    %7 = vector.load %arg3[%c0_6, %c0_7] : memref<1x64xf32, #tpu.memory_space<vmem>>, vector<1x64xf32>
    %c0_8 = arith.constant 0 : index
    %c0_9 = arith.constant 0 : index
    %8 = vector.load %arg4[%c0_8, %c0_9] : memref<1x64xf32, #tpu.memory_space<vmem>>, vector<1x64xf32>
    %cst_10 = arith.constant dense<0.000000e+00> : vector<8xf32>
    %9 = vector.multi_reduction <add>, %4, %cst_10 [1] : vector<8x64xf32> to vector<8xf32>
    %10 = vector.shape_cast %9 : vector<8xf32> to vector<8x1xf32>
    %cst_11 = arith.constant 6.400000e+01 : f32
    %11 = vector.broadcast %cst_11 : f32 to vector<8x1xf32>
    %12 = arith.divf %10, %11 : vector<8x1xf32>
    %13 = vector.broadcast %12 : vector<8x1xf32> to vector<8x64xf32>
    %14 = arith.subf %4, %13 : vector<8x64xf32>
    %15 = arith.mulf %14, %14 : vector<8x64xf32>
    %cst_12 = arith.constant dense<0.000000e+00> : vector<8xf32>
    %16 = vector.multi_reduction <add>, %15, %cst_12 [1] : vector<8x64xf32> to vector<8xf32>
    %17 = vector.shape_cast %16 : vector<8xf32> to vector<8x1xf32>
    %cst_13 = arith.constant 6.400000e+01 : f32
    %18 = vector.broadcast %cst_13 : f32 to vector<8x1xf32>
    %19 = arith.divf %17, %18 : vector<8x1xf32>
    %20 = vector.broadcast %12 : vector<8x1xf32> to vector<8x64xf32>
    %21 = arith.subf %4, %20 : vector<8x64xf32>
    %cst_14 = arith.constant 9.99999997E-7 : f32
    %22 = vector.broadcast %cst_14 : f32 to vector<8x1xf32>
    %23 = arith.addf %19, %22 : vector<8x1xf32>
    %24 = math.rsqrt %23 : vector<8x1xf32>
    %25 = vector.broadcast %24 : vector<8x1xf32> to vector<8x64xf32>
    %26 = arith.mulf %21, %25 : vector<8x64xf32>
    %27 = vector.broadcast %7 : vector<1x64xf32> to vector<8x64xf32>
    %28 = arith.mulf %26, %27 : vector<8x64xf32>
    %29 = vector.broadcast %8 : vector<1x64xf32> to vector<8x64xf32>
    %30 = arith.addf %28, %29 : vector<8x64xf32>
    %31 = arith.truncf %30 : vector<8x64xf32> to vector<8x64xbf16>
    %cst_15 = arith.constant dense<0.000000e+00> : vector<2xf32>
    %32 = vector.multi_reduction <add>, %6, %cst_15 [1] : vector<2x64xf32> to vector<2xf32>
    %33 = vector.shape_cast %32 : vector<2xf32> to vector<2x1xf32>
    %cst_16 = arith.constant 6.400000e+01 : f32
    %34 = vector.broadcast %cst_16 : f32 to vector<2x1xf32>
    %35 = arith.divf %33, %34 : vector<2x1xf32>
    %36 = vector.broadcast %35 : vector<2x1xf32> to vector<2x64xf32>
    %37 = arith.subf %6, %36 : vector<2x64xf32>
    %38 = arith.mulf %37, %37 : vector<2x64xf32>
    %cst_17 = arith.constant dense<0.000000e+00> : vector<2xf32>
    %39 = vector.multi_reduction <add>, %38, %cst_17 [1] : vector<2x64xf32> to vector<2xf32>
    %40 = vector.shape_cast %39 : vector<2xf32> to vector<2x1xf32>
    %cst_18 = arith.constant 6.400000e+01 : f32
    %41 = vector.broadcast %cst_18 : f32 to vector<2x1xf32>
    %42 = arith.divf %40, %41 : vector<2x1xf32>
    %43 = vector.broadcast %35 : vector<2x1xf32> to vector<2x64xf32>
    %44 = arith.subf %6, %43 : vector<2x64xf32>
    %cst_19 = arith.constant 9.99999997E-7 : f32
    %45 = vector.broadcast %cst_19 : f32 to vector<2x1xf32>
    %46 = arith.addf %42, %45 : vector<2x1xf32>
    %47 = math.rsqrt %46 : vector<2x1xf32>
    %48 = vector.broadcast %47 : vector<2x1xf32> to vector<2x64xf32>
    %49 = arith.mulf %44, %48 : vector<2x64xf32>
    %50 = vector.broadcast %7 : vector<1x64xf32> to vector<2x64xf32>
    %51 = arith.mulf %49, %50 : vector<2x64xf32>
    %52 = vector.broadcast %8 : vector<1x64xf32> to vector<2x64xf32>
    %53 = arith.addf %51, %52 : vector<2x64xf32>
    %54 = arith.truncf %53 : vector<2x64xf32> to vector<2x64xbf16>
    %c0_20 = arith.constant 0 : index
    %c0_21 = arith.constant 0 : index
    %55 = vector.load %arg5[%c0_20, %c0_21] : memref<64x64xbf16, #tpu.memory_space<vmem>>, vector<64x64xbf16>
    %cst_22 = arith.constant dense<0.000000e+00> : vector<2x64xf32>
    %56 = tpu.matmul %54, %55, %cst_22 {dimension_numbers = #tpu.dot_dimension_numbers<[1], [0], [0], [1], [0, 0, 1, 1], [], []>} : vector<2x64xbf16>, vector<64x64xbf16>, vector<2x64xf32> -> vector<2x64xf32>
    %c0_23 = arith.constant 0 : index
    %c0_24 = arith.constant 0 : index
    %57 = vector.load %arg6[%c0_23, %c0_24] : memref<1x64xf32, #tpu.memory_space<vmem>>, vector<1x64xf32>
    %58 = vector.broadcast %57 : vector<1x64xf32> to vector<2x64xf32>
    %59 = arith.addf %56, %58 : vector<2x64xf32>
    %c0_25 = arith.constant 0 : index
    %c0_26 = arith.constant 0 : index
    %60 = vector.load %arg7[%c0_25, %c0_26] : memref<64x128xbf16, #tpu.memory_space<vmem>>, vector<64x128xbf16>
    %cst_27 = arith.constant dense<0.000000e+00> : vector<8x128xf32>
    %61 = tpu.matmul %31, %60, %cst_27 {dimension_numbers = #tpu.dot_dimension_numbers<[1], [0], [0], [1], [0, 0, 1, 1], [], []>} : vector<8x64xbf16>, vector<64x128xbf16>, vector<8x128xf32> -> vector<8x128xf32>
    %c0_28 = arith.constant 0 : index
    %c0_29 = arith.constant 0 : index
    %62 = vector.load %arg8[%c0_28, %c0_29] : memref<1x128xf32, #tpu.memory_space<vmem>>, vector<1x128xf32>
    %63 = vector.broadcast %62 : vector<1x128xf32> to vector<8x128xf32>
    %64 = arith.addf %61, %63 : vector<8x128xf32>
    %65 = vector.extract_strided_slice %64 {offsets = [0, 0], sizes = [8, 64], strides = [1, 1]} : vector<8x128xf32> to vector<8x64xf32>
    %66 = vector.extract_strided_slice %64 {offsets = [0, 64], sizes = [8, 64], strides = [1, 1]} : vector<8x128xf32> to vector<8x64xf32>
    %c0_30 = arith.constant 0 : index
    %c0_31 = arith.constant 0 : index
    %67 = vector.load %arg17[%c0_30, %c0_31] : memref<64x4xf32, #tpu.memory_space<vmem>>, vector<64x4xf32>
    %c0_32 = arith.constant 0 : index
    %c0_33 = arith.constant 0 : index
    %68 = vector.load %arg18[%c0_32, %c0_33] : memref<4x64xf32, #tpu.memory_space<vmem>>, vector<4x64xf32>
    %69 = vector.extract_strided_slice %65 {offsets = [0, 0], sizes = [4, 64], strides = [1, 1]} : vector<8x64xf32> to vector<4x64xf32>
    %70 = vector.extract_strided_slice %66 {offsets = [0, 0], sizes = [4, 64], strides = [1, 1]} : vector<8x64xf32> to vector<4x64xf32>
    %71 = vector.extract_strided_slice %59 {offsets = [0, 0], sizes = [1, 64], strides = [1, 1]} : vector<2x64xf32> to vector<1x64xf32>
    %72 = vector.broadcast %71 : vector<1x64xf32> to vector<4x64xf32>
    %73 = arith.mulf %72, %69 : vector<4x64xf32>
    %cst_34 = arith.constant dense<0.000000e+00> : vector<4x4xf32>
    %74 = tpu.matmul %73, %67, %cst_34 {dimension_numbers = #tpu.dot_dimension_numbers<[1], [0], [0], [1], [0, 0, 1, 1], [], []>} : vector<4x64xf32>, vector<64x4xf32>, vector<4x4xf32> -> vector<4x4xf32>
    %cst_35 = arith.constant 2.500000e-01 : f32
    %75 = vector.broadcast %cst_35 : f32 to vector<4x4xf32>
    %76 = arith.mulf %74, %75 : vector<4x4xf32>
    %cst_36 = arith.constant dense<0xFF800000> : vector<4xf32>
    %77 = vector.multi_reduction <maximumf>, %76, %cst_36 [0] : vector<4x4xf32> to vector<4xf32>
    %78 = vector.shape_cast %77 : vector<4xf32> to vector<1x4xf32>
    %79 = vector.broadcast %78 : vector<1x4xf32> to vector<4x4xf32>
    %80 = arith.subf %76, %79 : vector<4x4xf32>
    %81 = math.exp %80 : vector<4x4xf32>
    %cst_37 = arith.constant dense<0.000000e+00> : vector<4xf32>
    %82 = vector.multi_reduction <add>, %81, %cst_37 [0] : vector<4x4xf32> to vector<4xf32>
    %83 = vector.shape_cast %82 : vector<4xf32> to vector<1x4xf32>
    %84 = tpu.reciprocal %83 {approx = true} : vector<1x4xf32> -> vector<1x4xf32>
    %85 = vector.broadcast %84 : vector<1x4xf32> to vector<4x4xf32>
    %86 = arith.mulf %81, %85 : vector<4x4xf32>
    %cst_38 = arith.constant dense<0.000000e+00> : vector<4x64xf32>
    %87 = tpu.matmul %86, %68, %cst_38 {dimension_numbers = #tpu.dot_dimension_numbers<[1], [0], [0], [1], [0, 0, 1, 1], [], []>} : vector<4x4xf32>, vector<4x64xf32>, vector<4x64xf32> -> vector<4x64xf32>
    %88 = arith.mulf %87, %70 : vector<4x64xf32>
    %cst_39 = arith.constant dense<0.000000e+00> : vector<64xf32>
    %89 = vector.multi_reduction <add>, %88, %cst_39 [0] : vector<4x64xf32> to vector<64xf32>
    %90 = vector.shape_cast %89 : vector<64xf32> to vector<1x64xf32>
    %91 = vector.extract_strided_slice %65 {offsets = [4, 0], sizes = [4, 64], strides = [1, 1]} : vector<8x64xf32> to vector<4x64xf32>
    %92 = vector.extract_strided_slice %66 {offsets = [4, 0], sizes = [4, 64], strides = [1, 1]} : vector<8x64xf32> to vector<4x64xf32>
    %93 = vector.extract_strided_slice %59 {offsets = [1, 0], sizes = [1, 64], strides = [1, 1]} : vector<2x64xf32> to vector<1x64xf32>
    %94 = vector.broadcast %93 : vector<1x64xf32> to vector<4x64xf32>
    %95 = arith.mulf %94, %91 : vector<4x64xf32>
    %cst_40 = arith.constant dense<0.000000e+00> : vector<4x4xf32>
    %96 = tpu.matmul %95, %67, %cst_40 {dimension_numbers = #tpu.dot_dimension_numbers<[1], [0], [0], [1], [0, 0, 1, 1], [], []>} : vector<4x64xf32>, vector<64x4xf32>, vector<4x4xf32> -> vector<4x4xf32>
    %cst_41 = arith.constant 2.500000e-01 : f32
    %97 = vector.broadcast %cst_41 : f32 to vector<4x4xf32>
    %98 = arith.mulf %96, %97 : vector<4x4xf32>
    %cst_42 = arith.constant dense<0xFF800000> : vector<4xf32>
    %99 = vector.multi_reduction <maximumf>, %98, %cst_42 [0] : vector<4x4xf32> to vector<4xf32>
    %100 = vector.shape_cast %99 : vector<4xf32> to vector<1x4xf32>
    %101 = vector.broadcast %100 : vector<1x4xf32> to vector<4x4xf32>
    %102 = arith.subf %98, %101 : vector<4x4xf32>
    %103 = math.exp %102 : vector<4x4xf32>
    %cst_43 = arith.constant dense<0.000000e+00> : vector<4xf32>
    %104 = vector.multi_reduction <add>, %103, %cst_43 [0] : vector<4x4xf32> to vector<4xf32>
    %105 = vector.shape_cast %104 : vector<4xf32> to vector<1x4xf32>
    %106 = tpu.reciprocal %105 {approx = true} : vector<1x4xf32> -> vector<1x4xf32>
    %107 = vector.broadcast %106 : vector<1x4xf32> to vector<4x4xf32>
    %108 = arith.mulf %103, %107 : vector<4x4xf32>
    %cst_44 = arith.constant dense<0.000000e+00> : vector<4x64xf32>
    %109 = tpu.matmul %108, %68, %cst_44 {dimension_numbers = #tpu.dot_dimension_numbers<[1], [0], [0], [1], [0, 0, 1, 1], [], []>} : vector<4x4xf32>, vector<4x64xf32>, vector<4x64xf32> -> vector<4x64xf32>
    %110 = arith.mulf %109, %92 : vector<4x64xf32>
    %cst_45 = arith.constant dense<0.000000e+00> : vector<64xf32>
    %111 = vector.multi_reduction <add>, %110, %cst_45 [0] : vector<4x64xf32> to vector<64xf32>
    %112 = vector.shape_cast %111 : vector<64xf32> to vector<1x64xf32>
    %113 = tpu.concatenate %90, %112 in 0 : vector<1x64xf32>, vector<1x64xf32> -> vector<2x64xf32>
    %114 = arith.truncf %113 : vector<2x64xf32> to vector<2x64xbf16>
    %c0_46 = arith.constant 0 : index
    %c0_47 = arith.constant 0 : index
    %115 = vector.load %arg9[%c0_46, %c0_47] : memref<64x64xbf16, #tpu.memory_space<vmem>>, vector<64x64xbf16>
    %cst_48 = arith.constant dense<0.000000e+00> : vector<2x64xf32>
    %116 = tpu.matmul %114, %115, %cst_48 {dimension_numbers = #tpu.dot_dimension_numbers<[1], [0], [0], [1], [0, 0, 1, 1], [], []>} : vector<2x64xbf16>, vector<64x64xbf16>, vector<2x64xf32> -> vector<2x64xf32>
    %c0_49 = arith.constant 0 : index
    %c0_50 = arith.constant 0 : index
    %117 = vector.load %arg10[%c0_49, %c0_50] : memref<1x64xf32, #tpu.memory_space<vmem>>, vector<1x64xf32>
    %118 = vector.broadcast %117 : vector<1x64xf32> to vector<2x64xf32>
    %119 = arith.addf %116, %118 : vector<2x64xf32>
    %120 = arith.addf %6, %119 : vector<2x64xf32>
    %c0_51 = arith.constant 0 : index
    %c0_52 = arith.constant 0 : index
    %121 = vector.load %arg20[%c0_51, %c0_52] : memref<2x64xf32, #tpu.memory_space<vmem>>, vector<2x64xf32>
    tpu.vector_store %arg20[%c0_51, %c0_52], %120 {strides = array<i32>} : memref<2x64xf32, #tpu.memory_space<vmem>>, vector<2x64xf32>,
    %c0_53 = arith.constant 0 : index
    %c0_54 = arith.constant 0 : index
    %122 = vector.load %arg11[%c0_53, %c0_54] : memref<1x64xf32, #tpu.memory_space<vmem>>, vector<1x64xf32>
    %c0_55 = arith.constant 0 : index
    %c0_56 = arith.constant 0 : index
    %123 = vector.load %arg12[%c0_55, %c0_56] : memref<1x64xf32, #tpu.memory_space<vmem>>, vector<1x64xf32>
    %cst_57 = arith.constant dense<0.000000e+00> : vector<8xf32>
    %124 = vector.multi_reduction <add>, %4, %cst_57 [1] : vector<8x64xf32> to vector<8xf32>
    %125 = vector.shape_cast %124 : vector<8xf32> to vector<8x1xf32>
    %cst_58 = arith.constant 6.400000e+01 : f32
    %126 = vector.broadcast %cst_58 : f32 to vector<8x1xf32>
    %127 = arith.divf %125, %126 : vector<8x1xf32>
    %128 = vector.broadcast %127 : vector<8x1xf32> to vector<8x64xf32>
    %129 = arith.subf %4, %128 : vector<8x64xf32>
    %130 = arith.mulf %129, %129 : vector<8x64xf32>
    %cst_59 = arith.constant dense<0.000000e+00> : vector<8xf32>
    %131 = vector.multi_reduction <add>, %130, %cst_59 [1] : vector<8x64xf32> to vector<8xf32>
    %132 = vector.shape_cast %131 : vector<8xf32> to vector<8x1xf32>
    %cst_60 = arith.constant 6.400000e+01 : f32
    %133 = vector.broadcast %cst_60 : f32 to vector<8x1xf32>
    %134 = arith.divf %132, %133 : vector<8x1xf32>
    %135 = vector.broadcast %127 : vector<8x1xf32> to vector<8x64xf32>
    %136 = arith.subf %4, %135 : vector<8x64xf32>
    %cst_61 = arith.constant 9.99999997E-7 : f32
    %137 = vector.broadcast %cst_61 : f32 to vector<8x1xf32>
    %138 = arith.addf %134, %137 : vector<8x1xf32>
    %139 = math.rsqrt %138 : vector<8x1xf32>
    %140 = vector.broadcast %139 : vector<8x1xf32> to vector<8x64xf32>
    %141 = arith.mulf %136, %140 : vector<8x64xf32>
    %142 = vector.broadcast %122 : vector<1x64xf32> to vector<8x64xf32>
    %143 = arith.mulf %141, %142 : vector<8x64xf32>
    %144 = vector.broadcast %123 : vector<1x64xf32> to vector<8x64xf32>
    %145 = arith.addf %143, %144 : vector<8x64xf32>
    %146 = arith.truncf %145 : vector<8x64xf32> to vector<8x64xbf16>
    %c0_62 = arith.constant 0 : index
    %c0_63 = arith.constant 0 : index
    %147 = vector.load %arg13[%c0_62, %c0_63] : memref<64x128xbf16, #tpu.memory_space<vmem>>, vector<64x128xbf16>
    %cst_64 = arith.constant dense<0.000000e+00> : vector<8x128xf32>
    %148 = tpu.matmul %146, %147, %cst_64 {dimension_numbers = #tpu.dot_dimension_numbers<[1], [0], [0], [1], [0, 0, 1, 1], [], []>} : vector<8x64xbf16>, vector<64x128xbf16>, vector<8x128xf32> -> vector<8x128xf32>
    %c0_65 = arith.constant 0 : index
    %c0_66 = arith.constant 0 : index
    %149 = vector.load %arg14[%c0_65, %c0_66] : memref<1x128xf32, #tpu.memory_space<vmem>>, vector<1x128xf32>
    %150 = vector.broadcast %149 : vector<1x128xf32> to vector<8x128xf32>
    %151 = arith.addf %148, %150 : vector<8x128xf32>
    %cst_67 = arith.constant 5.000000e-01 : f32
    %152 = vector.broadcast %cst_67 : f32 to vector<8x128xf32>
    %153 = arith.mulf %152, %151 : vector<8x128xf32>
    %cst_68 = arith.constant 4.471500e-02 : f32
    %154 = vector.broadcast %cst_68 : f32 to vector<8x128xf32>
    %155 = arith.mulf %154, %151 : vector<8x128xf32>
    %156 = arith.mulf %155, %151 : vector<8x128xf32>
    %157 = arith.mulf %156, %151 : vector<8x128xf32>
    %158 = arith.addf %151, %157 : vector<8x128xf32>
    %cst_69 = arith.constant 0.797884583 : f32
    %159 = vector.broadcast %cst_69 : f32 to vector<8x128xf32>
    %160 = arith.mulf %159, %158 : vector<8x128xf32>
    %161 = math.tanh %160 : vector<8x128xf32>
    %cst_70 = arith.constant 1.000000e+00 : f32
    %162 = vector.broadcast %cst_70 : f32 to vector<8x128xf32>
    %163 = arith.addf %162, %161 : vector<8x128xf32>
    %164 = arith.mulf %153, %163 : vector<8x128xf32>
    %165 = arith.truncf %164 : vector<8x128xf32> to vector<8x128xbf16>
    %c0_71 = arith.constant 0 : index
    %c0_72 = arith.constant 0 : index
    %166 = vector.load %arg15[%c0_71, %c0_72] : memref<128x64xbf16, #tpu.memory_space<vmem>>, vector<128x64xbf16>
    %cst_73 = arith.constant dense<0.000000e+00> : vector<8x64xf32>
    %167 = tpu.matmul %165, %166, %cst_73 {dimension_numbers = #tpu.dot_dimension_numbers<[1], [0], [0], [1], [0, 0, 1, 1], [], []>} : vector<8x128xbf16>, vector<128x64xbf16>, vector<8x64xf32> -> vector<8x64xf32>
    %c0_74 = arith.constant 0 : index
    %c0_75 = arith.constant 0 : index
    %168 = vector.load %arg16[%c0_74, %c0_75] : memref<1x64xf32, #tpu.memory_space<vmem>>, vector<1x64xf32>
    %169 = vector.broadcast %168 : vector<1x64xf32> to vector<8x64xf32>
    %170 = arith.addf %167, %169 : vector<8x64xf32>
    %171 = arith.addf %4, %170 : vector<8x64xf32>
    %c0_76 = arith.constant 0 : index
    %c0_77 = arith.constant 0 : index
    %172 = vector.load %arg19[%c0_76, %c0_77] : memref<8x64xf32, #tpu.memory_space<vmem>>, vector<8x64xf32>
    tpu.vector_store %arg19[%c0_76, %c0_77], %171 {strides = array<i32>} : memref<8x64xf32, #tpu.memory_space<vmem>>, vector<8x64xf32>,
    return
  }
}

module attributes {stable_mosaic.version = 11 : i64} {
  func.func @hit_block_kernel(%arg0: memref<8x64xf32, #tpu.memory_space<vmem>>, %arg1: memref<2x64xf32, #tpu.memory_space<vmem>>, %arg2: memref<1x64xf32, #tpu.memory_space<vmem>>, %arg3: memref<1x64xf32, #tpu.memory_space<vmem>>, %arg4: memref<64x64xbf16, #tpu.memory_space<vmem>>, %arg5: memref<1x64xf32, #tpu.memory_space<vmem>>, %arg6: memref<64x128xbf16, #tpu.memory_space<vmem>>, %arg7: memref<1x128xf32, #tpu.memory_space<vmem>>, %arg8: memref<64x64xbf16, #tpu.memory_space<vmem>>, %arg9: memref<1x64xf32, #tpu.memory_space<vmem>>, %arg10: memref<1x64xf32, #tpu.memory_space<vmem>>, %arg11: memref<1x64xf32, #tpu.memory_space<vmem>>, %arg12: memref<64x128xbf16, #tpu.memory_space<vmem>>, %arg13: memref<1x128xf32, #tpu.memory_space<vmem>>, %arg14: memref<128x64xbf16, #tpu.memory_space<vmem>>, %arg15: memref<1x64xf32, #tpu.memory_space<vmem>>, %arg16: memref<64x4xf32, #tpu.memory_space<vmem>>, %arg17: memref<4x64xf32, #tpu.memory_space<vmem>>, %arg18: memref<1x64xf32, #tpu.memory_space<vmem>>, %arg19: memref<1x64xf32, #tpu.memory_space<vmem>>, %arg20: memref<64x128xbf16, #tpu.memory_space<vmem>>, %arg21: memref<1x128xf32, #tpu.memory_space<vmem>>, %arg22: memref<8x64xf32, #tpu.memory_space<vmem>>, %arg23: memref<2x64xf32, #tpu.memory_space<vmem>>, %arg24: memref<2x128xf32, #tpu.memory_space<vmem>>) attributes {dimension_semantics = [], scalar_prefetch = 0 : i64, scratch_operands = 0 : i64, tpu.core_type = #tpu.core_type<tc>} {
    %c0 = arith.constant 0 : index
    %c0_0 = arith.constant 0 : index
    %0 = vector.load %arg0[%c0, %c0_0] : memref<8x64xf32, #tpu.memory_space<vmem>>, vector<8x64xf32>
    %c0_1 = arith.constant 0 : index
    %c0_2 = arith.constant 0 : index
    %1 = vector.load %arg1[%c0_1, %c0_2] : memref<2x64xf32, #tpu.memory_space<vmem>>, vector<2x64xf32>
    %c0_3 = arith.constant 0 : index
    %c0_4 = arith.constant 0 : index
    %2 = vector.load %arg2[%c0_3, %c0_4] : memref<1x64xf32, #tpu.memory_space<vmem>>, vector<1x64xf32>
    %c0_5 = arith.constant 0 : index
    %c0_6 = arith.constant 0 : index
    %3 = vector.load %arg3[%c0_5, %c0_6] : memref<1x64xf32, #tpu.memory_space<vmem>>, vector<1x64xf32>
    %cst = arith.constant dense<0.000000e+00> : vector<8xf32>
    %4 = vector.multi_reduction <add>, %0, %cst [1] : vector<8x64xf32> to vector<8xf32>
    %5 = vector.shape_cast %4 : vector<8xf32> to vector<8x1xf32>
    %cst_7 = arith.constant 6.400000e+01 : f32
    %6 = vector.broadcast %cst_7 : f32 to vector<8x1xf32>
    %7 = arith.divf %5, %6 : vector<8x1xf32>
    %8 = vector.broadcast %7 : vector<8x1xf32> to vector<8x64xf32>
    %9 = arith.subf %0, %8 : vector<8x64xf32>
    %10 = arith.mulf %9, %9 : vector<8x64xf32>
    %cst_8 = arith.constant dense<0.000000e+00> : vector<8xf32>
    %11 = vector.multi_reduction <add>, %10, %cst_8 [1] : vector<8x64xf32> to vector<8xf32>
    %12 = vector.shape_cast %11 : vector<8xf32> to vector<8x1xf32>
    %cst_9 = arith.constant 6.400000e+01 : f32
    %13 = vector.broadcast %cst_9 : f32 to vector<8x1xf32>
    %14 = arith.divf %12, %13 : vector<8x1xf32>
    %15 = vector.broadcast %7 : vector<8x1xf32> to vector<8x64xf32>
    %16 = arith.subf %0, %15 : vector<8x64xf32>
    %cst_10 = arith.constant 9.99999997E-7 : f32
    %17 = vector.broadcast %cst_10 : f32 to vector<8x1xf32>
    %18 = arith.addf %14, %17 : vector<8x1xf32>
    %19 = math.rsqrt %18 : vector<8x1xf32>
    %20 = vector.broadcast %19 : vector<8x1xf32> to vector<8x64xf32>
    %21 = arith.mulf %16, %20 : vector<8x64xf32>
    %22 = vector.broadcast %2 : vector<1x64xf32> to vector<8x64xf32>
    %23 = arith.mulf %21, %22 : vector<8x64xf32>
    %24 = vector.broadcast %3 : vector<1x64xf32> to vector<8x64xf32>
    %25 = arith.addf %23, %24 : vector<8x64xf32>
    %26 = arith.truncf %25 : vector<8x64xf32> to vector<8x64xbf16>
    %cst_11 = arith.constant dense<0.000000e+00> : vector<2xf32>
    %27 = vector.multi_reduction <add>, %1, %cst_11 [1] : vector<2x64xf32> to vector<2xf32>
    %28 = vector.shape_cast %27 : vector<2xf32> to vector<2x1xf32>
    %cst_12 = arith.constant 6.400000e+01 : f32
    %29 = vector.broadcast %cst_12 : f32 to vector<2x1xf32>
    %30 = arith.divf %28, %29 : vector<2x1xf32>
    %31 = vector.broadcast %30 : vector<2x1xf32> to vector<2x64xf32>
    %32 = arith.subf %1, %31 : vector<2x64xf32>
    %33 = arith.mulf %32, %32 : vector<2x64xf32>
    %cst_13 = arith.constant dense<0.000000e+00> : vector<2xf32>
    %34 = vector.multi_reduction <add>, %33, %cst_13 [1] : vector<2x64xf32> to vector<2xf32>
    %35 = vector.shape_cast %34 : vector<2xf32> to vector<2x1xf32>
    %cst_14 = arith.constant 6.400000e+01 : f32
    %36 = vector.broadcast %cst_14 : f32 to vector<2x1xf32>
    %37 = arith.divf %35, %36 : vector<2x1xf32>
    %38 = vector.broadcast %30 : vector<2x1xf32> to vector<2x64xf32>
    %39 = arith.subf %1, %38 : vector<2x64xf32>
    %cst_15 = arith.constant 9.99999997E-7 : f32
    %40 = vector.broadcast %cst_15 : f32 to vector<2x1xf32>
    %41 = arith.addf %37, %40 : vector<2x1xf32>
    %42 = math.rsqrt %41 : vector<2x1xf32>
    %43 = vector.broadcast %42 : vector<2x1xf32> to vector<2x64xf32>
    %44 = arith.mulf %39, %43 : vector<2x64xf32>
    %45 = vector.broadcast %2 : vector<1x64xf32> to vector<2x64xf32>
    %46 = arith.mulf %44, %45 : vector<2x64xf32>
    %47 = vector.broadcast %3 : vector<1x64xf32> to vector<2x64xf32>
    %48 = arith.addf %46, %47 : vector<2x64xf32>
    %49 = arith.truncf %48 : vector<2x64xf32> to vector<2x64xbf16>
    %c0_16 = arith.constant 0 : index
    %c0_17 = arith.constant 0 : index
    %50 = vector.load %arg4[%c0_16, %c0_17] : memref<64x64xbf16, #tpu.memory_space<vmem>>, vector<64x64xbf16>
    %cst_18 = arith.constant dense<0.000000e+00> : vector<2x64xf32>
    %51 = tpu.matmul %49, %50, %cst_18 {dimension_numbers = #tpu.dot_dimension_numbers<[1], [0], [0], [1], [0, 0, 1, 1], [], []>} : vector<2x64xbf16>, vector<64x64xbf16>, vector<2x64xf32> -> vector<2x64xf32>
    %c0_19 = arith.constant 0 : index
    %c0_20 = arith.constant 0 : index
    %52 = vector.load %arg5[%c0_19, %c0_20] : memref<1x64xf32, #tpu.memory_space<vmem>>, vector<1x64xf32>
    %53 = vector.broadcast %52 : vector<1x64xf32> to vector<2x64xf32>
    %54 = arith.addf %51, %53 : vector<2x64xf32>
    %c0_21 = arith.constant 0 : index
    %c0_22 = arith.constant 0 : index
    %55 = vector.load %arg6[%c0_21, %c0_22] : memref<64x128xbf16, #tpu.memory_space<vmem>>, vector<64x128xbf16>
    %cst_23 = arith.constant dense<0.000000e+00> : vector<8x128xf32>
    %56 = tpu.matmul %26, %55, %cst_23 {dimension_numbers = #tpu.dot_dimension_numbers<[1], [0], [0], [1], [0, 0, 1, 1], [], []>} : vector<8x64xbf16>, vector<64x128xbf16>, vector<8x128xf32> -> vector<8x128xf32>
    %c0_24 = arith.constant 0 : index
    %c0_25 = arith.constant 0 : index
    %57 = vector.load %arg7[%c0_24, %c0_25] : memref<1x128xf32, #tpu.memory_space<vmem>>, vector<1x128xf32>
    %58 = vector.broadcast %57 : vector<1x128xf32> to vector<8x128xf32>
    %59 = arith.addf %56, %58 : vector<8x128xf32>
    %60 = vector.extract_strided_slice %59 {offsets = [0, 0], sizes = [8, 64], strides = [1, 1]} : vector<8x128xf32> to vector<8x64xf32>
    %61 = vector.extract_strided_slice %59 {offsets = [0, 64], sizes = [8, 64], strides = [1, 1]} : vector<8x128xf32> to vector<8x64xf32>
    %c0_26 = arith.constant 0 : index
    %c0_27 = arith.constant 0 : index
    %62 = vector.load %arg16[%c0_26, %c0_27] : memref<64x4xf32, #tpu.memory_space<vmem>>, vector<64x4xf32>
    %c0_28 = arith.constant 0 : index
    %c0_29 = arith.constant 0 : index
    %63 = vector.load %arg17[%c0_28, %c0_29] : memref<4x64xf32, #tpu.memory_space<vmem>>, vector<4x64xf32>
    %64 = vector.extract_strided_slice %60 {offsets = [0, 0], sizes = [4, 64], strides = [1, 1]} : vector<8x64xf32> to vector<4x64xf32>
    %65 = vector.extract_strided_slice %61 {offsets = [0, 0], sizes = [4, 64], strides = [1, 1]} : vector<8x64xf32> to vector<4x64xf32>
    %66 = vector.extract_strided_slice %54 {offsets = [0, 0], sizes = [1, 64], strides = [1, 1]} : vector<2x64xf32> to vector<1x64xf32>
    %67 = vector.broadcast %66 : vector<1x64xf32> to vector<4x64xf32>
    %68 = arith.mulf %67, %64 : vector<4x64xf32>
    %cst_30 = arith.constant dense<0.000000e+00> : vector<4x4xf32>
    %69 = tpu.matmul %68, %62, %cst_30 {dimension_numbers = #tpu.dot_dimension_numbers<[1], [0], [0], [1], [0, 0, 1, 1], [], []>} : vector<4x64xf32>, vector<64x4xf32>, vector<4x4xf32> -> vector<4x4xf32>
    %cst_31 = arith.constant 2.500000e-01 : f32
    %70 = vector.broadcast %cst_31 : f32 to vector<4x4xf32>
    %71 = arith.mulf %69, %70 : vector<4x4xf32>
    %cst_32 = arith.constant dense<0xFF800000> : vector<4xf32>
    %72 = vector.multi_reduction <maximumf>, %71, %cst_32 [0] : vector<4x4xf32> to vector<4xf32>
    %73 = vector.shape_cast %72 : vector<4xf32> to vector<1x4xf32>
    %74 = vector.broadcast %73 : vector<1x4xf32> to vector<4x4xf32>
    %75 = arith.subf %71, %74 : vector<4x4xf32>
    %76 = math.exp %75 : vector<4x4xf32>
    %cst_33 = arith.constant dense<0.000000e+00> : vector<4xf32>
    %77 = vector.multi_reduction <add>, %76, %cst_33 [0] : vector<4x4xf32> to vector<4xf32>
    %78 = vector.shape_cast %77 : vector<4xf32> to vector<1x4xf32>
    %79 = tpu.reciprocal %78 {approx = true} : vector<1x4xf32> -> vector<1x4xf32>
    %80 = vector.broadcast %79 : vector<1x4xf32> to vector<4x4xf32>
    %81 = arith.mulf %76, %80 : vector<4x4xf32>
    %cst_34 = arith.constant dense<0.000000e+00> : vector<4x64xf32>
    %82 = tpu.matmul %81, %63, %cst_34 {dimension_numbers = #tpu.dot_dimension_numbers<[1], [0], [0], [1], [0, 0, 1, 1], [], []>} : vector<4x4xf32>, vector<4x64xf32>, vector<4x64xf32> -> vector<4x64xf32>
    %83 = arith.mulf %82, %65 : vector<4x64xf32>
    %cst_35 = arith.constant dense<0.000000e+00> : vector<64xf32>
    %84 = vector.multi_reduction <add>, %83, %cst_35 [0] : vector<4x64xf32> to vector<64xf32>
    %85 = vector.shape_cast %84 : vector<64xf32> to vector<1x64xf32>
    %86 = vector.extract_strided_slice %60 {offsets = [4, 0], sizes = [4, 64], strides = [1, 1]} : vector<8x64xf32> to vector<4x64xf32>
    %87 = vector.extract_strided_slice %61 {offsets = [4, 0], sizes = [4, 64], strides = [1, 1]} : vector<8x64xf32> to vector<4x64xf32>
    %88 = vector.extract_strided_slice %54 {offsets = [1, 0], sizes = [1, 64], strides = [1, 1]} : vector<2x64xf32> to vector<1x64xf32>
    %89 = vector.broadcast %88 : vector<1x64xf32> to vector<4x64xf32>
    %90 = arith.mulf %89, %86 : vector<4x64xf32>
    %cst_36 = arith.constant dense<0.000000e+00> : vector<4x4xf32>
    %91 = tpu.matmul %90, %62, %cst_36 {dimension_numbers = #tpu.dot_dimension_numbers<[1], [0], [0], [1], [0, 0, 1, 1], [], []>} : vector<4x64xf32>, vector<64x4xf32>, vector<4x4xf32> -> vector<4x4xf32>
    %cst_37 = arith.constant 2.500000e-01 : f32
    %92 = vector.broadcast %cst_37 : f32 to vector<4x4xf32>
    %93 = arith.mulf %91, %92 : vector<4x4xf32>
    %cst_38 = arith.constant dense<0xFF800000> : vector<4xf32>
    %94 = vector.multi_reduction <maximumf>, %93, %cst_38 [0] : vector<4x4xf32> to vector<4xf32>
    %95 = vector.shape_cast %94 : vector<4xf32> to vector<1x4xf32>
    %96 = vector.broadcast %95 : vector<1x4xf32> to vector<4x4xf32>
    %97 = arith.subf %93, %96 : vector<4x4xf32>
    %98 = math.exp %97 : vector<4x4xf32>
    %cst_39 = arith.constant dense<0.000000e+00> : vector<4xf32>
    %99 = vector.multi_reduction <add>, %98, %cst_39 [0] : vector<4x4xf32> to vector<4xf32>
    %100 = vector.shape_cast %99 : vector<4xf32> to vector<1x4xf32>
    %101 = tpu.reciprocal %100 {approx = true} : vector<1x4xf32> -> vector<1x4xf32>
    %102 = vector.broadcast %101 : vector<1x4xf32> to vector<4x4xf32>
    %103 = arith.mulf %98, %102 : vector<4x4xf32>
    %cst_40 = arith.constant dense<0.000000e+00> : vector<4x64xf32>
    %104 = tpu.matmul %103, %63, %cst_40 {dimension_numbers = #tpu.dot_dimension_numbers<[1], [0], [0], [1], [0, 0, 1, 1], [], []>} : vector<4x4xf32>, vector<4x64xf32>, vector<4x64xf32> -> vector<4x64xf32>
    %105 = arith.mulf %104, %87 : vector<4x64xf32>
    %cst_41 = arith.constant dense<0.000000e+00> : vector<64xf32>
    %106 = vector.multi_reduction <add>, %105, %cst_41 [0] : vector<4x64xf32> to vector<64xf32>
    %107 = vector.shape_cast %106 : vector<64xf32> to vector<1x64xf32>
    %108 = tpu.concatenate %85, %107 in 0 : vector<1x64xf32>, vector<1x64xf32> -> vector<2x64xf32>
    %109 = arith.truncf %108 : vector<2x64xf32> to vector<2x64xbf16>
    %c0_42 = arith.constant 0 : index
    %c0_43 = arith.constant 0 : index
    %110 = vector.load %arg8[%c0_42, %c0_43] : memref<64x64xbf16, #tpu.memory_space<vmem>>, vector<64x64xbf16>
    %cst_44 = arith.constant dense<0.000000e+00> : vector<2x64xf32>
    %111 = tpu.matmul %109, %110, %cst_44 {dimension_numbers = #tpu.dot_dimension_numbers<[1], [0], [0], [1], [0, 0, 1, 1], [], []>} : vector<2x64xbf16>, vector<64x64xbf16>, vector<2x64xf32> -> vector<2x64xf32>
    %c0_45 = arith.constant 0 : index
    %c0_46 = arith.constant 0 : index
    %112 = vector.load %arg9[%c0_45, %c0_46] : memref<1x64xf32, #tpu.memory_space<vmem>>, vector<1x64xf32>
    %113 = vector.broadcast %112 : vector<1x64xf32> to vector<2x64xf32>
    %114 = arith.addf %111, %113 : vector<2x64xf32>
    %115 = arith.addf %1, %114 : vector<2x64xf32>
    %c0_47 = arith.constant 0 : index
    %c0_48 = arith.constant 0 : index
    %116 = vector.load %arg23[%c0_47, %c0_48] : memref<2x64xf32, #tpu.memory_space<vmem>>, vector<2x64xf32>
    tpu.vector_store %arg23[%c0_47, %c0_48], %115 {strides = array<i32>} : memref<2x64xf32, #tpu.memory_space<vmem>>, vector<2x64xf32>,
    %c0_49 = arith.constant 0 : index
    %c0_50 = arith.constant 0 : index
    %117 = vector.load %arg10[%c0_49, %c0_50] : memref<1x64xf32, #tpu.memory_space<vmem>>, vector<1x64xf32>
    %c0_51 = arith.constant 0 : index
    %c0_52 = arith.constant 0 : index
    %118 = vector.load %arg11[%c0_51, %c0_52] : memref<1x64xf32, #tpu.memory_space<vmem>>, vector<1x64xf32>
    %cst_53 = arith.constant dense<0.000000e+00> : vector<8xf32>
    %119 = vector.multi_reduction <add>, %0, %cst_53 [1] : vector<8x64xf32> to vector<8xf32>
    %120 = vector.shape_cast %119 : vector<8xf32> to vector<8x1xf32>
    %cst_54 = arith.constant 6.400000e+01 : f32
    %121 = vector.broadcast %cst_54 : f32 to vector<8x1xf32>
    %122 = arith.divf %120, %121 : vector<8x1xf32>
    %123 = vector.broadcast %122 : vector<8x1xf32> to vector<8x64xf32>
    %124 = arith.subf %0, %123 : vector<8x64xf32>
    %125 = arith.mulf %124, %124 : vector<8x64xf32>
    %cst_55 = arith.constant dense<0.000000e+00> : vector<8xf32>
    %126 = vector.multi_reduction <add>, %125, %cst_55 [1] : vector<8x64xf32> to vector<8xf32>
    %127 = vector.shape_cast %126 : vector<8xf32> to vector<8x1xf32>
    %cst_56 = arith.constant 6.400000e+01 : f32
    %128 = vector.broadcast %cst_56 : f32 to vector<8x1xf32>
    %129 = arith.divf %127, %128 : vector<8x1xf32>
    %130 = vector.broadcast %122 : vector<8x1xf32> to vector<8x64xf32>
    %131 = arith.subf %0, %130 : vector<8x64xf32>
    %cst_57 = arith.constant 9.99999997E-7 : f32
    %132 = vector.broadcast %cst_57 : f32 to vector<8x1xf32>
    %133 = arith.addf %129, %132 : vector<8x1xf32>
    %134 = math.rsqrt %133 : vector<8x1xf32>
    %135 = vector.broadcast %134 : vector<8x1xf32> to vector<8x64xf32>
    %136 = arith.mulf %131, %135 : vector<8x64xf32>
    %137 = vector.broadcast %117 : vector<1x64xf32> to vector<8x64xf32>
    %138 = arith.mulf %136, %137 : vector<8x64xf32>
    %139 = vector.broadcast %118 : vector<1x64xf32> to vector<8x64xf32>
    %140 = arith.addf %138, %139 : vector<8x64xf32>
    %141 = arith.truncf %140 : vector<8x64xf32> to vector<8x64xbf16>
    %c0_58 = arith.constant 0 : index
    %c0_59 = arith.constant 0 : index
    %142 = vector.load %arg12[%c0_58, %c0_59] : memref<64x128xbf16, #tpu.memory_space<vmem>>, vector<64x128xbf16>
    %cst_60 = arith.constant dense<0.000000e+00> : vector<8x128xf32>
    %143 = tpu.matmul %141, %142, %cst_60 {dimension_numbers = #tpu.dot_dimension_numbers<[1], [0], [0], [1], [0, 0, 1, 1], [], []>} : vector<8x64xbf16>, vector<64x128xbf16>, vector<8x128xf32> -> vector<8x128xf32>
    %c0_61 = arith.constant 0 : index
    %c0_62 = arith.constant 0 : index
    %144 = vector.load %arg13[%c0_61, %c0_62] : memref<1x128xf32, #tpu.memory_space<vmem>>, vector<1x128xf32>
    %145 = vector.broadcast %144 : vector<1x128xf32> to vector<8x128xf32>
    %146 = arith.addf %143, %145 : vector<8x128xf32>
    %cst_63 = arith.constant 5.000000e-01 : f32
    %147 = vector.broadcast %cst_63 : f32 to vector<8x128xf32>
    %148 = arith.mulf %147, %146 : vector<8x128xf32>
    %cst_64 = arith.constant 4.471500e-02 : f32
    %149 = vector.broadcast %cst_64 : f32 to vector<8x128xf32>
    %150 = arith.mulf %149, %146 : vector<8x128xf32>
    %151 = arith.mulf %150, %146 : vector<8x128xf32>
    %152 = arith.mulf %151, %146 : vector<8x128xf32>
    %153 = arith.addf %146, %152 : vector<8x128xf32>
    %cst_65 = arith.constant 0.797884583 : f32
    %154 = vector.broadcast %cst_65 : f32 to vector<8x128xf32>
    %155 = arith.mulf %154, %153 : vector<8x128xf32>
    %156 = math.tanh %155 : vector<8x128xf32>
    %cst_66 = arith.constant 1.000000e+00 : f32
    %157 = vector.broadcast %cst_66 : f32 to vector<8x128xf32>
    %158 = arith.addf %157, %156 : vector<8x128xf32>
    %159 = arith.mulf %148, %158 : vector<8x128xf32>
    %160 = arith.truncf %159 : vector<8x128xf32> to vector<8x128xbf16>
    %c0_67 = arith.constant 0 : index
    %c0_68 = arith.constant 0 : index
    %161 = vector.load %arg14[%c0_67, %c0_68] : memref<128x64xbf16, #tpu.memory_space<vmem>>, vector<128x64xbf16>
    %cst_69 = arith.constant dense<0.000000e+00> : vector<8x64xf32>
    %162 = tpu.matmul %160, %161, %cst_69 {dimension_numbers = #tpu.dot_dimension_numbers<[1], [0], [0], [1], [0, 0, 1, 1], [], []>} : vector<8x128xbf16>, vector<128x64xbf16>, vector<8x64xf32> -> vector<8x64xf32>
    %c0_70 = arith.constant 0 : index
    %c0_71 = arith.constant 0 : index
    %163 = vector.load %arg15[%c0_70, %c0_71] : memref<1x64xf32, #tpu.memory_space<vmem>>, vector<1x64xf32>
    %164 = vector.broadcast %163 : vector<1x64xf32> to vector<8x64xf32>
    %165 = arith.addf %162, %164 : vector<8x64xf32>
    %166 = arith.addf %0, %165 : vector<8x64xf32>
    %c0_72 = arith.constant 0 : index
    %c0_73 = arith.constant 0 : index
    %167 = vector.load %arg22[%c0_72, %c0_73] : memref<8x64xf32, #tpu.memory_space<vmem>>, vector<8x64xf32>
    tpu.vector_store %arg22[%c0_72, %c0_73], %166 {strides = array<i32>} : memref<8x64xf32, #tpu.memory_space<vmem>>, vector<8x64xf32>,
    %c0_74 = arith.constant 0 : index
    %c0_75 = arith.constant 0 : index
    %168 = vector.load %arg18[%c0_74, %c0_75] : memref<1x64xf32, #tpu.memory_space<vmem>>, vector<1x64xf32>
    %c0_76 = arith.constant 0 : index
    %c0_77 = arith.constant 0 : index
    %169 = vector.load %arg19[%c0_76, %c0_77] : memref<1x64xf32, #tpu.memory_space<vmem>>, vector<1x64xf32>
    %cst_78 = arith.constant dense<0.000000e+00> : vector<2xf32>
    %170 = vector.multi_reduction <add>, %115, %cst_78 [1] : vector<2x64xf32> to vector<2xf32>
    %171 = vector.shape_cast %170 : vector<2xf32> to vector<2x1xf32>
    %cst_79 = arith.constant 6.400000e+01 : f32
    %172 = vector.broadcast %cst_79 : f32 to vector<2x1xf32>
    %173 = arith.divf %171, %172 : vector<2x1xf32>
    %174 = vector.broadcast %173 : vector<2x1xf32> to vector<2x64xf32>
    %175 = arith.subf %115, %174 : vector<2x64xf32>
    %176 = arith.mulf %175, %175 : vector<2x64xf32>
    %cst_80 = arith.constant dense<0.000000e+00> : vector<2xf32>
    %177 = vector.multi_reduction <add>, %176, %cst_80 [1] : vector<2x64xf32> to vector<2xf32>
    %178 = vector.shape_cast %177 : vector<2xf32> to vector<2x1xf32>
    %cst_81 = arith.constant 6.400000e+01 : f32
    %179 = vector.broadcast %cst_81 : f32 to vector<2x1xf32>
    %180 = arith.divf %178, %179 : vector<2x1xf32>
    %181 = vector.broadcast %173 : vector<2x1xf32> to vector<2x64xf32>
    %182 = arith.subf %115, %181 : vector<2x64xf32>
    %cst_82 = arith.constant 9.99999997E-7 : f32
    %183 = vector.broadcast %cst_82 : f32 to vector<2x1xf32>
    %184 = arith.addf %180, %183 : vector<2x1xf32>
    %185 = math.rsqrt %184 : vector<2x1xf32>
    %186 = vector.broadcast %185 : vector<2x1xf32> to vector<2x64xf32>
    %187 = arith.mulf %182, %186 : vector<2x64xf32>
    %188 = vector.broadcast %168 : vector<1x64xf32> to vector<2x64xf32>
    %189 = arith.mulf %187, %188 : vector<2x64xf32>
    %190 = vector.broadcast %169 : vector<1x64xf32> to vector<2x64xf32>
    %191 = arith.addf %189, %190 : vector<2x64xf32>
    %192 = arith.truncf %191 : vector<2x64xf32> to vector<2x64xbf16>
    %c0_83 = arith.constant 0 : index
    %c0_84 = arith.constant 0 : index
    %193 = vector.load %arg20[%c0_83, %c0_84] : memref<64x128xbf16, #tpu.memory_space<vmem>>, vector<64x128xbf16>
    %cst_85 = arith.constant dense<0.000000e+00> : vector<2x128xf32>
    %194 = tpu.matmul %192, %193, %cst_85 {dimension_numbers = #tpu.dot_dimension_numbers<[1], [0], [0], [1], [0, 0, 1, 1], [], []>} : vector<2x64xbf16>, vector<64x128xbf16>, vector<2x128xf32> -> vector<2x128xf32>
    %c0_86 = arith.constant 0 : index
    %c0_87 = arith.constant 0 : index
    %195 = vector.load %arg21[%c0_86, %c0_87] : memref<1x128xf32, #tpu.memory_space<vmem>>, vector<1x128xf32>
    %196 = vector.broadcast %195 : vector<1x128xf32> to vector<2x128xf32>
    %197 = arith.addf %194, %196 : vector<2x128xf32>
    %c0_88 = arith.constant 0 : index
    %c0_89 = arith.constant 0 : index
    %198 = vector.load %arg24[%c0_88, %c0_89] : memref<2x128xf32, #tpu.memory_space<vmem>>, vector<2x128xf32>
    tpu.vector_store %arg24[%c0_88, %c0_89], %197 {strides = array<i32>} : memref<2x128xf32, #tpu.memory_space<vmem>>, vector<2x128xf32>,
    return
  }
}

</mosaic_0001>

<llo_original>
// kernel: _lambda_.5
$region0: #{_lambda_.5}
  #allocation0 [shape = 'u32[]', space=smem, size = 0x4, offset = 0x4, fixed_abs, tag = 'smem constant byte address 0x4 - core index']
  #allocation1 [shape = 'u32[144,128]{1,0:T(1,128)}', space=vmem, size = 0x12000, scoped, tag = 'internal scratch']
  %s0 = inlined_call_operand.vmem [shape: bf16[32,48], index: 0, kind: input, shape index: {}]
  %s1 = inlined_call_operand.vmem [shape: bf16[48,32], index: 1, kind: input, shape index: {}]
  %s2 = inlined_call_operand.vmem [shape: f32[1,32], index: 2, kind: input, shape index: {}]
  %s3 = inlined_call_operand.vmem [shape: f32[32,32], index: 3, kind: output, shape index: {}]
  %s4 = sld [smem:[#allocation0]]
  $region22: #{_lambda_.5} parent=0
    _
  %s6 = ssub.s32 1, %s4
  %s7 = scalar_select 0, %s6, %s4
  // Predicated region
  $region2: #{_lambda_.5} parent=0 // pred_check
    _
  $region3: #{_lambda_.5} parent=0 // pred_check_branch
    %9 = sbr.rel (0) target = $region5
  $region4: #{_lambda_.5} parent=0 // pred_region
    _
  $region5: #{_lambda_.5} parent=0 // pred_fallthru
    _
  // Predicated region
  $region6: #{_lambda_.5} parent=0 // pred_check
    _
  $region7: #{_lambda_.5} parent=0 // pred_check_branch
    %11 = sbr.rel (0) target = $region9
  $region8: #{_lambda_.5} parent=0 // pred_region
    _
  $region9: #{_lambda_.5} parent=0 // pred_fallthru
    _
  // Predicated region
  $region10: #{_lambda_.5} parent=0 // pred_check
    _
  $region11: #{_lambda_.5} parent=0 // pred_check_branch
    %13 = sbr.rel (0) target = $region13
  $region12: #{_lambda_.5} parent=0 // pred_region
    _
  $region13: #{_lambda_.5} parent=0 // pred_fallthru
    _
  %v15 = vld [vmem:[%s0] sm:$0xf]
  %v16 = vld [vmem:[%s0 + $0x4] sm:$0xf]
  %v17 = vld [vmem:[%s0 + $0x8] sm:$0xf]
  %v18 = vld [vmem:[%s0 + $0xc] sm:$0xf]
  %v19 = vld [vmem:[%s1] sm:$0xf]
  %v20 = vld [vmem:[%s1 + $0x4] sm:$0xf]
  %v21 = vld [vmem:[%s1 + $0x8] sm:$0xf]
  %v22 = vld [vmem:[%s1 + $0xc] sm:$0xf]
  %v23 = vld [vmem:[%s1 + $0x10] sm:$0xf]
  %v24 = vld [vmem:[%s1 + $0x14] sm:$0xf]
  %v25 = vld [vmem:[%s2] sm:$0x1]
  %v27 = vlaneseq
  %v28 = vshrl.u32 %v27, 7
  %v29 = vsub.s32 0, %v28
  %v30 = vrot.slane %v25, %v29
  %v36 = vunpack.c.l.b16 %v15
  %v37 = vunpack.c.l.b16 %v16
  %v38 = vunpack.c.l.b16 %v17
  %v39 = vunpack.c.l.b16 %v18
  %v40 = vpack.c.b16 %v37, %v36
  %v41 = vpack.c.b16 %v39, %v38
  %v48 = vunpack.c.l.b16 %v19
  %v49 = vunpack.c.l.b16 %v20
  %v50 = vunpack.c.l.b16 %v21
  %v51 = vunpack.c.l.b16 %v22
  %v52 = vunpack.c.l.b16 %v23
  %v53 = vunpack.c.l.b16 %v24
  %v54 = vpack.c.b16 %v49, %v48
  %v55 = vpack.c.b16 %v51, %v50
  %v56 = vpack.c.b16 %v53, %v52
  %vm60 = vcmask 392192
  %v62 = vsel %vm60, %v40, 0
  %v65 = vsel %vm60, %v41, 0
  %67 = vmatprep.subr.bf16.mxu0 0
  %68 = vmatpush1.bf16.msra.mxu0 %v54
  %69 = vmatprep.subr.bf16.mxu0 0
  %70 = vmatpush1.bf16.msra.mxu0 %v55
  %71 = vmatprep.subr.bf16.mxu0 0
  %72 = vmatpush1.bf16.msra.mxu0 %v56
  %73 = vmatprep.subr.bf16.mxu0 0
  %74 = vmatpush1.bf16.msra.mxu0 0
  %75 = vmatprep.subr.bf16.mxu0 0
  %76 = vmatpush1.bf16.msra.mxu0 0
  %77 = vmatprep.subr.bf16.mxu0 0
  %78 = vmatpush1.bf16.msra.mxu0 0
  %79 = vmatprep.subr.bf16.mxu0 0
  %80 = vmatpush1.bf16.msra.mxu0 0
  %81 = vmatprep.subr.bf16.mxu0 0
  %82 = vmatpush1.bf16.msra.mxu0 0
  %83 = vmatprep.subr.bf16.mxu0 0
  %84 = vmatpush1.bf16.msra.mxu0 0
  %85 = vmatprep.subr.bf16.mxu0 0
  %86 = vmatpush1.bf16.msra.mxu0 0
  %87 = vmatprep.subr.bf16.mxu0 0
  %88 = vmatpush1.bf16.msra.mxu0 0
  %89 = vmatprep.subr.bf16.mxu0 0
  %90 = vmatpush1.bf16.msra.mxu0 0
  %91 = vmatprep.subr.bf16.mxu0 0
  %92 = vmatpush1.bf16.msra.mxu0 0
  %93 = vmatprep.subr.bf16.mxu0 0
  %94 = vmatpush1.bf16.msra.mxu0 0
  %95 = vmatprep.subr.bf16.mxu0 0
  %96 = vmatpush1.bf16.msra.mxu0 0
  %97 = vmatprep.subr.bf16.mxu0 0
  %98 = vmatpush1.bf16.msra.mxu0 0
  %99 = vmatprep.mubr.bf16.mxu0 0
  %100 = vmatmul.mubr.bf16.gmra.mrb[0].mxu0 %v62
  %v101 = vpop.f32.mrb[0].mxu0
  %v102 = vadd.f32 %v30, %v101
  %v103 = vpop.f32.mrb[0].mxu0
  %v104 = vpop.f32.mrb[0].mxu0
  %v105 = vadd.f32 %v30, %v104
  %v106 = vpop.f32.mrb[0].mxu0
  %107 = vmatprep.mubr.bf16.mxu0 0
  %108 = vmatmul.mubr.bf16.gmra.mrb[0].mxu0 %v65
  %v109 = vpop.f32.mrb[0].mxu0
  %v110 = vadd.f32 %v30, %v109
  %v111 = vpop.f32.mrb[0].mxu0
  %v112 = vpop.f32.mrb[0].mxu0
  %v113 = vadd.f32 %v30, %v112
  %v114 = vpop.f32.mrb[0].mxu0
  %115 = vdwg.mxu0
  %vm116 = vcmask 261120
  %117 = vst.msk [vmem:[%s3] sm:$0xff] %vm116, %v102
  %118 = vst.msk [vmem:[%s3 + $0x8] sm:$0xff] %vm116, %v105
  %119 = vst.msk [vmem:[%s3 + $0x10] sm:$0xff] %vm116, %v110
  %120 = vst.msk [vmem:[%s3 + $0x18] sm:$0xff] %vm116, %v113
  // Predicated region
  $region14: #{_lambda_.5} parent=0 // pred_check
    _
  $region15: #{_lambda_.5} parent=0 // pred_check_branch
    %122 = sbr.rel (0) target = $region17
  $region16: #{_lambda_.5} parent=0 // pred_region
    _
  $region17: #{_lambda_.5} parent=0 // pred_fallthru
    _
  // Predicated region
  $region18: #{_lambda_.5} parent=0 // pred_check
    _
  $region19: #{_lambda_.5} parent=0 // pred_check_branch
    %124 = sbr.rel (0) target = $region21
  $region20: #{_lambda_.5} parent=0 // pred_region
    _
  $region21: #{_lambda_.5} parent=0 // pred_fallthru
    _

// kernel: _lambda_.6
$region0: #{_lambda_.6}
  #allocation0 [shape = 'u32[]', space=smem, size = 0x4, offset = 0x4, fixed_abs, tag = 'smem constant byte address 0x4 - core index']
  #allocation1 [shape = 'u32[144,128]{1,0:T(1,128)}', space=vmem, size = 0x12000, scoped, tag = 'internal scratch']
  %s0 = inlined_call_operand.hbm [shape: f32[32,32], index: 0, kind: input, shape index: {}]
  %s1 = inlined_call_operand.hbm [shape: f32[2,32], index: 1, kind: input, shape index: {}]
  %s2 = inlined_call_operand.hbm [shape: f32[1,32], index: 2, kind: input, shape index: {}]
  %s3 = inlined_call_operand.hbm [shape: f32[1,32], index: 3, kind: input, shape index: {}]
  %s4 = inlined_call_operand.hbm [shape: bf16[32,32], index: 4, kind: input, shape index: {}]
  %s5 = inlined_call_operand.hbm [shape: f32[1,32], index: 5, kind: input, shape index: {}]
  %s6 = inlined_call_operand.hbm [shape: bf16[32,64], index: 6, kind: input, shape index: {}]
  %s7 = inlined_call_operand.hbm [shape: f32[1,64], index: 7, kind: input, shape index: {}]
  %s8 = inlined_call_operand.hbm [shape: bf16[32,32], index: 8, kind: input, shape index: {}]
  %s9 = inlined_call_operand.hbm [shape: f32[1,32], index: 9, kind: input, shape index: {}]
  %s10 = inlined_call_operand.hbm [shape: f32[1,32], index: 10, kind: input, shape index: {}]
  %s11 = inlined_call_operand.hbm [shape: f32[1,32], index: 11, kind: input, shape index: {}]
  %s12 = inlined_call_operand.hbm [shape: bf16[32,64], index: 12, kind: input, shape index: {}]
  %s13 = inlined_call_operand.hbm [shape: f32[1,64], index: 13, kind: input, shape index: {}]
  %s14 = inlined_call_operand.hbm [shape: bf16[64,32], index: 14, kind: input, shape index: {}]
  %s15 = inlined_call_operand.hbm [shape: f32[1,32], index: 15, kind: input, shape index: {}]
  %s16 = inlined_call_operand.hbm [shape: f32[32,4], index: 16, kind: input, shape index: {}]
  %s17 = inlined_call_operand.hbm [shape: f32[4,32], index: 17, kind: input, shape index: {}]
  %s18 = inlined_call_operand.hbm [shape: f32[32,32], index: 18, kind: output, shape index: {0}]
  %s19 = inlined_call_operand.hbm [shape: f32[2,32], index: 19, kind: output, shape index: {1}]
  %20 = xla_tuple %s18, %s19
  %s21 = sld [smem:[#allocation0]]
  $region162: #{_lambda_.6} parent=0
    _
  %s23 = ssub.s32 1, %s21
  %s24 = scalar_select 0, %s23, %s21
  $region1: #{_lambda_.6} parent=0
    #allocation2 [shape = 'u8[16384]{0}', space=vmem, size = 0x4000, scoped, tag = 'input window, operand 0, single buffered']
    #allocation3 [shape = 's32[1]{0}', space=sflag, size = 0x4, scoped, tag = 'scoped memory for _lambda_.6']
    #allocation4 [shape = 's32[1]{0}', space=sflag, size = 0x4, scoped, tag = 'scoped memory for _lambda_.6']
    #allocation5 [shape = 'u8[1024]{0}', space=vmem, size = 0x400, scoped, tag = 'input window, operand 1, single buffered']
    #allocation6 [shape = 's32[1]{0}', space=sflag, size = 0x4, scoped, tag = 'scoped memory for _lambda_.6']
    #allocation7 [shape = 'u8[512]{0}', space=vmem, size = 0x400, scoped, tag = 'input window, operand 2, single buffered']
    #allocation8 [shape = 'u8[512]{0}', space=vmem, size = 0x400, scoped, tag = 'input window, operand 3, single buffered']
    #allocation9 [shape = 's32[1]{0}', space=sflag, size = 0x4, scoped, tag = 'scoped memory for _lambda_.6']
    #allocation10 [shape = 'u8[8192]{0}', space=vmem, size = 0x2000, scoped, tag = 'input window, operand 4, single buffered']
    #allocation11 [shape = 'u8[512]{0}', space=vmem, size = 0x400, scoped, tag = 'input window, operand 5, single buffered']
    #allocation12 [shape = 's32[1]{0}', space=sflag, size = 0x4, scoped, tag = 'scoped memory for _lambda_.6']
    #allocation13 [shape = 'u8[8192]{0}', space=vmem, size = 0x2000, scoped, tag = 'input window, operand 6, single buffered']
    #allocation14 [shape = 'u8[512]{0}', space=vmem, size = 0x400, scoped, tag = 'input window, operand 7, single buffered']
    #allocation15 [shape = 's32[1]{0}', space=sflag, size = 0x4, scoped, tag = 'scoped memory for _lambda_.6']
    #allocation16 [shape = 'u8[8192]{0}', space=vmem, size = 0x2000, scoped, tag = 'input window, operand 8, single buffered']
    #allocation17 [shape = 'u8[512]{0}', space=vmem, size = 0x400, scoped, tag = 'input window, operand 9, single buffered']
    #allocation18 [shape = 's32[1]{0}', space=sflag, size = 0x4, scoped, tag = 'scoped memory for _lambda_.6']
    #allocation19 [shape = 'u8[512]{0}', space=vmem, size = 0x400, scoped, tag = 'input window, operand 10, single buffered']
    #allocation20 [shape = 'u8[512]{0}', space=vmem, size = 0x400, scoped, tag = 'input window, operand 11, single buffered']
    #allocation21 [shape = 's32[1]{0}', space=sflag, size = 0x4, scoped, tag = 'scoped memory for _lambda_.6']
    #allocation22 [shape = 'u8[8192]{0}', space=vmem, size = 0x2000, scoped, tag = 'input window, operand 12, single buffered']
    #allocation23 [shape = 'u8[512]{0}', space=vmem, size = 0x400, scoped, tag = 'input window, operand 13, single buffered']
    #allocation24 [shape = 's32[1]{0}', space=sflag, size = 0x4, scoped, tag = 'scoped memory for _lambda_.6']
    #allocation25 [shape = 'u8[16384]{0}', space=vmem, size = 0x4000, scoped, tag = 'input window, operand 14, single buffered']
    #allocation26 [shape = 'u8[512]{0}', space=vmem, size = 0x400, scoped, tag = 'input window, operand 15, single buffered']
    #allocation27 [shape = 's32[1]{0}', space=sflag, size = 0x4, scoped, tag = 'scoped memory for _lambda_.6']
    #allocation28 [shape = 'u8[16384]{0}', space=vmem, size = 0x4000, scoped, tag = 'input window, operand 16, single buffered']
    #allocation29 [shape = 'u8[2048]{0}', space=vmem, size = 0x800, scoped, tag = 'input window, operand 17, single buffered']
    #allocation30 [shape = 's32[1]{0}', space=sflag, size = 0x4, scoped, tag = 'scoped memory for _lambda_.6']
    #allocation31 [shape = 'u8[16384]{0}', space=vmem, size = 0x4000, scoped, tag = 'output window, operand 0, single buffered']
    #allocation32 [shape = 'u8[1024]{0}', space=vmem, size = 0x400, scoped, tag = 'output window, operand 1, single buffered']
    #allocation33 [shape = 's32[1]{0}', space=sflag, size = 0x4, scoped, tag = 'scoped memory for _lambda_.6']
    %25 = vsyncpa [#allocation3], 0
    %26 = vsyncpa [#allocation6], 0
    %27 = vsyncpa [#allocation9], 0
    %28 = vsyncpa [#allocation12], 0
    %29 = vsyncpa [#allocation15], 0
    %30 = vsyncpa [#allocation18], 0
    %31 = vsyncpa [#allocation21], 0
    %32 = vsyncpa [#allocation24], 0
    %33 = vsyncpa [#allocation27], 0
    %34 = vsyncpa [#allocation30], 0
    %35 = vsyncpa [#allocation4], 0
    %36 = vsyncpa [#allocation33], 0
    // Predicated region
    $region2: #{_lambda_.6} parent=1 // pred_check
      _
    $region3: #{_lambda_.6} parent=1 // pred_check_branch
      %38 = sbr.rel (0) target = $region5
    $region4: #{_lambda_.6} parent=1 // pred_region
      %s40 = ssub.s32 512, 512
      %41 = vsyncadd [#allocation3], %s40
      %s42 = sshll.u32 [#allocation2], 4
      %s43 = int_to_ptr.vmem [resolvable:$true] %s42
      %48 = dma.hbm_to_vmem [thread:$0]  %s0, 512, %s43, [#allocation3], 128, 128, 8
    $region5: #{_lambda_.6} parent=1 // pred_fallthru
      _
    // Predicated region
    $region6: #{_lambda_.6} parent=1 // pred_check
      _
    $region7: #{_lambda_.6} parent=1 // pred_check_branch
      %50 = sbr.rel (0) target = $region9
    $region8: #{_lambda_.6} parent=1 // pred_region
      %s52 = ssub.s32 32, 32
      %53 = vsyncadd [#allocation6], %s52
      %s55 = sshll.u32 [#allocation5], 4
      %s56 = int_to_ptr.vmem [resolvable:$true] %s55
      %58 = dma.hbm_to_vmem [thread:$0]  %s1, 32, %s56, [#allocation6]
    $region9: #{_lambda_.6} parent=1 // pred_fallthru
      _
    // Predicated region
    $region10: #{_lambda_.6} parent=1 // pred_check
      _
    $region11: #{_lambda_.6} parent=1 // pred_check_branch
      %60 = sbr.rel (0) target = $region13
    $region12: #{_lambda_.6} parent=1 // pred_region
      %s62 = ssub.s32 16, 16
      %63 = vsyncadd [#allocation6], %s62
      %s65 = sshll.u32 [#allocation7], 4
      %s66 = int_to_ptr.vmem [resolvable:$true] %s65
      %68 = dma.hbm_to_vmem [thread:$0]  %s2, 16, %s66, [#allocation6]
    $region13: #{_lambda_.6} parent=1 // pred_fallthru
      _
    // Predicated region
    $region14: #{_lambda_.6} parent=1 // pred_check
      _
    $region15: #{_lambda_.6} parent=1 // pred_check_branch
      %70 = sbr.rel (0) target = $region17
    $region16: #{_lambda_.6} parent=1 // pred_region
      %s72 = ssub.s32 16, 16
      %73 = vsyncadd [#allocation9], %s72
      %s75 = sshll.u32 [#allocation8], 4
      %s76 = int_to_ptr.vmem [resolvable:$true] %s75
      %78 = dma.hbm_to_vmem [thread:$0]  %s3, 16, %s76, [#allocation9]
    $region17: #{_lambda_.6} parent=1 // pred_fallthru
      _
    // Predicated region
    $region18: #{_lambda_.6} parent=1 // pred_check
      _
    $region19: #{_lambda_.6} parent=1 // pred_check_branch
      %80 = sbr.rel (0) target = $region21
    $region20: #{_lambda_.6} parent=1 // pred_region
      %s82 = ssub.s32 256, 256
      %83 = vsyncadd [#allocation9], %s82
      %s84 = sshll.u32 [#allocation10], 4
      %s85 = int_to_ptr.vmem [resolvable:$true] %s84
      %90 = dma.hbm_to_vmem [thread:$0]  %s4, 256, %s85, [#allocation9], 64, 64, 4
    $region21: #{_lambda_.6} parent=1 // pred_fallthru
      _
    // Predicated region
    $region22: #{_lambda_.6} parent=1 // pred_check
      _
    $region23: #{_lambda_.6} parent=1 // pred_check_branch
      %92 = sbr.rel (0) target = $region25
    $region24: #{_lambda_.6} parent=1 // pred_region
      %s94 = ssub.s32 16, 16
      %95 = vsyncadd [#allocation12], %s94
      %s97 = sshll.u32 [#allocation11], 4
      %s98 = int_to_ptr.vmem [resolvable:$true] %s97
      %100 = dma.hbm_to_vmem [thread:$0]  %s5, 16, %s98, [#allocation12]
    $region25: #{_lambda_.6} parent=1 // pred_fallthru
      _
    // Predicated region
    $region26: #{_lambda_.6} parent=1 // pred_check
      _
    $region27: #{_lambda_.6} parent=1 // pred_check_branch
      %102 = sbr.rel (0) target = $region29
    $region28: #{_lambda_.6} parent=1 // pred_region
      %s104 = ssub.s32 256, 256
      %105 = vsyncadd [#allocation12], %s104
      %s106 = sshll.u32 [#allocation13], 4
      %s107 = int_to_ptr.vmem [resolvable:$true] %s106
      %112 = dma.hbm_to_vmem [thread:$0]  %s6, 256, %s107, [#allocation12], 64, 64, 4
    $region29: #{_lambda_.6} parent=1 // pred_fallthru
      _
    // Predicated region
    $region30: #{_lambda_.6} parent=1 // pred_check
      _
    $region31: #{_lambda_.6} parent=1 // pred_check_branch
      %114 = sbr.rel (0) target = $region33
    $region32: #{_lambda_.6} parent=1 // pred_region
      %s116 = ssub.s32 16, 16
      %117 = vsyncadd [#allocation15], %s116
      %s119 = sshll.u32 [#allocation14], 4
      %s120 = int_to_ptr.vmem [resolvable:$true] %s119
      %122 = dma.hbm_to_vmem [thread:$0]  %s7, 16, %s120, [#allocation15]
    $region33: #{_lambda_.6} parent=1 // pred_fallthru
      _
    // Predicated region
    $region34: #{_lambda_.6} parent=1 // pred_check
      _
    $region35: #{_lambda_.6} parent=1 // pred_check_branch
      %124 = sbr.rel (0) target = $region37
    $region36: #{_lambda_.6} parent=1 // pred_region
      %s126 = ssub.s32 256, 256
      %127 = vsyncadd [#allocation15], %s126
      %s128 = sshll.u32 [#allocation16], 4
      %s129 = int_to_ptr.vmem [resolvable:$true] %s128
      %134 = dma.hbm_to_vmem [thread:$0]  %s8, 256, %s129, [#allocation15], 64, 64, 4
    $region37: #{_lambda_.6} parent=1 // pred_fallthru
      _
    // Predicated region
    $region38: #{_lambda_.6} parent=1 // pred_check
      _
    $region39: #{_lambda_.6} parent=1 // pred_check_branch
      %136 = sbr.rel (0) target = $region41
    $region40: #{_lambda_.6} parent=1 // pred_region
      %s138 = ssub.s32 16, 16
      %139 = vsyncadd [#allocation18], %s138
      %s141 = sshll.u32 [#allocation17], 4
      %s142 = int_to_ptr.vmem [resolvable:$true] %s141
      %144 = dma.hbm_to_vmem [thread:$0]  %s9, 16, %s142, [#allocation18]
    $region41: #{_lambda_.6} parent=1 // pred_fallthru
      _
    // Predicated region
    $region42: #{_lambda_.6} parent=1 // pred_check
      _
    $region43: #{_lambda_.6} parent=1 // pred_check_branch
      %146 = sbr.rel (0) target = $region45
    $region44: #{_lambda_.6} parent=1 // pred_region
      %s148 = ssub.s32 16, 16
      %149 = vsyncadd [#allocation18], %s148
      %s151 = sshll.u32 [#allocation19], 4
      %s152 = int_to_ptr.vmem [resolvable:$true] %s151
      %154 = dma.hbm_to_vmem [thread:$0]  %s10, 16, %s152, [#allocation18]
    $region45: #{_lambda_.6} parent=1 // pred_fallthru
      _
    // Predicated region
    $region46: #{_lambda_.6} parent=1 // pred_check
      _
    $region47: #{_lambda_.6} parent=1 // pred_check_branch
      %156 = sbr.rel (0) target = $region49
    $region48: #{_lambda_.6} parent=1 // pred_region
      %s158 = ssub.s32 16, 16
      %159 = vsyncadd [#allocation21], %s158
      %s161 = sshll.u32 [#allocation20], 4
      %s162 = int_to_ptr.vmem [resolvable:$true] %s161
      %164 = dma.hbm_to_vmem [thread:$0]  %s11, 16, %s162, [#allocation21]
    $region49: #{_lambda_.6} parent=1 // pred_fallthru
      _
    // Predicated region
    $region50: #{_lambda_.6} parent=1 // pred_check
      _
    $region51: #{_lambda_.6} parent=1 // pred_check_branch
      %166 = sbr.rel (0) target = $region53
    $region52: #{_lambda_.6} parent=1 // pred_region
      %s168 = ssub.s32 256, 256
      %169 = vsyncadd [#allocation21], %s168
      %s170 = sshll.u32 [#allocation22], 4
      %s171 = int_to_ptr.vmem [resolvable:$true] %s170
      %176 = dma.hbm_to_vmem [thread:$0]  %s12, 256, %s171, [#allocation21], 64, 64, 4
    $region53: #{_lambda_.6} parent=1 // pred_fallthru
      _
    // Predicated region
    $region54: #{_lambda_.6} parent=1 // pred_check
      _
    $region55: #{_lambda_.6} parent=1 // pred_check_branch
      %178 = sbr.rel (0) target = $region57
    $region56: #{_lambda_.6} parent=1 // pred_region
      %s180 = ssub.s32 16, 16
      %181 = vsyncadd [#allocation24], %s180
      %s183 = sshll.u32 [#allocation23], 4
      %s184 = int_to_ptr.vmem [resolvable:$true] %s183
      %186 = dma.hbm_to_vmem [thread:$0]  %s13, 16, %s184, [#allocation24]
    $region57: #{_lambda_.6} parent=1 // pred_fallthru
      _
    // Predicated region
    $region58: #{_lambda_.6} parent=1 // pred_check
      _
    $region59: #{_lambda_.6} parent=1 // pred_check_branch
      %188 = sbr.rel (0) target = $region61
    $region60: #{_lambda_.6} parent=1 // pred_region
      %s190 = ssub.s32 512, 512
      %191 = vsyncadd [#allocation24], %s190
      %s192 = sshll.u32 [#allocation25], 4
      %s193 = int_to_ptr.vmem [resolvable:$true] %s192
      %198 = dma.hbm_to_vmem [thread:$0]  %s14, 512, %s193, [#allocation24], 64, 64, 4
    $region61: #{_lambda_.6} parent=1 // pred_fallthru
      _
    // Predicated region
    $region62: #{_lambda_.6} parent=1 // pred_check
      _
    $region63: #{_lambda_.6} parent=1 // pred_check_branch
      %200 = sbr.rel (0) target = $region65
    $region64: #{_lambda_.6} parent=1 // pred_region
      %s202 = ssub.s32 16, 16
      %203 = vsyncadd [#allocation27], %s202
      %s205 = sshll.u32 [#allocation26], 4
      %s206 = int_to_ptr.vmem [resolvable:$true] %s205
      %208 = dma.hbm_to_vmem [thread:$0]  %s15, 16, %s206, [#allocation27]
    $region65: #{_lambda_.6} parent=1 // pred_fallthru
      _
    // Predicated region
    $region66: #{_lambda_.6} parent=1 // pred_check
      _
    $region67: #{_lambda_.6} parent=1 // pred_check_branch
      %210 = sbr.rel (0) target = $region69
    $region68: #{_lambda_.6} parent=1 // pred_region
      %s212 = ssub.s32 512, 512
      %213 = vsyncadd [#allocation27], %s212
      %s214 = sshll.u32 [#allocation28], 4
      %s215 = int_to_ptr.vmem [resolvable:$true] %s214
      %220 = dma.hbm_to_vmem [thread:$0]  %s16, 512, %s215, [#allocation27], 128, 128, 8
    $region69: #{_lambda_.6} parent=1 // pred_fallthru
      _
    // Predicated region
    $region70: #{_lambda_.6} parent=1 // pred_check
      _
    $region71: #{_lambda_.6} parent=1 // pred_check_branch
      %222 = sbr.rel (0) target = $region73
    $region72: #{_lambda_.6} parent=1 // pred_region
      %s224 = ssub.s32 64, 64
      %225 = vsyncadd [#allocation30], %s224
      %s227 = sshll.u32 [#allocation29], 4
      %s228 = int_to_ptr.vmem [resolvable:$true] %s227
      %230 = dma.hbm_to_vmem [thread:$0]  %s17, 64, %s228, [#allocation30]
    $region73: #{_lambda_.6} parent=1 // pred_fallthru
      _
    // Predicated region
    $region74: #{_lambda_.6} parent=1 // pred_check
      _
    $region75: #{_lambda_.6} parent=1 // pred_check_branch
      %232 = sbr.rel (0) target = $region77
    $region76: #{_lambda_.6} parent=1 // pred_region
      %233 = dma.done [#allocation3], 512
    $region77: #{_lambda_.6} parent=1 // pred_fallthru
      _
    // Predicated region
    $region78: #{_lambda_.6} parent=1 // pred_check
      _
    $region79: #{_lambda_.6} parent=1 // pred_check_branch
      %235 = sbr.rel (0) target = $region81
    $region80: #{_lambda_.6} parent=1 // pred_region
      %236 = dma.done [#allocation6], 32
    $region81: #{_lambda_.6} parent=1 // pred_fallthru
      _
    // Predicated region
    $region82: #{_lambda_.6} parent=1 // pred_check
      _
    $region83: #{_lambda_.6} parent=1 // pred_check_branch
      %238 = sbr.rel (0) target = $region85
    $region84: #{_lambda_.6} parent=1 // pred_region
      %239 = dma.done [#allocation6], 16
    $region85: #{_lambda_.6} parent=1 // pred_fallthru
      _
    // Predicated region
    $region86: #{_lambda_.6} parent=1 // pred_check
      _
    $region87: #{_lambda_.6} parent=1 // pred_check_branch
      %241 = sbr.rel (0) target = $region89
    $region88: #{_lambda_.6} parent=1 // pred_region
      %242 = dma.done [#allocation9], 16
    $region89: #{_lambda_.6} parent=1 // pred_fallthru
      _
    // Predicated region
    $region90: #{_lambda_.6} parent=1 // pred_check
      _
    $region91: #{_lambda_.6} parent=1 // pred_check_branch
      %244 = sbr.rel (0) target = $region93
    $region92: #{_lambda_.6} parent=1 // pred_region
      %245 = dma.done [#allocation9], 256
    $region93: #{_lambda_.6} parent=1 // pred_fallthru
      _
    // Predicated region
    $region94: #{_lambda_.6} parent=1 // pred_check
      _
    $region95: #{_lambda_.6} parent=1 // pred_check_branch
      %247 = sbr.rel (0) target = $region97
    $region96: #{_lambda_.6} parent=1 // pred_region
      %248 = dma.done [#allocation12], 16
    $region97: #{_lambda_.6} parent=1 // pred_fallthru
      _
    // Predicated region
    $region98: #{_lambda_.6} parent=1 // pred_check
      _
    $region99: #{_lambda_.6} parent=1 // pred_check_branch
      %250 = sbr.rel (0) target = $region101
    $region100: #{_lambda_.6} parent=1 // pred_region
      %251 = dma.done [#allocation12], 256
    $region101: #{_lambda_.6} parent=1 // pred_fallthru
      _
    // Predicated region
    $region102: #{_lambda_.6} parent=1 // pred_check
      _
    $region103: #{_lambda_.6} parent=1 // pred_check_branch
      %253 = sbr.rel (0) target = $region105
    $region104: #{_lambda_.6} parent=1 // pred_region
      %254 = dma.done [#allocation15], 16
    $region105: #{_lambda_.6} parent=1 // pred_fallthru
      _
    // Predicated region
    $region106: #{_lambda_.6} parent=1 // pred_check
      _
    $region107: #{_lambda_.6} parent=1 // pred_check_branch
      %256 = sbr.rel (0) target = $region109
    $region108: #{_lambda_.6} parent=1 // pred_region
      %257 = dma.done [#allocation15], 256
    $region109: #{_lambda_.6} parent=1 // pred_fallthru
      _
    // Predicated region
    $region110: #{_lambda_.6} parent=1 // pred_check
      _
    $region111: #{_lambda_.6} parent=1 // pred_check_branch
      %259 = sbr.rel (0) target = $region113
    $region112: #{_lambda_.6} parent=1 // pred_region
      %260 = dma.done [#allocation18], 16
    $region113: #{_lambda_.6} parent=1 // pred_fallthru
      _
    // Predicated region
    $region114: #{_lambda_.6} parent=1 // pred_check
      _
    $region115: #{_lambda_.6} parent=1 // pred_check_branch
      %262 = sbr.rel (0) target = $region117
    $region116: #{_lambda_.6} parent=1 // pred_region
      %263 = dma.done [#allocation18], 16
    $region117: #{_lambda_.6} parent=1 // pred_fallthru
      _
    // Predicated region
    $region118: #{_lambda_.6} parent=1 // pred_check
      _
    $region119: #{_lambda_.6} parent=1 // pred_check_branch
      %265 = sbr.rel (0) target = $region121
    $region120: #{_lambda_.6} parent=1 // pred_region
      %266 = dma.done [#allocation21], 16
    $region121: #{_lambda_.6} parent=1 // pred_fallthru
      _
    // Predicated region
    $region122: #{_lambda_.6} parent=1 // pred_check
      _
    $region123: #{_lambda_.6} parent=1 // pred_check_branch
      %268 = sbr.rel (0) target = $region125
    $region124: #{_lambda_.6} parent=1 // pred_region
      %269 = dma.done [#allocation21], 256
    $region125: #{_lambda_.6} parent=1 // pred_fallthru
      _
    // Predicated region
    $region126: #{_lambda_.6} parent=1 // pred_check
      _
    $region127: #{_lambda_.6} parent=1 // pred_check_branch
      %271 = sbr.rel (0) target = $region129
    $region128: #{_lambda_.6} parent=1 // pred_region
      %272 = dma.done [#allocation24], 16
    $region129: #{_lambda_.6} parent=1 // pred_fallthru
      _
    // Predicated region
    $region130: #{_lambda_.6} parent=1 // pred_check
      _
    $region131: #{_lambda_.6} parent=1 // pred_check_branch
      %274 = sbr.rel (0) target = $region133
    $region132: #{_lambda_.6} parent=1 // pred_region
      %275 = dma.done [#allocation24], 512
    $region133: #{_lambda_.6} parent=1 // pred_fallthru
      _
    // Predicated region
    $region134: #{_lambda_.6} parent=1 // pred_check
      _
    $region135: #{_lambda_.6} parent=1 // pred_check_branch
      %277 = sbr.rel (0) target = $region137
    $region136: #{_lambda_.6} parent=1 // pred_region
      %278 = dma.done [#allocation27], 16
    $region137: #{_lambda_.6} parent=1 // pred_fallthru
      _
    // Predicated region
    $region138: #{_lambda_.6} parent=1 // pred_check
      _
    $region139: #{_lambda_.6} parent=1 // pred_check_branch
      %280 = sbr.rel (0) target = $region141
    $region140: #{_lambda_.6} parent=1 // pred_region
      %281 = dma.done [#allocation27], 512
    $region141: #{_lambda_.6} parent=1 // pred_fallthru
      _
    // Predicated region
    $region142: #{_lambda_.6} parent=1 // pred_check
      _
    $region143: #{_lambda_.6} parent=1 // pred_check_branch
      %283 = sbr.rel (0) target = $region145
    $region144: #{_lambda_.6} parent=1 // pred_region
      %284 = dma.done [#allocation30], 64
    $region145: #{_lambda_.6} parent=1 // pred_fallthru
      _
    %v286 = vld [vmem:[#allocation2] sm:$0xff]
    %v287 = vld [vmem:[#allocation2 + $0x8] sm:$0xff]
    %v288 = vld [vmem:[#allocation2 + $0x10] sm:$0xff]
    %v289 = vld [vmem:[#allocation2 + $0x18] sm:$0xff]
    %v290 = vld [vmem:[#allocation5] sm:$0x3]
    %v291 = vld [vmem:[#allocation7] sm:$0x1]
    %v292 = vld [vmem:[#allocation8] sm:$0x1]
    %vm293 = vcmask 261120
    %v294 = vsel %vm293, %v286, 0.0
    %295 = vadd.xlane.f32.xlu0 %v294
    %v296 = vpop.xlane.xlu0 %295
    %v297 = vsel %vm293, %v287, 0.0
    %298 = vadd.xlane.f32.xlu0 %v297
    %v299 = vpop.xlane.xlu0 %298
    %v300 = vsel %vm293, %v288, 0.0
    %301 = vadd.xlane.f32.xlu0 %v300
    %v302 = vpop.xlane.xlu0 %301
    %v303 = vsel %vm293, %v289, 0.0
    %304 = vadd.xlane.f32.xlu0 %v303
    %v305 = vpop.xlane.xlu0 %304
    %v306 = vrcp.pop 32.0
    %v307 = vmul.f32 %v296, %v306
    %v308 = vmul.f32 %v299, %v306
    %v309 = vmul.f32 %v302, %v306
    %v310 = vmul.f32 %v305, %v306
    %v311 = vsub.f32 %v286, %v307
    %v312 = vsub.f32 %v287, %v308
    %v313 = vsub.f32 %v288, %v309
    %v314 = vsub.f32 %v289, %v310
    %v315 = vmul.f32 %v311, %v311
    %v316 = vmul.f32 %v312, %v312
    %v317 = vmul.f32 %v313, %v313
    %v318 = vmul.f32 %v314, %v314
    %v319 = vsel %vm293, %v315, 0.0
    %320 = vadd.xlane.f32.xlu0 %v319
    %v321 = vpop.xlane.xlu0 %320
    %v322 = vsel %vm293, %v316, 0.0
    %323 = vadd.xlane.f32.xlu0 %v322
    %v324 = vpop.xlane.xlu0 %323
    %v325 = vsel %vm293, %v317, 0.0
    %326 = vadd.xlane.f32.xlu0 %v325
    %v327 = vpop.xlane.xlu0 %326
    %v328 = vsel %vm293, %v318, 0.0
    %329 = vadd.xlane.f32.xlu0 %v328
    %v330 = vpop.xlane.xlu0 %329
    %v331 = vmul.f32 %v321, %v306
    %v332 = vmul.f32 %v324, %v306
    %v333 = vmul.f32 %v327, %v306
    %v334 = vmul.f32 %v330, %v306
    %v335 = vadd.f32 %v331, 1e-06
    %v336 = vadd.f32 %v332, 1e-06
    %v337 = vadd.f32 %v333, 1e-06
    %v338 = vadd.f32 %v334, 1e-06
    %v339 = vrsqrt.pop %v335
    %v340 = vrsqrt.pop %v336
    %v341 = vrsqrt.pop %v337
    %v342 = vrsqrt.pop %v338
    %v343 = vmul.f32 %v311, %v339
    %v344 = vmul.f32 %v312, %v340
    %v345 = vmul.f32 %v313, %v341
    %v346 = vmul.f32 %v314, %v342
    %v348 = vlaneseq
    %v349 = vshrl.u32 %v348, 7
    %v350 = vsub.s32 0, %v349
    %v351 = vrot.slane %v291, %v350
    %v353 = vmul.f32 %v343, %v351
    %v354 = vmul.f32 %v344, %v351
    %v355 = vmul.f32 %v345, %v351
    %v356 = vmul.f32 %v346, %v351
    %v358 = vlaneseq
    %v359 = vshrl.u32 %v358, 7
    %v360 = vsub.s32 0, %v359
    %v361 = vrot.slane %v292, %v360
    %v363 = vadd.f32 %v353, %v361
    %v364 = vadd.f32 %v354, %v361
    %v365 = vadd.f32 %v355, %v361
    %v366 = vadd.f32 %v356, %v361
    %v367 = vpack.c.bf16 %v364, %v363
    %v368 = vpack.c.bf16 %v366, %v365
    %vm369 = vcmask 254976
    %v370 = vsel %vm369, %v290, 0.0
    %371 = vadd.xlane.f32.xlu0 %v370
    %v372 = vpop.xlane.xlu0 %371
    %v373 = vmul.f32 %v372, %v306
    %v374 = vsub.f32 %v290, %v373
    %v375 = vmul.f32 %v374, %v374
    %v376 = vsel %vm369, %v375, 0.0
    %377 = vadd.xlane.f32.xlu0 %v376
    %v378 = vpop.xlane.xlu0 %377
    %v379 = vmul.f32 %v378, %v306
    %v380 = vadd.f32 %v379, 1e-06
    %v381 = vrsqrt.pop %v380
    %v382 = vmul.f32 %v374, %v381
    %v383 = vmul.f32 %v382, %v351
    %v384 = vadd.f32 %v383, %v361
    %v385 = vpack.c.bf16 %v384, %v384
    %v386 = vld [vmem:[#allocation10] sm:$0xf]
    %v387 = vld [vmem:[#allocation10 + $0x4] sm:$0xf]
    %v388 = vld [vmem:[#allocation10 + $0x8] sm:$0xf]
    %v389 = vld [vmem:[#allocation10 + $0xc] sm:$0xf]
    %v390 = vld [vmem:[#allocation11] sm:$0x1]
    %v392 = vlaneseq
    %v393 = vshrl.u32 %v392, 7
    %v394 = vsub.s32 0, %v393
    %v395 = vrot.slane %v390, %v394
    %v401 = vunpack.c.l.b16 %v386
    %v402 = vunpack.c.l.b16 %v387
    %v403 = vunpack.c.l.b16 %v388
    %v404 = vunpack.c.l.b16 %v389
    %v405 = vpack.c.b16 %v402, %v401
    %v406 = vpack.c.b16 %v404, %v403
    %v410 = vsel %vm293, %v385, 0
    %412 = vmatprep.subr.bf16.mxu0 0
    %413 = vmatpush1.bf16.msra.mxu0 %v405
    %414 = vmatprep.subr.bf16.mxu0 0
    %415 = vmatpush1.bf16.msra.mxu0 %v406
    %416 = vmatprep.subr.bf16.mxu0 0
    %417 = vmatpush1.bf16.msra.mxu0 0
    %418 = vmatprep.subr.bf16.mxu0 0
    %419 = vmatpush1.bf16.msra.mxu0 0
    %420 = vmatprep.subr.bf16.mxu0 0
    %421 = vmatpush1.bf16.msra.mxu0 0
    %422 = vmatprep.subr.bf16.mxu0 0
    %423 = vmatpush1.bf16.msra.mxu0 0
    %424 = vmatprep.subr.bf16.mxu0 0
    %425 = vmatpush1.bf16.msra.mxu0 0
    %426 = vmatprep.subr.bf16.mxu0 0
    %427 = vmatpush1.bf16.msra.mxu0 0
    %428 = vmatprep.subr.bf16.mxu0 0
    %429 = vmatpush1.bf16.msra.mxu0 0
    %430 = vmatprep.subr.bf16.mxu0 0
    %431 = vmatpush1.bf16.msra.mxu0 0
    %432 = vmatprep.subr.bf16.mxu0 0
    %433 = vmatpush1.bf16.msra.mxu0 0
    %434 = vmatprep.subr.bf16.mxu0 0
    %435 = vmatpush1.bf16.msra.mxu0 0
    %436 = vmatprep.subr.bf16.mxu0 0
    %437 = vmatpush1.bf16.msra.mxu0 0
    %438 = vmatprep.subr.bf16.mxu0 0
    %439 = vmatpush1.bf16.msra.mxu0 0
    %440 = vmatprep.subr.bf16.mxu0 0
    %441 = vmatpush1.bf16.msra.mxu0 0
    %442 = vmatprep.subr.bf16.mxu0 0
    %443 = vmatpush1.bf16.msra.mxu0 0
    %444 = vmatprep.mubr.bf16.mxu0 0
    %445 = vmatmul.mubr.bf16.gmra.mrb[0].mxu0 %v410
    %v446 = vpop.f32.mrb[0].mxu0
    %v447 = vadd.f32 %v395, %v446
    %v448 = vpop.f32.mrb[0].mxu0
    %v449 = vpop.f32.mrb[0].mxu0
    %v450 = vpop.f32.mrb[0].mxu0
    %451 = vdwg.mxu0
    %v452 = vld [vmem:[#allocation13] sm:$0xf]
    %v453 = vld [vmem:[#allocation13 + $0x4] sm:$0xf]
    %v454 = vld [vmem:[#allocation13 + $0x8] sm:$0xf]
    %v455 = vld [vmem:[#allocation13 + $0xc] sm:$0xf]
    %v456 = vld [vmem:[#allocation14] sm:$0x1]
    %v458 = vlaneseq
    %v459 = vshrl.u32 %v458, 7
    %v460 = vsub.s32 0, %v459
    %v461 = vrot.slane %v456, %v460
    %v467 = vunpack.c.l.b16 %v452
    %v468 = vunpack.c.l.b16 %v453
    %v469 = vunpack.c.l.b16 %v454
    %v470 = vunpack.c.l.b16 %v455
    %v471 = vpack.c.b16 %v468, %v467
    %v472 = vpack.c.b16 %v470, %v469
    %v476 = vsel %vm293, %v367, 0
    %v479 = vsel %vm293, %v368, 0
    %481 = vmatprep.subr.bf16.mxu0 0
    %482 = vmatpush1.bf16.msra.mxu0 %v471
    %483 = vmatprep.subr.bf16.mxu0 0
    %484 = vmatpush1.bf16.msra.mxu0 %v472
    %485 = vmatprep.subr.bf16.mxu0 0
    %486 = vmatpush1.bf16.msra.mxu0 0
    %487 = vmatprep.subr.bf16.mxu0 0
    %488 = vmatpush1.bf16.msra.mxu0 0
    %489 = vmatprep.subr.bf16.mxu0 0
    %490 = vmatpush1.bf16.msra.mxu0 0
    %491 = vmatprep.subr.bf16.mxu0 0
    %492 = vmatpush1.bf16.msra.mxu0 0
    %493 = vmatprep.subr.bf16.mxu0 0
    %494 = vmatpush1.bf16.msra.mxu0 0
    %495 = vmatprep.subr.bf16.mxu0 0
    %496 = vmatpush1.bf16.msra.mxu0 0
    %497 = vmatprep.subr.bf16.mxu0 0
    %498 = vmatpush1.bf16.msra.mxu0 0
    %499 = vmatprep.subr.bf16.mxu0 0
    %500 = vmatpush1.bf16.msra.mxu0 0
    %501 = vmatprep.subr.bf16.mxu0 0
    %502 = vmatpush1.bf16.msra.mxu0 0
    %503 = vmatprep.subr.bf16.mxu0 0
    %504 = vmatpush1.bf16.msra.mxu0 0
    %505 = vmatprep.subr.bf16.mxu0 0
    %506 = vmatpush1.bf16.msra.mxu0 0
    %507 = vmatprep.subr.bf16.mxu0 0
    %508 = vmatpush1.bf16.msra.mxu0 0
    %509 = vmatprep.subr.bf16.mxu0 0
    %510 = vmatpush1.bf16.msra.mxu0 0
    %511 = vmatprep.subr.bf16.mxu0 0
    %512 = vmatpush1.bf16.msra.mxu0 0
    %513 = vmatprep.mubr.bf16.mxu0 0
    %514 = vmatmul.mubr.bf16.gmra.mrb[0].mxu0 %v476
    %v515 = vpop.f32.mrb[0].mxu0
    %v516 = vadd.f32 %v461, %v515
    %v517 = vpop.f32.mrb[0].mxu0
    %v518 = vpop.f32.mrb[0].mxu0
    %v519 = vadd.f32 %v461, %v518
    %v520 = vpop.f32.mrb[0].mxu0
    %521 = vmatprep.mubr.bf16.mxu0 0
    %522 = vmatmul.mubr.bf16.gmra.mrb[0].mxu0 %v479
    %v523 = vpop.f32.mrb[0].mxu0
    %v524 = vadd.f32 %v461, %v523
    %v525 = vpop.f32.mrb[0].mxu0
    %v526 = vpop.f32.mrb[0].mxu0
    %v527 = vadd.f32 %v461, %v526
    %v528 = vpop.f32.mrb[0].mxu0
    %529 = vdwg.mxu0
    %v530 = vld [vmem:[#allocation28] sm:$0xff]
    %v531 = vld [vmem:[#allocation28 + $0x8] sm:$0xff]
    %v532 = vld [vmem:[#allocation28 + $0x10] sm:$0xff]
    %v533 = vld [vmem:[#allocation28 + $0x18] sm:$0xff]
    %v534 = vld [vmem:[#allocation29] sm:$0xf]
    %v535 = vlaneseq
    %v536 = vshrl.u32 %v535, 7
    %v537 = vsub.s32 0, %v536
    %v538 = vrot.slane %v447, %v537
    %v539 = vmul.f32 %v538, %v516
    %v540 = vmul.f32 %v538, %v519
    %v542 = vsel %vm293, %v539, 0
    %v545 = vsel %vm293, %v540, 0
    %547 = vmatprep.subr.mxu0 0.0
    %548 = vmatpush1.msra.mxu0 %v530
    %549 = vmatprep.subr.mxu0 0.0
    %550 = vmatpush1.msra.mxu0 %v531
    %551 = vmatprep.subr.mxu0 0.0
    %552 = vmatpush1.msra.mxu0 %v532
    %553 = vmatprep.subr.mxu0 0.0
    %554 = vmatpush1.msra.mxu0 %v533
    %555 = vmatprep.subr.mxu0 0.0
    %556 = vmatpush1.msra.mxu0 0.0
    %557 = vmatprep.subr.mxu0 0.0
    %558 = vmatpush1.msra.mxu0 0.0
    %559 = vmatprep.subr.mxu0 0.0
    %560 = vmatpush1.msra.mxu0 0.0
    %561 = vmatprep.subr.mxu0 0.0
    %562 = vmatpush1.msra.mxu0 0.0
    %563 = vmatprep.subr.mxu0 0.0
    %564 = vmatpush1.msra.mxu0 0.0
    %565 = vmatprep.subr.mxu0 0.0
    %566 = vmatpush1.msra.mxu0 0.0
    %567 = vmatprep.subr.mxu0 0.0
    %568 = vmatpush1.msra.mxu0 0.0
    %569 = vmatprep.subr.mxu0 0.0
    %570 = vmatpush1.msra.mxu0 0.0
    %571 = vmatprep.subr.mxu0 0.0
    %572 = vmatpush1.msra.mxu0 0.0
    %573 = vmatprep.subr.mxu0 0.0
    %574 = vmatpush1.msra.mxu0 0.0
    %575 = vmatprep.subr.mxu0 0.0
    %576 = vmatpush1.msra.mxu0 0.0
    %577 = vmatprep.subr.mxu0 0.0
    %578 = vmatpush1.msra.mxu0 0.0
    %579 = vmatprep.subr.mxu0 0.0
    %580 = vmatpush1.msra.mxu0 0.0
    %581 = vmatprep.subr.mxu0 0.0
    %582 = vmatpush1.msra.mxu0 0.0
    %583 = vmatprep.subr.mxu0 0.0
    %584 = vmatpush1.msra.mxu0 0.0
    %585 = vmatprep.subr.mxu0 0.0
    %586 = vmatpush1.msra.mxu0 0.0
    %587 = vmatprep.subr.mxu0 0.0
    %588 = vmatpush1.msra.mxu0 0.0
    %589 = vmatprep.subr.mxu0 0.0
    %590 = vmatpush1.msra.mxu0 0.0
    %591 = vmatprep.subr.mxu0 0.0
    %592 = vmatpush1.msra.mxu0 0.0
    %593 = vmatprep.subr.mxu0 0.0
    %594 = vmatpush1.msra.mxu0 0.0
    %595 = vmatprep.subr.mxu0 0.0
    %596 = vmatpush1.msra.mxu0 0.0
    %597 = vmatprep.subr.mxu0 0.0
    %598 = vmatpush1.msra.mxu0 0.0
    %599 = vmatprep.subr.mxu0 0.0
    %600 = vmatpush1.msra.mxu0 0.0
    %601 = vmatprep.subr.mxu0 0.0
    %602 = vmatpush1.msra.mxu0 0.0
    %603 = vmatprep.subr.mxu0 0.0
    %604 = vmatpush1.msra.mxu0 0.0
    %605 = vmatprep.subr.mxu0 0.0
    %606 = vmatpush1.msra.mxu0 0.0
    %607 = vmatprep.subr.mxu0 0.0
    %608 = vmatpush1.msra.mxu0 0.0
    %609 = vmatprep.subr.mxu0 0.0
    %610 = vmatpush1.msra.mxu0 0.0
    %611 = vmatprep.mubr.f32.mxu0 0.0
    %612 = vmatmul.mubr.f32.gmra.mrb[0].mxu0 %v542
    %v613 = vpop.f32.mrb[0].mxu0
    %v614 = vadd.f32 0.0, %v613
    %v615 = vpop.f32.mrb[0].mxu0
    %616 = vmatprep.mubr.f32.mxu0 0.0
    %617 = vmatmul.mubr.f32.gmra.mrb[0].mxu0 %v545
    %v618 = vpop.f32.mrb[0].mxu0
    %v619 = vadd.f32 0.0, %v618
    %v620 = vpop.f32.mrb[0].mxu0
    %621 = vdwg.mxu0
    %v622 = vmul.f32 %v614, 0.35355338
    %v623 = vmul.f32 %v619, 0.35355338
    %vm624 = vcmask 31744
    %v625 = vsel %vm624, %v622, -inf
    %v626 = vsel %vm624, %v623, -inf
    %v627 = vmax.f32 %v625, %v626
    %v628 = vrot.slane %v627, 4
    %v629 = vmax.f32 %v627, %v628
    %v630 = vrot.slane %v629, 2
    %v631 = vmax.f32 %v629, %v630
    %v632 = vrot.slane %v631, 1
    %v633 = vmax.f32 %v631, %v632
    %v634 = vsub.f32 %v622, %v633
    %v635 = vsub.f32 %v623, %v633
    %v636 = vmul.f32 %v634, 1.442695
    %v637 = vpow.pop %v636
    %v638 = vmul.f32 %v635, 1.442695
    %v639 = vpow.pop %v638
    %v640 = vsel %vm624, %v637, 0.0
    %v641 = vsel %vm624, %v639, 0.0
    %v642 = vadd.f32 %v640, %v641
    %v643 = vrot.slane %v642, 4
    %v644 = vadd.f32 %v642, %v643
    %v645 = vrot.slane %v644, 2
    %v646 = vadd.f32 %v644, %v645
    %v647 = vrot.slane %v646, 1
    %v648 = vadd.f32 %v646, %v647
    %v649 = vrcp.pop %v648
    %v650 = vmul.f32 %v637, %v649
    %v651 = vmul.f32 %v639, %v649
    %v653 = vsel %vm624, %v650, 0
    %v656 = vsel %vm624, %v651, 0
    %vm658 = vcmask 1043456
    %v660 = vsel %vm658, %v534, 0
    %662 = vmatprep.subr.mxu0 0.0
    %663 = vmatpush1.msra.mxu0 %v660
    %664 = vmatprep.subr.mxu0 0.0
    %665 = vmatpush1.msra.mxu0 0.0
    %666 = vmatprep.subr.mxu0 0.0
    %667 = vmatpush1.msra.mxu0 0.0
    %668 = vmatprep.subr.mxu0 0.0
    %669 = vmatpush1.msra.mxu0 0.0
    %670 = vmatprep.subr.mxu0 0.0
    %671 = vmatpush1.msra.mxu0 0.0
    %672 = vmatprep.subr.mxu0 0.0
    %673 = vmatpush1.msra.mxu0 0.0
    %674 = vmatprep.subr.mxu0 0.0
    %675 = vmatpush1.msra.mxu0 0.0
    %676 = vmatprep.subr.mxu0 0.0
    %677 = vmatpush1.msra.mxu0 0.0
    %678 = vmatprep.subr.mxu0 0.0
    %679 = vmatpush1.msra.mxu0 0.0
    %680 = vmatprep.subr.mxu0 0.0
    %681 = vmatpush1.msra.mxu0 0.0
    %682 = vmatprep.subr.mxu0 0.0
    %683 = vmatpush1.msra.mxu0 0.0
    %684 = vmatprep.subr.mxu0 0.0
    %685 = vmatpush1.msra.mxu0 0.0
    %686 = vmatprep.subr.mxu0 0.0
    %687 = vmatpush1.msra.mxu0 0.0
    %688 = vmatprep.subr.mxu0 0.0
    %689 = vmatpush1.msra.mxu0 0.0
    %690 = vmatprep.subr.mxu0 0.0
    %691 = vmatpush1.msra.mxu0 0.0
    %692 = vmatprep.subr.mxu0 0.0
    %693 = vmatpush1.msra.mxu0 0.0
    %694 = vmatprep.subr.mxu0 0.0
    %695 = vmatpush1.msra.mxu0 0.0
    %696 = vmatprep.subr.mxu0 0.0
    %697 = vmatpush1.msra.mxu0 0.0
    %698 = vmatprep.subr.mxu0 0.0
    %699 = vmatpush1.msra.mxu0 0.0
    %700 = vmatprep.subr.mxu0 0.0
    %701 = vmatpush1.msra.mxu0 0.0
    %702 = vmatprep.subr.mxu0 0.0
    %703 = vmatpush1.msra.mxu0 0.0
    %704 = vmatprep.subr.mxu0 0.0
    %705 = vmatpush1.msra.mxu0 0.0
    %706 = vmatprep.subr.mxu0 0.0
    %707 = vmatpush1.msra.mxu0 0.0
    %708 = vmatprep.subr.mxu0 0.0
    %709 = vmatpush1.msra.mxu0 0.0
    %710 = vmatprep.subr.mxu0 0.0
    %711 = vmatpush1.msra.mxu0 0.0
    %712 = vmatprep.subr.mxu0 0.0
    %713 = vmatpush1.msra.mxu0 0.0
    %714 = vmatprep.subr.mxu0 0.0
    %715 = vmatpush1.msra.mxu0 0.0
    %716 = vmatprep.subr.mxu0 0.0
    %717 = vmatpush1.msra.mxu0 0.0
    %718 = vmatprep.subr.mxu0 0.0
    %719 = vmatpush1.msra.mxu0 0.0
    %720 = vmatprep.subr.mxu0 0.0
    %721 = vmatpush1.msra.mxu0 0.0
    %722 = vmatprep.subr.mxu0 0.0
    %723 = vmatpush1.msra.mxu0 0.0
    %724 = vmatprep.subr.mxu0 0.0
    %725 = vmatpush1.msra.mxu0 0.0
    %726 = vmatprep.mubr.f32.mxu0 0.0
    %727 = vmatmul.mubr.f32.gmra.mrb[0].mxu0 %v653
    %v728 = vpop.f32.mrb[0].mxu0
    %v729 = vadd.f32 0.0, %v728
    %v730 = vpop.f32.mrb[0].mxu0
    %731 = vmatprep.mubr.f32.mxu0 0.0
    %732 = vmatmul.mubr.f32.gmra.mrb[0].mxu0 %v656
    %v733 = vpop.f32.mrb[0].mxu0
    %v734 = vadd.f32 0.0, %v733
    %v735 = vpop.f32.mrb[0].mxu0
    %736 = vdwg.mxu0
    %739 = vrot.lane.b32.xlu0 %v516, 96
    %v740 = vpop.permute.xlu0 %739
    %741 = vrot.lane.b32.xlu0 %v519, 96
    %v742 = vpop.permute.xlu0 %741
    %v745 = vmul.f32 %v729, %v740
    %v746 = vmul.f32 %v734, %v742
    %v747 = vsel %vm293, %v745, 0.0
    %v748 = vsel %vm293, %v746, 0.0
    %v749 = vadd.f32 %v747, %v748
    %v750 = vrot.slane %v749, 4
    %v751 = vadd.f32 %v749, %v750
    %v752 = vrot.slane %v751, 2
    %v753 = vadd.f32 %v751, %v752
    %v754 = vrot.slane %v753, 1
    %v755 = vadd.f32 %v753, %v754
    %v756 = vlaneseq
    %v757 = vshrl.u32 %v756, 7
    %v758 = vsub.s32 1, %v757
    %v759 = vrot.slane %v447, %v758
    %v760 = vmul.f32 %v759, %v524
    %v761 = vmul.f32 %v759, %v527
    %v763 = vsel %vm293, %v760, 0
    %v766 = vsel %vm293, %v761, 0
    %768 = vmatprep.subr.mxu0 0.0
    %769 = vmatpush1.msra.mxu0 %v530
    %770 = vmatprep.subr.mxu0 0.0
    %771 = vmatpush1.msra.mxu0 %v531
    %772 = vmatprep.subr.mxu0 0.0
    %773 = vmatpush1.msra.mxu0 %v532
    %774 = vmatprep.subr.mxu0 0.0
    %775 = vmatpush1.msra.mxu0 %v533
    %776 = vmatprep.subr.mxu0 0.0
    %777 = vmatpush1.msra.mxu0 0.0
    %778 = vmatprep.subr.mxu0 0.0
    %779 = vmatpush1.msra.mxu0 0.0
    %780 = vmatprep.subr.mxu0 0.0
    %781 = vmatpush1.msra.mxu0 0.0
    %782 = vmatprep.subr.mxu0 0.0
    %783 = vmatpush1.msra.mxu0 0.0
    %784 = vmatprep.subr.mxu0 0.0
    %785 = vmatpush1.msra.mxu0 0.0
    %786 = vmatprep.subr.mxu0 0.0
    %787 = vmatpush1.msra.mxu0 0.0
    %788 = vmatprep.subr.mxu0 0.0
    %789 = vmatpush1.msra.mxu0 0.0
    %790 = vmatprep.subr.mxu0 0.0
    %791 = vmatpush1.msra.mxu0 0.0
    %792 = vmatprep.subr.mxu0 0.0
    %793 = vmatpush1.msra.mxu0 0.0
    %794 = vmatprep.subr.mxu0 0.0
    %795 = vmatpush1.msra.mxu0 0.0
    %796 = vmatprep.subr.mxu0 0.0
    %797 = vmatpush1.msra.mxu0 0.0
    %798 = vmatprep.subr.mxu0 0.0
    %799 = vmatpush1.msra.mxu0 0.0
    %800 = vmatprep.subr.mxu0 0.0
    %801 = vmatpush1.msra.mxu0 0.0
    %802 = vmatprep.subr.mxu0 0.0
    %803 = vmatpush1.msra.mxu0 0.0
    %804 = vmatprep.subr.mxu0 0.0
    %805 = vmatpush1.msra.mxu0 0.0
    %806 = vmatprep.subr.mxu0 0.0
    %807 = vmatpush1.msra.mxu0 0.0
    %808 = vmatprep.subr.mxu0 0.0
    %809 = vmatpush1.msra.mxu0 0.0
    %810 = vmatprep.subr.mxu0 0.0
    %811 = vmatpush1.msra.mxu0 0.0
    %812 = vmatprep.subr.mxu0 0.0
    %813 = vmatpush1.msra.mxu0 0.0
    %814 = vmatprep.subr.mxu0 0.0
    %815 = vmatpush1.msra.mxu0 0.0
    %816 = vmatprep.subr.mxu0 0.0
    %817 = vmatpush1.msra.mxu0 0.0
    %818 = vmatprep.subr.mxu0 0.0
    %819 = vmatpush1.msra.mxu0 0.0
    %820 = vmatprep.subr.mxu0 0.0
    %821 = vmatpush1.msra.mxu0 0.0
    %822 = vmatprep.subr.mxu0 0.0
    %823 = vmatpush1.msra.mxu0 0.0
    %824 = vmatprep.subr.mxu0 0.0
    %825 = vmatpush1.msra.mxu0 0.0
    %826 = vmatprep.subr.mxu0 0.0
    %827 = vmatpush1.msra.mxu0 0.0
    %828 = vmatprep.subr.mxu0 0.0
    %829 = vmatpush1.msra.mxu0 0.0
    %830 = vmatprep.subr.mxu0 0.0
    %831 = vmatpush1.msra.mxu0 0.0
    %832 = vmatprep.mubr.f32.mxu0 0.0
    %833 = vmatmul.mubr.f32.gmra.mrb[0].mxu0 %v763
    %v834 = vpop.f32.mrb[0].mxu0
    %v835 = vadd.f32 0.0, %v834
    %v836 = vpop.f32.mrb[0].mxu0
    %837 = vmatprep.mubr.f32.mxu0 0.0
    %838 = vmatmul.mubr.f32.gmra.mrb[0].mxu0 %v766
    %v839 = vpop.f32.mrb[0].mxu0
    %v840 = vadd.f32 0.0, %v839
    %v841 = vpop.f32.mrb[0].mxu0
    %842 = vdwg.mxu0
    %v843 = vmul.f32 %v835, 0.35355338
    %v844 = vmul.f32 %v840, 0.35355338
    %v845 = vsel %vm624, %v843, -inf
    %v846 = vsel %vm624, %v844, -inf
    %v847 = vmax.f32 %v845, %v846
    %v848 = vrot.slane %v847, 4
    %v849 = vmax.f32 %v847, %v848
    %v850 = vrot.slane %v849, 2
    %v851 = vmax.f32 %v849, %v850
    %v852 = vrot.slane %v851, 1
    %v853 = vmax.f32 %v851, %v852
    %v854 = vsub.f32 %v843, %v853
    %v855 = vsub.f32 %v844, %v853
    %v856 = vmul.f32 %v854, 1.442695
    %v857 = vpow.pop %v856
    %v858 = vmul.f32 %v855, 1.442695
    %v859 = vpow.pop %v858
    %v860 = vsel %vm624, %v857, 0.0
    %v861 = vsel %vm624, %v859, 0.0
    %v862 = vadd.f32 %v860, %v861
    %v863 = vrot.slane %v862, 4
    %v864 = vadd.f32 %v862, %v863
    %v865 = vrot.slane %v864, 2
    %v866 = vadd.f32 %v864, %v865
    %v867 = vrot.slane %v866, 1
    %v868 = vadd.f32 %v866, %v867
    %v869 = vrcp.pop %v868
    %v870 = vmul.f32 %v857, %v869
    %v871 = vmul.f32 %v859, %v869
    %v873 = vsel %vm624, %v870, 0
    %v876 = vsel %vm624, %v871, 0
    %878 = vmatprep.subr.mxu0 0.0
    %879 = vmatpush1.msra.mxu0 %v660
    %880 = vmatprep.subr.mxu0 0.0
    %881 = vmatpush1.msra.mxu0 0.0
    %882 = vmatprep.subr.mxu0 0.0
    %883 = vmatpush1.msra.mxu0 0.0
    %884 = vmatprep.subr.mxu0 0.0
    %885 = vmatpush1.msra.mxu0 0.0
    %886 = vmatprep.subr.mxu0 0.0
    %887 = vmatpush1.msra.mxu0 0.0
    %888 = vmatprep.subr.mxu0 0.0
    %889 = vmatpush1.msra.mxu0 0.0
    %890 = vmatprep.subr.mxu0 0.0
    %891 = vmatpush1.msra.mxu0 0.0
    %892 = vmatprep.subr.mxu0 0.0
    %893 = vmatpush1.msra.mxu0 0.0
    %894 = vmatprep.subr.mxu0 0.0
    %895 = vmatpush1.msra.mxu0 0.0
    %896 = vmatprep.subr.mxu0 0.0
    %897 = vmatpush1.msra.mxu0 0.0
    %898 = vmatprep.subr.mxu0 0.0
    %899 = vmatpush1.msra.mxu0 0.0
    %900 = vmatprep.subr.mxu0 0.0
    %901 = vmatpush1.msra.mxu0 0.0
    %902 = vmatprep.subr.mxu0 0.0
    %903 = vmatpush1.msra.mxu0 0.0
    %904 = vmatprep.subr.mxu0 0.0
    %905 = vmatpush1.msra.mxu0 0.0
    %906 = vmatprep.subr.mxu0 0.0
    %907 = vmatpush1.msra.mxu0 0.0
    %908 = vmatprep.subr.mxu0 0.0
    %909 = vmatpush1.msra.mxu0 0.0
    %910 = vmatprep.subr.mxu0 0.0
    %911 = vmatpush1.msra.mxu0 0.0
    %912 = vmatprep.subr.mxu0 0.0
    %913 = vmatpush1.msra.mxu0 0.0
    %914 = vmatprep.subr.mxu0 0.0
    %915 = vmatpush1.msra.mxu0 0.0
    %916 = vmatprep.subr.mxu0 0.0
    %917 = vmatpush1.msra.mxu0 0.0
    %918 = vmatprep.subr.mxu0 0.0
    %919 = vmatpush1.msra.mxu0 0.0
    %920 = vmatprep.subr.mxu0 0.0
    %921 = vmatpush1.msra.mxu0 0.0
    %922 = vmatprep.subr.mxu0 0.0
    %923 = vmatpush1.msra.mxu0 0.0
    %924 = vmatprep.subr.mxu0 0.0
    %925 = vmatpush1.msra.mxu0 0.0
    %926 = vmatprep.subr.mxu0 0.0
    %927 = vmatpush1.msra.mxu0 0.0
    %928 = vmatprep.subr.mxu0 0.0
    %929 = vmatpush1.msra.mxu0 0.0
    %930 = vmatprep.subr.mxu0 0.0
    %931 = vmatpush1.msra.mxu0 0.0
    %932 = vmatprep.subr.mxu0 0.0
    %933 = vmatpush1.msra.mxu0 0.0
    %934 = vmatprep.subr.mxu0 0.0
    %935 = vmatpush1.msra.mxu0 0.0
    %936 = vmatprep.subr.mxu0 0.0
    %937 = vmatpush1.msra.mxu0 0.0
    %938 = vmatprep.subr.mxu0 0.0
    %939 = vmatpush1.msra.mxu0 0.0
    %940 = vmatprep.subr.mxu0 0.0
    %941 = vmatpush1.msra.mxu0 0.0
    %942 = vmatprep.mubr.f32.mxu0 0.0
    %943 = vmatmul.mubr.f32.gmra.mrb[0].mxu0 %v873
    %v944 = vpop.f32.mrb[0].mxu0
    %v945 = vadd.f32 0.0, %v944
    %v946 = vpop.f32.mrb[0].mxu0
    %947 = vmatprep.mubr.f32.mxu0 0.0
    %948 = vmatmul.mubr.f32.gmra.mrb[0].mxu0 %v876
    %v949 = vpop.f32.mrb[0].mxu0
    %v950 = vadd.f32 0.0, %v949
    %v951 = vpop.f32.mrb[0].mxu0
    %952 = vdwg.mxu0
    %955 = vrot.lane.b32.xlu0 %v524, 96
    %v956 = vpop.permute.xlu0 %955
    %957 = vrot.lane.b32.xlu0 %v527, 96
    %v958 = vpop.permute.xlu0 %957
    %v961 = vmul.f32 %v945, %v956
    %v962 = vmul.f32 %v950, %v958
    %v963 = vsel %vm293, %v961, 0.0
    %v964 = vsel %vm293, %v962, 0.0
    %v965 = vadd.f32 %v963, %v964
    %v966 = vrot.slane %v965, 4
    %v967 = vadd.f32 %v965, %v966
    %v968 = vrot.slane %v967, 2
    %v969 = vadd.f32 %v967, %v968
    %v970 = vrot.slane %v969, 1
    %v971 = vadd.f32 %v969, %v970
    %vm972 = vcmask 1040384
    %v973 = vsel %vm972, %v755, %v971
    %v974 = vpack.c.bf16 %v973, %v973
    %v975 = vld [vmem:[#allocation16] sm:$0xf]
    %v976 = vld [vmem:[#allocation16 + $0x4] sm:$0xf]
    %v977 = vld [vmem:[#allocation16 + $0x8] sm:$0xf]
    %v978 = vld [vmem:[#allocation16 + $0xc] sm:$0xf]
    %v979 = vld [vmem:[#allocation17] sm:$0x1]
    %v981 = vlaneseq
    %v982 = vshrl.u32 %v981, 7
    %v983 = vsub.s32 0, %v982
    %v984 = vrot.slane %v979, %v983
    %v990 = vunpack.c.l.b16 %v975
    %v991 = vunpack.c.l.b16 %v976
    %v992 = vunpack.c.l.b16 %v977
    %v993 = vunpack.c.l.b16 %v978
    %v994 = vpack.c.b16 %v991, %v990
    %v995 = vpack.c.b16 %v993, %v992
    %v999 = vsel %vm293, %v974, 0
    %1001 = vmatprep.subr.bf16.mxu0 0
    %1002 = vmatpush1.bf16.msra.mxu0 %v994
    %1003 = vmatprep.subr.bf16.mxu0 0
    %1004 = vmatpush1.bf16.msra.mxu0 %v995
    %1005 = vmatprep.subr.bf16.mxu0 0
    %1006 = vmatpush1.bf16.msra.mxu0 0
    %1007 = vmatprep.subr.bf16.mxu0 0
    %1008 = vmatpush1.bf16.msra.mxu0 0
    %1009 = vmatprep.subr.bf16.mxu0 0
    %1010 = vmatpush1.bf16.msra.mxu0 0
    %1011 = vmatprep.subr.bf16.mxu0 0
    %1012 = vmatpush1.bf16.msra.mxu0 0
    %1013 = vmatprep.subr.bf16.mxu0 0
    %1014 = vmatpush1.bf16.msra.mxu0 0
    %1015 = vmatprep.subr.bf16.mxu0 0
    %1016 = vmatpush1.bf16.msra.mxu0 0
    %1017 = vmatprep.subr.bf16.mxu0 0
    %1018 = vmatpush1.bf16.msra.mxu0 0
    %1019 = vmatprep.subr.bf16.mxu0 0
    %1020 = vmatpush1.bf16.msra.mxu0 0
    %1021 = vmatprep.subr.bf16.mxu0 0
    %1022 = vmatpush1.bf16.msra.mxu0 0
    %1023 = vmatprep.subr.bf16.mxu0 0
    %1024 = vmatpush1.bf16.msra.mxu0 0
    %1025 = vmatprep.subr.bf16.mxu0 0
    %1026 = vmatpush1.bf16.msra.mxu0 0
    %1027 = vmatprep.subr.bf16.mxu0 0
    %1028 = vmatpush1.bf16.msra.mxu0 0
    %1029 = vmatprep.subr.bf16.mxu0 0
    %1030 = vmatpush1.bf16.msra.mxu0 0
    %1031 = vmatprep.subr.bf16.mxu0 0
    %1032 = vmatpush1.bf16.msra.mxu0 0
    %1033 = vmatprep.mubr.bf16.mxu0 0
    %1034 = vmatmul.mubr.bf16.gmra.mrb[0].mxu0 %v999
    %v1035 = vpop.f32.mrb[0].mxu0
    %v1036 = vadd.f32 %v984, %v1035
    %v1037 = vpop.f32.mrb[0].mxu0
    %v1038 = vpop.f32.mrb[0].mxu0
    %v1039 = vpop.f32.mrb[0].mxu0
    %1040 = vdwg.mxu0
    %v1041 = vadd.f32 %v290, %v1036
    %1042 = vst.msk [vmem:[#allocation32] sm:$0x3] %vm369, %v1041
    %v1043 = vld [vmem:[#allocation19] sm:$0x1]
    %v1044 = vld [vmem:[#allocation20] sm:$0x1]
    %v1046 = vlaneseq
    %v1047 = vshrl.u32 %v1046, 7
    %v1048 = vsub.s32 0, %v1047
    %v1049 = vrot.slane %v1043, %v1048
    %v1051 = vmul.f32 %v343, %v1049
    %v1052 = vmul.f32 %v344, %v1049
    %v1053 = vmul.f32 %v345, %v1049
    %v1054 = vmul.f32 %v346, %v1049
    %v1056 = vlaneseq
    %v1057 = vshrl.u32 %v1056, 7
    %v1058 = vsub.s32 0, %v1057
    %v1059 = vrot.slane %v1044, %v1058
    %v1061 = vadd.f32 %v1051, %v1059
    %v1062 = vadd.f32 %v1052, %v1059
    %v1063 = vadd.f32 %v1053, %v1059
    %v1064 = vadd.f32 %v1054, %v1059
    %v1065 = vpack.c.bf16 %v1062, %v1061
    %v1066 = vpack.c.bf16 %v1064, %v1063
    %v1067 = vld [vmem:[#allocation22] sm:$0xf]
    %v1068 = vld [vmem:[#allocation22 + $0x4] sm:$0xf]
    %v1069 = vld [vmem:[#allocation22 + $0x8] sm:$0xf]
    %v1070 = vld [vmem:[#allocation22 + $0xc] sm:$0xf]
    %v1071 = vld [vmem:[#allocation23] sm:$0x1]
    %v1073 = vlaneseq
    %v1074 = vshrl.u32 %v1073, 7
    %v1075 = vsub.s32 0, %v1074
    %v1076 = vrot.slane %v1071, %v1075
    %v1082 = vunpack.c.l.b16 %v1067
    %v1083 = vunpack.c.l.b16 %v1068
    %v1084 = vunpack.c.l.b16 %v1069
    %v1085 = vunpack.c.l.b16 %v1070
    %v1086 = vpack.c.b16 %v1083, %v1082
    %v1087 = vpack.c.b16 %v1085, %v1084
    %v1091 = vsel %vm293, %v1065, 0
    %v1094 = vsel %vm293, %v1066, 0
    %1096 = vmatprep.subr.bf16.mxu0 0
    %1097 = vmatpush1.bf16.msra.mxu0 %v1086
    %1098 = vmatprep.subr.bf16.mxu0 0
    %1099 = vmatpush1.bf16.msra.mxu0 %v1087
    %1100 = vmatprep.subr.bf16.mxu0 0
    %1101 = vmatpush1.bf16.msra.mxu0 0
    %1102 = vmatprep.subr.bf16.mxu0 0
    %1103 = vmatpush1.bf16.msra.mxu0 0
    %1104 = vmatprep.subr.bf16.mxu0 0
    %1105 = vmatpush1.bf16.msra.mxu0 0
    %1106 = vmatprep.subr.bf16.mxu0 0
    %1107 = vmatpush1.bf16.msra.mxu0 0
    %1108 = vmatprep.subr.bf16.mxu0 0
    %1109 = vmatpush1.bf16.msra.mxu0 0
    %1110 = vmatprep.subr.bf16.mxu0 0
    %1111 = vmatpush1.bf16.msra.mxu0 0
    %1112 = vmatprep.subr.bf16.mxu0 0
    %1113 = vmatpush1.bf16.msra.mxu0 0
    %1114 = vmatprep.subr.bf16.mxu0 0
    %1115 = vmatpush1.bf16.msra.mxu0 0
    %1116 = vmatprep.subr.bf16.mxu0 0
    %1117 = vmatpush1.bf16.msra.mxu0 0
    %1118 = vmatprep.subr.bf16.mxu0 0
    %1119 = vmatpush1.bf16.msra.mxu0 0
    %1120 = vmatprep.subr.bf16.mxu0 0
    %1121 = vmatpush1.bf16.msra.mxu0 0
    %1122 = vmatprep.subr.bf16.mxu0 0
    %1123 = vmatpush1.bf16.msra.mxu0 0
    %1124 = vmatprep.subr.bf16.mxu0 0
    %1125 = vmatpush1.bf16.msra.mxu0 0
    %1126 = vmatprep.subr.bf16.mxu0 0
    %1127 = vmatpush1.bf16.msra.mxu0 0
    %1128 = vmatprep.mubr.bf16.mxu0 0
    %1129 = vmatmul.mubr.bf16.gmra.mrb[0].mxu0 %v1091
    %v1130 = vpop.f32.mrb[0].mxu0
    %v1131 = vadd.f32 %v1076, %v1130
    %v1132 = vpop.f32.mrb[0].mxu0
    %v1133 = vpop.f32.mrb[0].mxu0
    %v1134 = vadd.f32 %v1076, %v1133
    %v1135 = vpop.f32.mrb[0].mxu0
    %1136 = vmatprep.mubr.bf16.mxu0 0
    %1137 = vmatmul.mubr.bf16.gmra.mrb[0].mxu0 %v1094
    %v1138 = vpop.f32.mrb[0].mxu0
    %v1139 = vadd.f32 %v1076, %v1138
    %v1140 = vpop.f32.mrb[0].mxu0
    %v1141 = vpop.f32.mrb[0].mxu0
    %v1142 = vadd.f32 %v1076, %v1141
    %v1143 = vpop.f32.mrb[0].mxu0
    %1144 = vdwg.mxu0
    %v1145 = vmul.f32 %v1131, 0.5
    %v1146 = vmul.f32 %v1134, 0.5
    %v1147 = vmul.f32 %v1139, 0.5
    %v1148 = vmul.f32 %v1142, 0.5
    %v1149 = vmul.f32 %v1131, 0.044715
    %v1150 = vmul.f32 %v1134, 0.044715
    %v1151 = vmul.f32 %v1139, 0.044715
    %v1152 = vmul.f32 %v1142, 0.044715
    %v1153 = vmul.f32 %v1149, %v1131
    %v1154 = vmul.f32 %v1150, %v1134
    %v1155 = vmul.f32 %v1151, %v1139
    %v1156 = vmul.f32 %v1152, %v1142
    %v1157 = vmul.f32 %v1153, %v1131
    %v1158 = vmul.f32 %v1154, %v1134
    %v1159 = vmul.f32 %v1155, %v1139
    %v1160 = vmul.f32 %v1156, %v1142
    %v1161 = vadd.f32 %v1131, %v1157
    %v1162 = vadd.f32 %v1134, %v1158
    %v1163 = vadd.f32 %v1139, %v1159
    %v1164 = vadd.f32 %v1142, %v1160
    %v1165 = vmul.f32 %v1161, 0.7978846
    %v1166 = vmul.f32 %v1162, 0.7978846
    %v1167 = vmul.f32 %v1163, 0.7978846
    %v1168 = vmul.f32 %v1164, 0.7978846
    %v1169 = vtanh.pop %v1165
    %v1170 = vtanh.pop %v1166
    %v1171 = vtanh.pop %v1167
    %v1172 = vtanh.pop %v1168
    %v1173 = vadd.f32 %v1169, 1.0
    %v1174 = vadd.f32 %v1170, 1.0
    %v1175 = vadd.f32 %v1171, 1.0
    %v1176 = vadd.f32 %v1172, 1.0
    %v1177 = vmul.f32 %v1145, %v1173
    %v1178 = vmul.f32 %v1146, %v1174
    %v1179 = vmul.f32 %v1147, %v1175
    %v1180 = vmul.f32 %v1148, %v1176
    %v1181 = vpack.c.bf16 %v1178, %v1177
    %v1182 = vpack.c.bf16 %v1180, %v1179
    %v1183 = vld [vmem:[#allocation25] sm:$0xf]
    %v1184 = vld [vmem:[#allocation25 + $0x4] sm:$0xf]
    %v1185 = vld [vmem:[#allocation25 + $0x8] sm:$0xf]
    %v1186 = vld [vmem:[#allocation25 + $0xc] sm:$0xf]
    %v1187 = vld [vmem:[#allocation25 + $0x10] sm:$0xf]
    %v1188 = vld [vmem:[#allocation25 + $0x14] sm:$0xf]
    %v1189 = vld [vmem:[#allocation25 + $0x18] sm:$0xf]
    %v1190 = vld [vmem:[#allocation25 + $0x1c] sm:$0xf]
    %v1191 = vld [vmem:[#allocation26] sm:$0x1]
    %v1193 = vlaneseq
    %v1194 = vshrl.u32 %v1193, 7
    %v1195 = vsub.s32 0, %v1194
    %v1196 = vrot.slane %v1191, %v1195
    %v1206 = vunpack.c.l.b16 %v1183
    %v1207 = vunpack.c.l.b16 %v1184
    %v1208 = vunpack.c.l.b16 %v1185
    %v1209 = vunpack.c.l.b16 %v1186
    %v1210 = vunpack.c.l.b16 %v1187
    %v1211 = vunpack.c.l.b16 %v1188
    %v1212 = vunpack.c.l.b16 %v1189
    %v1213 = vunpack.c.l.b16 %v1190
    %v1214 = vpack.c.b16 %v1207, %v1206
    %v1215 = vpack.c.b16 %v1209, %v1208
    %v1216 = vpack.c.b16 %v1211, %v1210
    %v1217 = vpack.c.b16 %v1213, %v1212
    %vm1222 = vcmask 523264
    %v1224 = vsel %vm1222, %v1181, 0
    %v1227 = vsel %vm1222, %v1182, 0
    %1229 = vmatprep.subr.bf16.mxu0 0
    %1230 = vmatpush1.bf16.msra.mxu0 %v1214
    %1231 = vmatprep.subr.bf16.mxu0 0
    %1232 = vmatpush1.bf16.msra.mxu0 %v1215
    %1233 = vmatprep.subr.bf16.mxu0 0
    %1234 = vmatpush1.bf16.msra.mxu0 %v1216
    %1235 = vmatprep.subr.bf16.mxu0 0
    %1236 = vmatpush1.bf16.msra.mxu0 %v1217
    %1237 = vmatprep.subr.bf16.mxu0 0
    %1238 = vmatpush1.bf16.msra.mxu0 0
    %1239 = vmatprep.subr.bf16.mxu0 0
    %1240 = vmatpush1.bf16.msra.mxu0 0
    %1241 = vmatprep.subr.bf16.mxu0 0
    %1242 = vmatpush1.bf16.msra.mxu0 0
    %1243 = vmatprep.subr.bf16.mxu0 0
    %1244 = vmatpush1.bf16.msra.mxu0 0
    %1245 = vmatprep.subr.bf16.mxu0 0
    %1246 = vmatpush1.bf16.msra.mxu0 0
    %1247 = vmatprep.subr.bf16.mxu0 0
    %1248 = vmatpush1.bf16.msra.mxu0 0
    %1249 = vmatprep.subr.bf16.mxu0 0
    %1250 = vmatpush1.bf16.msra.mxu0 0
    %1251 = vmatprep.subr.bf16.mxu0 0
    %1252 = vmatpush1.bf16.msra.mxu0 0
    %1253 = vmatprep.subr.bf16.mxu0 0
    %1254 = vmatpush1.bf16.msra.mxu0 0
    %1255 = vmatprep.subr.bf16.mxu0 0
    %1256 = vmatpush1.bf16.msra.mxu0 0
    %1257 = vmatprep.subr.bf16.mxu0 0
    %1258 = vmatpush1.bf16.msra.mxu0 0
    %1259 = vmatprep.subr.bf16.mxu0 0
    %1260 = vmatpush1.bf16.msra.mxu0 0
    %1261 = vmatprep.mubr.bf16.mxu0 0
    %1262 = vmatmul.mubr.bf16.gmra.mrb[0].mxu0 %v1224
    %v1263 = vpop.f32.mrb[0].mxu0
    %v1264 = vadd.f32 %v1196, %v1263
    %v1265 = vpop.f32.mrb[0].mxu0
    %v1266 = vpop.f32.mrb[0].mxu0
    %v1267 = vadd.f32 %v1196, %v1266
    %v1268 = vpop.f32.mrb[0].mxu0
    %1269 = vmatprep.mubr.bf16.mxu0 0
    %1270 = vmatmul.mubr.bf16.gmra.mrb[0].mxu0 %v1227
    %v1271 = vpop.f32.mrb[0].mxu0
    %v1272 = vadd.f32 %v1196, %v1271
    %v1273 = vpop.f32.mrb[0].mxu0
    %v1274 = vpop.f32.mrb[0].mxu0
    %v1275 = vadd.f32 %v1196, %v1274
    %v1276 = vpop.f32.mrb[0].mxu0
    %1277 = vdwg.mxu0
    %v1278 = vadd.f32 %v286, %v1264
    %v1279 = vadd.f32 %v287, %v1267
    %v1280 = vadd.f32 %v288, %v1272
    %v1281 = vadd.f32 %v289, %v1275
    %1282 = vst.msk [vmem:[#allocation31] sm:$0xff] %vm293, %v1278
    %1283 = vst.msk [vmem:[#allocation31 + $0x8] sm:$0xff] %vm293, %v1279
    %1284 = vst.msk [vmem:[#allocation31 + $0x10] sm:$0xff] %vm293, %v1280
    %1285 = vst.msk [vmem:[#allocation31 + $0x18] sm:$0xff] %vm293, %v1281
    // Predicated region
    $region146: #{_lambda_.6} parent=1 // pred_check
      _
    $region147: #{_lambda_.6} parent=1 // pred_check_branch
      %1287 = sbr.rel (0) target = $region149
    $region148: #{_lambda_.6} parent=1 // pred_region
      %s1289 = ssub.s32 512, 512
      %1290 = vsyncadd [#allocation4], %s1289
      %s1291 = sshll.u32 [#allocation31], 4
      %s1292 = int_to_ptr.vmem [resolvable:$true] %s1291
      %1297 = dma.vmem_to_hbm [thread:$0]  %s1292, 512, %s18, [#allocation4], 128, 128, 8
    $region149: #{_lambda_.6} parent=1 // pred_fallthru
      _
    // Predicated region
    $region150: #{_lambda_.6} parent=1 // pred_check
      _
    $region151: #{_lambda_.6} parent=1 // pred_check_branch
      %1299 = sbr.rel (0) target = $region153
    $region152: #{_lambda_.6} parent=1 // pred_region
      %s1301 = ssub.s32 32, 32
      %1302 = vsyncadd [#allocation33], %s1301
      %s1304 = sshll.u32 [#allocation32], 4
      %s1305 = int_to_ptr.vmem [resolvable:$true] %s1304
      %1307 = dma.vmem_to_hbm [thread:$0]  %s1305, 32, %s19, [#allocation33]
    $region153: #{_lambda_.6} parent=1 // pred_fallthru
      _
    // Predicated region
    $region154: #{_lambda_.6} parent=1 // pred_check
      _
    $region155: #{_lambda_.6} parent=1 // pred_check_branch
      %1309 = sbr.rel (0) target = $region157
    $region156: #{_lambda_.6} parent=1 // pred_region
      %1310 = dma.done [#allocation4], 512
    $region157: #{_lambda_.6} parent=1 // pred_fallthru
      _
    // Predicated region
    $region158: #{_lambda_.6} parent=1 // pred_check
      _
    $region159: #{_lambda_.6} parent=1 // pred_check_branch
      %1312 = sbr.rel (0) target = $region161
    $region160: #{_lambda_.6} parent=1 // pred_region
      %1313 = dma.done [#allocation33], 32
    $region161: #{_lambda_.6} parent=1 // pred_fallthru
      _
    %1314 = vsyncpa [#allocation3], 1
    %1315 = vsyncpa [#allocation6], 1
    %1316 = vsyncpa [#allocation9], 1
    %1317 = vsyncpa [#allocation12], 1
    %1318 = vsyncpa [#allocation15], 1
    %1319 = vsyncpa [#allocation18], 1
    %1320 = vsyncpa [#allocation21], 1
    %1321 = vsyncpa [#allocation24], 1
    %1322 = vsyncpa [#allocation27], 1
    %1323 = vsyncpa [#allocation30], 1
    %1324 = vsyncpa [#allocation4], 1
    %1325 = vsyncpa [#allocation33], 1

// kernel: _lambda_.8
$region0: #{_lambda_.8}
  #allocation0 [shape = 'u32[]', space=smem, size = 0x4, offset = 0x4, fixed_abs, tag = 'smem constant byte address 0x4 - core index']
  #allocation1 [shape = 'u32[144,128]{1,0:T(1,128)}', space=vmem, size = 0x12000, scoped, tag = 'internal scratch']
  %s0 = inlined_call_operand.hbm [shape: bf16[32,64], index: 0, kind: input, shape index: {}]
  %s1 = inlined_call_operand.hbm [shape: f32[8,32], index: 1, kind: input, shape index: {}]
  %s2 = inlined_call_operand.hbm [shape: f32[2,32], index: 2, kind: input, shape index: {}]
  %s3 = inlined_call_operand.hbm [shape: f32[1,64], index: 3, kind: input, shape index: {}]
  %s4 = inlined_call_operand.hbm [shape: f32[1,64], index: 4, kind: input, shape index: {}]
  %s5 = inlined_call_operand.hbm [shape: bf16[64,64], index: 5, kind: input, shape index: {}]
  %s6 = inlined_call_operand.hbm [shape: f32[1,64], index: 6, kind: input, shape index: {}]
  %s7 = inlined_call_operand.hbm [shape: bf16[64,128], index: 7, kind: input, shape index: {}]
  %s8 = inlined_call_operand.hbm [shape: f32[1,128], index: 8, kind: input, shape index: {}]
  %s9 = inlined_call_operand.hbm [shape: bf16[64,64], index: 9, kind: input, shape index: {}]
  %s10 = inlined_call_operand.hbm [shape: f32[1,64], index: 10, kind: input, shape index: {}]
  %s11 = inlined_call_operand.hbm [shape: f32[1,64], index: 11, kind: input, shape index: {}]
  %s12 = inlined_call_operand.hbm [shape: f32[1,64], index: 12, kind: input, shape index: {}]
  %s13 = inlined_call_operand.hbm [shape: bf16[64,128], index: 13, kind: input, shape index: {}]
  %s14 = inlined_call_operand.hbm [shape: f32[1,128], index: 14, kind: input, shape index: {}]
  %s15 = inlined_call_operand.hbm [shape: bf16[128,64], index: 15, kind: input, shape index: {}]
  %s16 = inlined_call_operand.hbm [shape: f32[1,64], index: 16, kind: input, shape index: {}]
  %s17 = inlined_call_operand.hbm [shape: f32[64,4], index: 17, kind: input, shape index: {}]
  %s18 = inlined_call_operand.hbm [shape: f32[4,64], index: 18, kind: input, shape index: {}]
  %s19 = inlined_call_operand.hbm [shape: f32[8,64], index: 19, kind: output, shape index: {0}]
  %s20 = inlined_call_operand.hbm [shape: f32[2,64], index: 20, kind: output, shape index: {1}]
  %21 = xla_tuple %s19, %s20
  %s22 = sld [smem:[#allocation0]]
  $region170: #{_lambda_.8} parent=0
    _
  %s24 = ssub.s32 1, %s22
  %s25 = scalar_select 0, %s24, %s22
  $region1: #{_lambda_.8} parent=0
    #allocation2 [shape = 'u8[8192]{0}', space=vmem, size = 0x2000, scoped, tag = 'input window, operand 0, single buffered']
    #allocation3 [shape = 's32[1]{0}', space=sflag, size = 0x4, scoped, tag = 'scoped memory for _lambda_.8']
    #allocation4 [shape = 's32[1]{0}', space=sflag, size = 0x4, scoped, tag = 'scoped memory for _lambda_.8']
    #allocation5 [shape = 'u8[4096]{0}', space=vmem, size = 0x1000, scoped, tag = 'input window, operand 1, single buffered']
    #allocation6 [shape = 's32[1]{0}', space=sflag, size = 0x4, scoped, tag = 'scoped memory for _lambda_.8']
    #allocation7 [shape = 'u8[1024]{0}', space=vmem, size = 0x400, scoped, tag = 'input window, operand 2, single buffered']
    #allocation8 [shape = 'u8[512]{0}', space=vmem, size = 0x400, scoped, tag = 'input window, operand 3, single buffered']
    #allocation9 [shape = 's32[1]{0}', space=sflag, size = 0x4, scoped, tag = 'scoped memory for _lambda_.8']
    #allocation10 [shape = 'u8[512]{0}', space=vmem, size = 0x400, scoped, tag = 'input window, operand 4, single buffered']
    #allocation11 [shape = 'u8[16384]{0}', space=vmem, size = 0x4000, scoped, tag = 'input window, operand 5, single buffered']
    #allocation12 [shape = 's32[1]{0}', space=sflag, size = 0x4, scoped, tag = 'scoped memory for _lambda_.8']
    #allocation13 [shape = 'u8[512]{0}', space=vmem, size = 0x400, scoped, tag = 'input window, operand 6, single buffered']
    #allocation14 [shape = 'u8[16384]{0}', space=vmem, size = 0x4000, scoped, tag = 'input window, operand 7, single buffered']
    #allocation15 [shape = 's32[1]{0}', space=sflag, size = 0x4, scoped, tag = 'scoped memory for _lambda_.8']
    #allocation16 [shape = 'u8[512]{0}', space=vmem, size = 0x400, scoped, tag = 'input window, operand 8, single buffered']
    #allocation17 [shape = 'u8[16384]{0}', space=vmem, size = 0x4000, scoped, tag = 'input window, operand 9, single buffered']
    #allocation18 [shape = 's32[1]{0}', space=sflag, size = 0x4, scoped, tag = 'scoped memory for _lambda_.8']
    #allocation19 [shape = 'u8[512]{0}', space=vmem, size = 0x400, scoped, tag = 'input window, operand 10, single buffered']
    #allocation20 [shape = 'u8[512]{0}', space=vmem, size = 0x400, scoped, tag = 'input window, operand 11, single buffered']
    #allocation21 [shape = 's32[1]{0}', space=sflag, size = 0x4, scoped, tag = 'scoped memory for _lambda_.8']
    #allocation22 [shape = 'u8[512]{0}', space=vmem, size = 0x400, scoped, tag = 'input window, operand 12, single buffered']
    #allocation23 [shape = 'u8[16384]{0}', space=vmem, size = 0x4000, scoped, tag = 'input window, operand 13, single buffered']
    #allocation24 [shape = 's32[1]{0}', space=sflag, size = 0x4, scoped, tag = 'scoped memory for _lambda_.8']
    #allocation25 [shape = 'u8[512]{0}', space=vmem, size = 0x400, scoped, tag = 'input window, operand 14, single buffered']
    #allocation26 [shape = 'u8[32768]{0}', space=vmem, size = 0x8000, scoped, tag = 'input window, operand 15, single buffered']
    #allocation27 [shape = 's32[1]{0}', space=sflag, size = 0x4, scoped, tag = 'scoped memory for _lambda_.8']
    #allocation28 [shape = 'u8[512]{0}', space=vmem, size = 0x400, scoped, tag = 'input window, operand 16, single buffered']
    #allocation29 [shape = 'u8[32768]{0}', space=vmem, size = 0x8000, scoped, tag = 'input window, operand 17, single buffered']
    #allocation30 [shape = 's32[1]{0}', space=sflag, size = 0x4, scoped, tag = 'scoped memory for _lambda_.8']
    #allocation31 [shape = 'u8[2048]{0}', space=vmem, size = 0x800, scoped, tag = 'input window, operand 18, single buffered']
    #allocation32 [shape = 'u8[4096]{0}', space=vmem, size = 0x1000, scoped, tag = 'output window, operand 0, single buffered']
    #allocation33 [shape = 'u8[1024]{0}', space=vmem, size = 0x400, scoped, tag = 'output window, operand 1, single buffered']
    #allocation34 [shape = 's32[1]{0}', space=sflag, size = 0x4, scoped, tag = 'scoped memory for _lambda_.8']
    %26 = vsyncpa [#allocation3], 0
    %27 = vsyncpa [#allocation6], 0
    %28 = vsyncpa [#allocation9], 0
    %29 = vsyncpa [#allocation12], 0
    %30 = vsyncpa [#allocation15], 0
    %31 = vsyncpa [#allocation18], 0
    %32 = vsyncpa [#allocation21], 0
    %33 = vsyncpa [#allocation24], 0
    %34 = vsyncpa [#allocation27], 0
    %35 = vsyncpa [#allocation30], 0
    %36 = vsyncpa [#allocation4], 0
    %37 = vsyncpa [#allocation34], 0
    // Predicated region
    $region2: #{_lambda_.8} parent=1 // pred_check
      _
    $region3: #{_lambda_.8} parent=1 // pred_check_branch
      %39 = sbr.rel (0) target = $region5
    $region4: #{_lambda_.8} parent=1 // pred_region
      %s41 = ssub.s32 256, 256
      %42 = vsyncadd [#allocation3], %s41
      %s43 = sshll.u32 [#allocation2], 4
      %s44 = int_to_ptr.vmem [resolvable:$true] %s43
      %49 = dma.hbm_to_vmem [thread:$0]  %s0, 256, %s44, [#allocation3], 64, 64, 4
    $region5: #{_lambda_.8} parent=1 // pred_fallthru
      _
    // Predicated region
    $region6: #{_lambda_.8} parent=1 // pred_check
      _
    $region7: #{_lambda_.8} parent=1 // pred_check_branch
      %51 = sbr.rel (0) target = $region9
    $region8: #{_lambda_.8} parent=1 // pred_region
      %s53 = ssub.s32 128, 128
      %54 = vsyncadd [#allocation6], %s53
      %s56 = sshll.u32 [#allocation5], 4
      %s57 = int_to_ptr.vmem [resolvable:$true] %s56
      %59 = dma.hbm_to_vmem [thread:$0]  %s1, 128, %s57, [#allocation6]
    $region9: #{_lambda_.8} parent=1 // pred_fallthru
      _
    // Predicated region
    $region10: #{_lambda_.8} parent=1 // pred_check
      _
    $region11: #{_lambda_.8} parent=1 // pred_check_branch
      %61 = sbr.rel (0) target = $region13
    $region12: #{_lambda_.8} parent=1 // pred_region
      %s63 = ssub.s32 32, 32
      %64 = vsyncadd [#allocation6], %s63
      %s66 = sshll.u32 [#allocation7], 4
      %s67 = int_to_ptr.vmem [resolvable:$true] %s66
      %69 = dma.hbm_to_vmem [thread:$0]  %s2, 32, %s67, [#allocation6]
    $region13: #{_lambda_.8} parent=1 // pred_fallthru
      _
    // Predicated region
    $region14: #{_lambda_.8} parent=1 // pred_check
      _
    $region15: #{_lambda_.8} parent=1 // pred_check_branch
      %71 = sbr.rel (0) target = $region17
    $region16: #{_lambda_.8} parent=1 // pred_region
      %s73 = ssub.s32 16, 16
      %74 = vsyncadd [#allocation9], %s73
      %s76 = sshll.u32 [#allocation8], 4
      %s77 = int_to_ptr.vmem [resolvable:$true] %s76
      %79 = dma.hbm_to_vmem [thread:$0]  %s3, 16, %s77, [#allocation9]
    $region17: #{_lambda_.8} parent=1 // pred_fallthru
      _
    // Predicated region
    $region18: #{_lambda_.8} parent=1 // pred_check
      _
    $region19: #{_lambda_.8} parent=1 // pred_check_branch
      %81 = sbr.rel (0) target = $region21
    $region20: #{_lambda_.8} parent=1 // pred_region
      %s83 = ssub.s32 16, 16
      %84 = vsyncadd [#allocation9], %s83
      %s86 = sshll.u32 [#allocation10], 4
      %s87 = int_to_ptr.vmem [resolvable:$true] %s86
      %89 = dma.hbm_to_vmem [thread:$0]  %s4, 16, %s87, [#allocation9]
    $region21: #{_lambda_.8} parent=1 // pred_fallthru
      _
    // Predicated region
    $region22: #{_lambda_.8} parent=1 // pred_check
      _
    $region23: #{_lambda_.8} parent=1 // pred_check_branch
      %91 = sbr.rel (0) target = $region25
    $region24: #{_lambda_.8} parent=1 // pred_region
      %s93 = ssub.s32 512, 512
      %94 = vsyncadd [#allocation12], %s93
      %s95 = sshll.u32 [#allocation11], 4
      %s96 = int_to_ptr.vmem [resolvable:$true] %s95
      %101 = dma.hbm_to_vmem [thread:$0]  %s5, 512, %s96, [#allocation12], 64, 64, 4
    $region25: #{_lambda_.8} parent=1 // pred_fallthru
      _
    // Predicated region
    $region26: #{_lambda_.8} parent=1 // pred_check
      _
    $region27: #{_lambda_.8} parent=1 // pred_check_branch
      %103 = sbr.rel (0) target = $region29
    $region28: #{_lambda_.8} parent=1 // pred_region
      %s105 = ssub.s32 16, 16
      %106 = vsyncadd [#allocation12], %s105
      %s108 = sshll.u32 [#allocation13], 4
      %s109 = int_to_ptr.vmem [resolvable:$true] %s108
      %111 = dma.hbm_to_vmem [thread:$0]  %s6, 16, %s109, [#allocation12]
    $region29: #{_lambda_.8} parent=1 // pred_fallthru
      _
    // Predicated region
    $region30: #{_lambda_.8} parent=1 // pred_check
      _
    $region31: #{_lambda_.8} parent=1 // pred_check_branch
      %113 = sbr.rel (0) target = $region33
    $region32: #{_lambda_.8} parent=1 // pred_region
      %s115 = ssub.s32 512, 512
      %116 = vsyncadd [#allocation15], %s115
      %s117 = sshll.u32 [#allocation14], 4
      %s118 = int_to_ptr.vmem [resolvable:$true] %s117
      %123 = dma.hbm_to_vmem [thread:$0]  %s7, 512, %s118, [#allocation15], 64, 64, 4
    $region33: #{_lambda_.8} parent=1 // pred_fallthru
      _
    // Predicated region
    $region34: #{_lambda_.8} parent=1 // pred_check
      _
    $region35: #{_lambda_.8} parent=1 // pred_check_branch
      %125 = sbr.rel (0) target = $region37
    $region36: #{_lambda_.8} parent=1 // pred_region
      %s127 = ssub.s32 16, 16
      %128 = vsyncadd [#allocation15], %s127
      %s130 = sshll.u32 [#allocation16], 4
      %s131 = int_to_ptr.vmem [resolvable:$true] %s130
      %133 = dma.hbm_to_vmem [thread:$0]  %s8, 16, %s131, [#allocation15]
    $region37: #{_lambda_.8} parent=1 // pred_fallthru
      _
    // Predicated region
    $region38: #{_lambda_.8} parent=1 // pred_check
      _
    $region39: #{_lambda_.8} parent=1 // pred_check_branch
      %135 = sbr.rel (0) target = $region41
    $region40: #{_lambda_.8} parent=1 // pred_region
      %s137 = ssub.s32 512, 512
      %138 = vsyncadd [#allocation18], %s137
      %s139 = sshll.u32 [#allocation17], 4
      %s140 = int_to_ptr.vmem [resolvable:$true] %s139
      %145 = dma.hbm_to_vmem [thread:$0]  %s9, 512, %s140, [#allocation18], 64, 64, 4
    $region41: #{_lambda_.8} parent=1 // pred_fallthru
      _
    // Predicated region
    $region42: #{_lambda_.8} parent=1 // pred_check
      _
    $region43: #{_lambda_.8} parent=1 // pred_check_branch
      %147 = sbr.rel (0) target = $region45
    $region44: #{_lambda_.8} parent=1 // pred_region
      %s149 = ssub.s32 16, 16
      %150 = vsyncadd [#allocation18], %s149
      %s152 = sshll.u32 [#allocation19], 4
      %s153 = int_to_ptr.vmem [resolvable:$true] %s152
      %155 = dma.hbm_to_vmem [thread:$0]  %s10, 16, %s153, [#allocation18]
    $region45: #{_lambda_.8} parent=1 // pred_fallthru
      _
    // Predicated region
    $region46: #{_lambda_.8} parent=1 // pred_check
      _
    $region47: #{_lambda_.8} parent=1 // pred_check_branch
      %157 = sbr.rel (0) target = $region49
    $region48: #{_lambda_.8} parent=1 // pred_region
      %s159 = ssub.s32 16, 16
      %160 = vsyncadd [#allocation21], %s159
      %s162 = sshll.u32 [#allocation20], 4
      %s163 = int_to_ptr.vmem [resolvable:$true] %s162
      %165 = dma.hbm_to_vmem [thread:$0]  %s11, 16, %s163, [#allocation21]
    $region49: #{_lambda_.8} parent=1 // pred_fallthru
      _
    // Predicated region
    $region50: #{_lambda_.8} parent=1 // pred_check
      _
    $region51: #{_lambda_.8} parent=1 // pred_check_branch
      %167 = sbr.rel (0) target = $region53
    $region52: #{_lambda_.8} parent=1 // pred_region
      %s169 = ssub.s32 16, 16
      %170 = vsyncadd [#allocation21], %s169
      %s172 = sshll.u32 [#allocation22], 4
      %s173 = int_to_ptr.vmem [resolvable:$true] %s172
      %175 = dma.hbm_to_vmem [thread:$0]  %s12, 16, %s173, [#allocation21]
    $region53: #{_lambda_.8} parent=1 // pred_fallthru
      _
    // Predicated region
    $region54: #{_lambda_.8} parent=1 // pred_check
      _
    $region55: #{_lambda_.8} parent=1 // pred_check_branch
      %177 = sbr.rel (0) target = $region57
    $region56: #{_lambda_.8} parent=1 // pred_region
      %s179 = ssub.s32 512, 512
      %180 = vsyncadd [#allocation24], %s179
      %s181 = sshll.u32 [#allocation23], 4
      %s182 = int_to_ptr.vmem [resolvable:$true] %s181
      %187 = dma.hbm_to_vmem [thread:$0]  %s13, 512, %s182, [#allocation24], 64, 64, 4
    $region57: #{_lambda_.8} parent=1 // pred_fallthru
      _
    // Predicated region
    $region58: #{_lambda_.8} parent=1 // pred_check
      _
    $region59: #{_lambda_.8} parent=1 // pred_check_branch
      %189 = sbr.rel (0) target = $region61
    $region60: #{_lambda_.8} parent=1 // pred_region
      %s191 = ssub.s32 16, 16
      %192 = vsyncadd [#allocation24], %s191
      %s194 = sshll.u32 [#allocation25], 4
      %s195 = int_to_ptr.vmem [resolvable:$true] %s194
      %197 = dma.hbm_to_vmem [thread:$0]  %s14, 16, %s195, [#allocation24]
    $region61: #{_lambda_.8} parent=1 // pred_fallthru
      _
    // Predicated region
    $region62: #{_lambda_.8} parent=1 // pred_check
      _
    $region63: #{_lambda_.8} parent=1 // pred_check_branch
      %199 = sbr.rel (0) target = $region65
    $region64: #{_lambda_.8} parent=1 // pred_region
      %s201 = ssub.s32 1024, 1024
      %202 = vsyncadd [#allocation27], %s201
      %s203 = sshll.u32 [#allocation26], 4
      %s204 = int_to_ptr.vmem [resolvable:$true] %s203
      %209 = dma.hbm_to_vmem [thread:$0]  %s15, 1024, %s204, [#allocation27], 64, 64, 4
    $region65: #{_lambda_.8} parent=1 // pred_fallthru
      _
    // Predicated region
    $region66: #{_lambda_.8} parent=1 // pred_check
      _
    $region67: #{_lambda_.8} parent=1 // pred_check_branch
      %211 = sbr.rel (0) target = $region69
    $region68: #{_lambda_.8} parent=1 // pred_region
      %s213 = ssub.s32 16, 16
      %214 = vsyncadd [#allocation27], %s213
      %s216 = sshll.u32 [#allocation28], 4
      %s217 = int_to_ptr.vmem [resolvable:$true] %s216
      %219 = dma.hbm_to_vmem [thread:$0]  %s16, 16, %s217, [#allocation27]
    $region69: #{_lambda_.8} parent=1 // pred_fallthru
      _
    // Predicated region
    $region70: #{_lambda_.8} parent=1 // pred_check
      _
    $region71: #{_lambda_.8} parent=1 // pred_check_branch
      %221 = sbr.rel (0) target = $region73
    $region72: #{_lambda_.8} parent=1 // pred_region
      %s223 = ssub.s32 1024, 1024
      %224 = vsyncadd [#allocation30], %s223
      %s225 = sshll.u32 [#allocation29], 4
      %s226 = int_to_ptr.vmem [resolvable:$true] %s225
      %231 = dma.hbm_to_vmem [thread:$0]  %s17, 1024, %s226, [#allocation30], 128, 128, 8
    $region73: #{_lambda_.8} parent=1 // pred_fallthru
      _
    // Predicated region
    $region74: #{_lambda_.8} parent=1 // pred_check
      _
    $region75: #{_lambda_.8} parent=1 // pred_check_branch
      %233 = sbr.rel (0) target = $region77
    $region76: #{_lambda_.8} parent=1 // pred_region
      %s235 = ssub.s32 64, 64
      %236 = vsyncadd [#allocation30], %s235
      %s238 = sshll.u32 [#allocation31], 4
      %s239 = int_to_ptr.vmem [resolvable:$true] %s238
      %241 = dma.hbm_to_vmem [thread:$0]  %s18, 64, %s239, [#allocation30]
    $region77: #{_lambda_.8} parent=1 // pred_fallthru
      _
    // Predicated region
    $region78: #{_lambda_.8} parent=1 // pred_check
      _
    $region79: #{_lambda_.8} parent=1 // pred_check_branch
      %243 = sbr.rel (0) target = $region81
    $region80: #{_lambda_.8} parent=1 // pred_region
      %244 = dma.done [#allocation3], 256
    $region81: #{_lambda_.8} parent=1 // pred_fallthru
      _
    // Predicated region
    $region82: #{_lambda_.8} parent=1 // pred_check
      _
    $region83: #{_lambda_.8} parent=1 // pred_check_branch
      %246 = sbr.rel (0) target = $region85
    $region84: #{_lambda_.8} parent=1 // pred_region
      %247 = dma.done [#allocation6], 128
    $region85: #{_lambda_.8} parent=1 // pred_fallthru
      _
    // Predicated region
    $region86: #{_lambda_.8} parent=1 // pred_check
      _
    $region87: #{_lambda_.8} parent=1 // pred_check_branch
      %249 = sbr.rel (0) target = $region89
    $region88: #{_lambda_.8} parent=1 // pred_region
      %250 = dma.done [#allocation6], 32
    $region89: #{_lambda_.8} parent=1 // pred_fallthru
      _
    // Predicated region
    $region90: #{_lambda_.8} parent=1 // pred_check
      _
    $region91: #{_lambda_.8} parent=1 // pred_check_branch
      %252 = sbr.rel (0) target = $region93
    $region92: #{_lambda_.8} parent=1 // pred_region
      %253 = dma.done [#allocation9], 16
    $region93: #{_lambda_.8} parent=1 // pred_fallthru
      _
    // Predicated region
    $region94: #{_lambda_.8} parent=1 // pred_check
      _
    $region95: #{_lambda_.8} parent=1 // pred_check_branch
      %255 = sbr.rel (0) target = $region97
    $region96: #{_lambda_.8} parent=1 // pred_region
      %256 = dma.done [#allocation9], 16
    $region97: #{_lambda_.8} parent=1 // pred_fallthru
      _
    // Predicated region
    $region98: #{_lambda_.8} parent=1 // pred_check
      _
    $region99: #{_lambda_.8} parent=1 // pred_check_branch
      %258 = sbr.rel (0) target = $region101
    $region100: #{_lambda_.8} parent=1 // pred_region
      %259 = dma.done [#allocation12], 512
    $region101: #{_lambda_.8} parent=1 // pred_fallthru
      _
    // Predicated region
    $region102: #{_lambda_.8} parent=1 // pred_check
      _
    $region103: #{_lambda_.8} parent=1 // pred_check_branch
      %261 = sbr.rel (0) target = $region105
    $region104: #{_lambda_.8} parent=1 // pred_region
      %262 = dma.done [#allocation12], 16
    $region105: #{_lambda_.8} parent=1 // pred_fallthru
      _
    // Predicated region
    $region106: #{_lambda_.8} parent=1 // pred_check
      _
    $region107: #{_lambda_.8} parent=1 // pred_check_branch
      %264 = sbr.rel (0) target = $region109
    $region108: #{_lambda_.8} parent=1 // pred_region
      %265 = dma.done [#allocation15], 512
    $region109: #{_lambda_.8} parent=1 // pred_fallthru
      _
    // Predicated region
    $region110: #{_lambda_.8} parent=1 // pred_check
      _
    $region111: #{_lambda_.8} parent=1 // pred_check_branch
      %267 = sbr.rel (0) target = $region113
    $region112: #{_lambda_.8} parent=1 // pred_region
      %268 = dma.done [#allocation15], 16
    $region113: #{_lambda_.8} parent=1 // pred_fallthru
      _
    // Predicated region
    $region114: #{_lambda_.8} parent=1 // pred_check
      _
    $region115: #{_lambda_.8} parent=1 // pred_check_branch
      %270 = sbr.rel (0) target = $region117
    $region116: #{_lambda_.8} parent=1 // pred_region
      %271 = dma.done [#allocation18], 512
    $region117: #{_lambda_.8} parent=1 // pred_fallthru
      _
    // Predicated region
    $region118: #{_lambda_.8} parent=1 // pred_check
      _
    $region119: #{_lambda_.8} parent=1 // pred_check_branch
      %273 = sbr.rel (0) target = $region121
    $region120: #{_lambda_.8} parent=1 // pred_region
      %274 = dma.done [#allocation18], 16
    $region121: #{_lambda_.8} parent=1 // pred_fallthru
      _
    // Predicated region
    $region122: #{_lambda_.8} parent=1 // pred_check
      _
    $region123: #{_lambda_.8} parent=1 // pred_check_branch
      %276 = sbr.rel (0) target = $region125
    $region124: #{_lambda_.8} parent=1 // pred_region
      %277 = dma.done [#allocation21], 16
    $region125: #{_lambda_.8} parent=1 // pred_fallthru
      _
    // Predicated region
    $region126: #{_lambda_.8} parent=1 // pred_check
      _
    $region127: #{_lambda_.8} parent=1 // pred_check_branch
      %279 = sbr.rel (0) target = $region129
    $region128: #{_lambda_.8} parent=1 // pred_region
      %280 = dma.done [#allocation21], 16
    $region129: #{_lambda_.8} parent=1 // pred_fallthru
      _
    // Predicated region
    $region130: #{_lambda_.8} parent=1 // pred_check
      _
    $region131: #{_lambda_.8} parent=1 // pred_check_branch
      %282 = sbr.rel (0) target = $region133
    $region132: #{_lambda_.8} parent=1 // pred_region
      %283 = dma.done [#allocation24], 512
    $region133: #{_lambda_.8} parent=1 // pred_fallthru
      _
    // Predicated region
    $region134: #{_lambda_.8} parent=1 // pred_check
      _
    $region135: #{_lambda_.8} parent=1 // pred_check_branch
      %285 = sbr.rel (0) target = $region137
    $region136: #{_lambda_.8} parent=1 // pred_region
      %286 = dma.done [#allocation24], 16
    $region137: #{_lambda_.8} parent=1 // pred_fallthru
      _
    // Predicated region
    $region138: #{_lambda_.8} parent=1 // pred_check
      _
    $region139: #{_lambda_.8} parent=1 // pred_check_branch
      %288 = sbr.rel (0) target = $region141
    $region140: #{_lambda_.8} parent=1 // pred_region
      %289 = dma.done [#allocation27], 1024
    $region141: #{_lambda_.8} parent=1 // pred_fallthru
      _
    // Predicated region
    $region142: #{_lambda_.8} parent=1 // pred_check
      _
    $region143: #{_lambda_.8} parent=1 // pred_check_branch
      %291 = sbr.rel (0) target = $region145
    $region144: #{_lambda_.8} parent=1 // pred_region
      %292 = dma.done [#allocation27], 16
    $region145: #{_lambda_.8} parent=1 // pred_fallthru
      _
    // Predicated region
    $region146: #{_lambda_.8} parent=1 // pred_check
      _
    $region147: #{_lambda_.8} parent=1 // pred_check_branch
      %294 = sbr.rel (0) target = $region149
    $region148: #{_lambda_.8} parent=1 // pred_region
      %295 = dma.done [#allocation30], 1024
    $region149: #{_lambda_.8} parent=1 // pred_fallthru
      _
    // Predicated region
    $region150: #{_lambda_.8} parent=1 // pred_check
      _
    $region151: #{_lambda_.8} parent=1 // pred_check_branch
      %297 = sbr.rel (0) target = $region153
    $region152: #{_lambda_.8} parent=1 // pred_region
      %298 = dma.done [#allocation30], 64
    $region153: #{_lambda_.8} parent=1 // pred_fallthru
      _
    %v300 = vld [vmem:[#allocation5] sm:$0xff]
    %v301 = vld [vmem:[#allocation7] sm:$0x3]
    %v302 = vld [vmem:[#allocation2] sm:$0xf]
    %v303 = vld [vmem:[#allocation2 + $0x4] sm:$0xf]
    %v304 = vld [vmem:[#allocation2 + $0x8] sm:$0xf]
    %v305 = vld [vmem:[#allocation2 + $0xc] sm:$0xf]
    %v306 = vpack.c.bf16 %v300, %v300
    %v311 = vunpack.c.l.b16 %v302
    %v312 = vunpack.c.l.b16 %v303
    %v313 = vunpack.c.l.b16 %v304
    %v314 = vunpack.c.l.b16 %v305
    %v315 = vpack.c.b16 %v312, %v311
    %v316 = vpack.c.b16 %v314, %v313
    %vm319 = vcmask 261120
    %v321 = vsel %vm319, %v306, 0
    %323 = vmatprep.subr.bf16.mxu0 0
    %324 = vmatpush1.bf16.msra.mxu0 %v315
    %325 = vmatprep.subr.bf16.mxu0 0
    %326 = vmatpush1.bf16.msra.mxu0 %v316
    %327 = vmatprep.subr.bf16.mxu0 0
    %328 = vmatpush1.bf16.msra.mxu0 0
    %329 = vmatprep.subr.bf16.mxu0 0
    %330 = vmatpush1.bf16.msra.mxu0 0
    %331 = vmatprep.subr.bf16.mxu0 0
    %332 = vmatpush1.bf16.msra.mxu0 0
    %333 = vmatprep.subr.bf16.mxu0 0
    %334 = vmatpush1.bf16.msra.mxu0 0
    %335 = vmatprep.subr.bf16.mxu0 0
    %336 = vmatpush1.bf16.msra.mxu0 0
    %337 = vmatprep.subr.bf16.mxu0 0
    %338 = vmatpush1.bf16.msra.mxu0 0
    %339 = vmatprep.subr.bf16.mxu0 0
    %340 = vmatpush1.bf16.msra.mxu0 0
    %341 = vmatprep.subr.bf16.mxu0 0
    %342 = vmatpush1.bf16.msra.mxu0 0
    %343 = vmatprep.subr.bf16.mxu0 0
    %344 = vmatpush1.bf16.msra.mxu0 0
    %345 = vmatprep.subr.bf16.mxu0 0
    %346 = vmatpush1.bf16.msra.mxu0 0
    %347 = vmatprep.subr.bf16.mxu0 0
    %348 = vmatpush1.bf16.msra.mxu0 0
    %349 = vmatprep.subr.bf16.mxu0 0
    %350 = vmatpush1.bf16.msra.mxu0 0
    %351 = vmatprep.subr.bf16.mxu0 0
    %352 = vmatpush1.bf16.msra.mxu0 0
    %353 = vmatprep.subr.bf16.mxu0 0
    %354 = vmatpush1.bf16.msra.mxu0 0
    %355 = vmatprep.mubr.bf16.mxu0 0
    %356 = vmatmul.mubr.bf16.gmra.mrb[0].mxu0 %v321
    %v357 = vpop.f32.mrb[0].mxu0
    %v358 = vadd.f32 0.0, %v357
    %v359 = vpop.f32.mrb[0].mxu0
    %v360 = vpop.f32.mrb[0].mxu0
    %v361 = vpop.f32.mrb[0].mxu0
    %362 = vdwg.mxu0
    %v363 = vpack.c.bf16 %v301, %v301
    %v365 = vsel %vm319, %v363, 0
    %367 = vmatprep.subr.bf16.mxu0 0
    %368 = vmatpush1.bf16.msra.mxu0 %v315
    %369 = vmatprep.subr.bf16.mxu0 0
    %370 = vmatpush1.bf16.msra.mxu0 %v316
    %371 = vmatprep.subr.bf16.mxu0 0
    %372 = vmatpush1.bf16.msra.mxu0 0
    %373 = vmatprep.subr.bf16.mxu0 0
    %374 = vmatpush1.bf16.msra.mxu0 0
    %375 = vmatprep.subr.bf16.mxu0 0
    %376 = vmatpush1.bf16.msra.mxu0 0
    %377 = vmatprep.subr.bf16.mxu0 0
    %378 = vmatpush1.bf16.msra.mxu0 0
    %379 = vmatprep.subr.bf16.mxu0 0
    %380 = vmatpush1.bf16.msra.mxu0 0
    %381 = vmatprep.subr.bf16.mxu0 0
    %382 = vmatpush1.bf16.msra.mxu0 0
    %383 = vmatprep.subr.bf16.mxu0 0
    %384 = vmatpush1.bf16.msra.mxu0 0
    %385 = vmatprep.subr.bf16.mxu0 0
    %386 = vmatpush1.bf16.msra.mxu0 0
    %387 = vmatprep.subr.bf16.mxu0 0
    %388 = vmatpush1.bf16.msra.mxu0 0
    %389 = vmatprep.subr.bf16.mxu0 0
    %390 = vmatpush1.bf16.msra.mxu0 0
    %391 = vmatprep.subr.bf16.mxu0 0
    %392 = vmatpush1.bf16.msra.mxu0 0
    %393 = vmatprep.subr.bf16.mxu0 0
    %394 = vmatpush1.bf16.msra.mxu0 0
    %395 = vmatprep.subr.bf16.mxu0 0
    %396 = vmatpush1.bf16.msra.mxu0 0
    %397 = vmatprep.subr.bf16.mxu0 0
    %398 = vmatpush1.bf16.msra.mxu0 0
    %399 = vmatprep.mubr.bf16.mxu0 0
    %400 = vmatmul.mubr.bf16.gmra.mrb[0].mxu0 %v365
    %v401 = vpop.f32.mrb[0].mxu0
    %v402 = vadd.f32 0.0, %v401
    %v403 = vpop.f32.mrb[0].mxu0
    %v404 = vpop.f32.mrb[0].mxu0
    %v405 = vpop.f32.mrb[0].mxu0
    %406 = vdwg.mxu0
    %v407 = vld [vmem:[#allocation8] sm:$0x1]
    %v408 = vld [vmem:[#allocation10] sm:$0x1]
    %vm409 = vcmask 523264
    %v410 = vsel %vm409, %v358, 0.0
    %411 = vadd.xlane.f32.xlu0 %v410
    %v412 = vpop.xlane.xlu0 %411
    %v413 = vrcp.pop 64.0
    %v414 = vmul.f32 %v412, %v413
    %v415 = vsub.f32 %v358, %v414
    %v416 = vmul.f32 %v415, %v415
    %v417 = vsel %vm409, %v416, 0.0
    %418 = vadd.xlane.f32.xlu0 %v417
    %v419 = vpop.xlane.xlu0 %418
    %v420 = vmul.f32 %v419, %v413
    %v421 = vadd.f32 %v420, 1e-06
    %v422 = vrsqrt.pop %v421
    %v423 = vmul.f32 %v415, %v422
    %v425 = vlaneseq
    %v426 = vshrl.u32 %v425, 7
    %v427 = vsub.s32 0, %v426
    %v428 = vrot.slane %v407, %v427
    %v430 = vmul.f32 %v423, %v428
    %v432 = vlaneseq
    %v433 = vshrl.u32 %v432, 7
    %v434 = vsub.s32 0, %v433
    %v435 = vrot.slane %v408, %v434
    %v437 = vadd.f32 %v430, %v435
    %v438 = vpack.c.bf16 %v437, %v437
    %vm439 = vcmask 517120
    %v440 = vsel %vm439, %v402, 0.0
    %441 = vadd.xlane.f32.xlu0 %v440
    %v442 = vpop.xlane.xlu0 %441
    %v443 = vmul.f32 %v442, %v413
    %v444 = vsub.f32 %v402, %v443
    %v445 = vmul.f32 %v444, %v444
    %v446 = vsel %vm439, %v445, 0.0
    %447 = vadd.xlane.f32.xlu0 %v446
    %v448 = vpop.xlane.xlu0 %447
    %v449 = vmul.f32 %v448, %v413
    %v450 = vadd.f32 %v449, 1e-06
    %v451 = vrsqrt.pop %v450
    %v452 = vmul.f32 %v444, %v451
    %v453 = vmul.f32 %v452, %v428
    %v454 = vadd.f32 %v453, %v435
    %v455 = vpack.c.bf16 %v454, %v454
    %v456 = vld [vmem:[#allocation11] sm:$0xf]
    %v457 = vld [vmem:[#allocation11 + $0x4] sm:$0xf]
    %v458 = vld [vmem:[#allocation11 + $0x8] sm:$0xf]
    %v459 = vld [vmem:[#allocation11 + $0xc] sm:$0xf]
    %v460 = vld [vmem:[#allocation11 + $0x10] sm:$0xf]
    %v461 = vld [vmem:[#allocation11 + $0x14] sm:$0xf]
    %v462 = vld [vmem:[#allocation11 + $0x18] sm:$0xf]
    %v463 = vld [vmem:[#allocation11 + $0x1c] sm:$0xf]
    %v464 = vld [vmem:[#allocation13] sm:$0x1]
    %v466 = vlaneseq
    %v467 = vshrl.u32 %v466, 7
    %v468 = vsub.s32 0, %v467
    %v469 = vrot.slane %v464, %v468
    %v479 = vunpack.c.l.b16 %v456
    %v480 = vunpack.c.l.b16 %v457
    %v481 = vunpack.c.l.b16 %v458
    %v482 = vunpack.c.l.b16 %v459
    %v483 = vunpack.c.l.b16 %v460
    %v484 = vunpack.c.l.b16 %v461
    %v485 = vunpack.c.l.b16 %v462
    %v486 = vunpack.c.l.b16 %v463
    %v487 = vpack.c.b16 %v480, %v479
    %v488 = vpack.c.b16 %v482, %v481
    %v489 = vpack.c.b16 %v484, %v483
    %v490 = vpack.c.b16 %v486, %v485
    %v496 = vsel %vm409, %v455, 0
    %498 = vmatprep.subr.bf16.mxu0 0
    %499 = vmatpush1.bf16.msra.mxu0 %v487
    %500 = vmatprep.subr.bf16.mxu0 0
    %501 = vmatpush1.bf16.msra.mxu0 %v488
    %502 = vmatprep.subr.bf16.mxu0 0
    %503 = vmatpush1.bf16.msra.mxu0 %v489
    %504 = vmatprep.subr.bf16.mxu0 0
    %505 = vmatpush1.bf16.msra.mxu0 %v490
    %506 = vmatprep.subr.bf16.mxu0 0
    %507 = vmatpush1.bf16.msra.mxu0 0
    %508 = vmatprep.subr.bf16.mxu0 0
    %509 = vmatpush1.bf16.msra.mxu0 0
    %510 = vmatprep.subr.bf16.mxu0 0
    %511 = vmatpush1.bf16.msra.mxu0 0
    %512 = vmatprep.subr.bf16.mxu0 0
    %513 = vmatpush1.bf16.msra.mxu0 0
    %514 = vmatprep.subr.bf16.mxu0 0
    %515 = vmatpush1.bf16.msra.mxu0 0
    %516 = vmatprep.subr.bf16.mxu0 0
    %517 = vmatpush1.bf16.msra.mxu0 0
    %518 = vmatprep.subr.bf16.mxu0 0
    %519 = vmatpush1.bf16.msra.mxu0 0
    %520 = vmatprep.subr.bf16.mxu0 0
    %521 = vmatpush1.bf16.msra.mxu0 0
    %522 = vmatprep.subr.bf16.mxu0 0
    %523 = vmatpush1.bf16.msra.mxu0 0
    %524 = vmatprep.subr.bf16.mxu0 0
    %525 = vmatpush1.bf16.msra.mxu0 0
    %526 = vmatprep.subr.bf16.mxu0 0
    %527 = vmatpush1.bf16.msra.mxu0 0
    %528 = vmatprep.subr.bf16.mxu0 0
    %529 = vmatpush1.bf16.msra.mxu0 0
    %530 = vmatprep.mubr.bf16.mxu0 0
    %531 = vmatmul.mubr.bf16.gmra.mrb[0].mxu0 %v496
    %v532 = vpop.f32.mrb[0].mxu0
    %v533 = vadd.f32 %v469, %v532
    %v534 = vpop.f32.mrb[0].mxu0
    %v535 = vpop.f32.mrb[0].mxu0
    %v536 = vpop.f32.mrb[0].mxu0
    %537 = vdwg.mxu0
    %v538 = vld [vmem:[#allocation14] sm:$0xf]
    %v539 = vld [vmem:[#allocation14 + $0x4] sm:$0xf]
    %v540 = vld [vmem:[#allocation14 + $0x8] sm:$0xf]
    %v541 = vld [vmem:[#allocation14 + $0xc] sm:$0xf]
    %v542 = vld [vmem:[#allocation14 + $0x10] sm:$0xf]
    %v543 = vld [vmem:[#allocation14 + $0x14] sm:$0xf]
    %v544 = vld [vmem:[#allocation14 + $0x18] sm:$0xf]
    %v545 = vld [vmem:[#allocation14 + $0x1c] sm:$0xf]
    %v546 = vld [vmem:[#allocation16] sm:$0x1]
    %v548 = vlaneseq
    %v549 = vshrl.u32 %v548, 7
    %v550 = vsub.s32 0, %v549
    %v551 = vrot.slane %v546, %v550
    %v561 = vunpack.c.l.b16 %v538
    %v562 = vunpack.c.l.b16 %v539
    %v563 = vunpack.c.l.b16 %v540
    %v564 = vunpack.c.l.b16 %v541
    %v565 = vunpack.c.l.b16 %v542
    %v566 = vunpack.c.l.b16 %v543
    %v567 = vunpack.c.l.b16 %v544
    %v568 = vunpack.c.l.b16 %v545
    %v569 = vpack.c.b16 %v562, %v561
    %v570 = vpack.c.b16 %v564, %v563
    %v571 = vpack.c.b16 %v566, %v565
    %v572 = vpack.c.b16 %v568, %v567
    %v578 = vsel %vm409, %v438, 0
    %580 = vmatprep.subr.bf16.mxu0 0
    %581 = vmatpush1.bf16.msra.mxu0 %v569
    %582 = vmatprep.subr.bf16.mxu0 0
    %583 = vmatpush1.bf16.msra.mxu0 %v570
    %584 = vmatprep.subr.bf16.mxu0 0
    %585 = vmatpush1.bf16.msra.mxu0 %v571
    %586 = vmatprep.subr.bf16.mxu0 0
    %587 = vmatpush1.bf16.msra.mxu0 %v572
    %588 = vmatprep.subr.bf16.mxu0 0
    %589 = vmatpush1.bf16.msra.mxu0 0
    %590 = vmatprep.subr.bf16.mxu0 0
    %591 = vmatpush1.bf16.msra.mxu0 0
    %592 = vmatprep.subr.bf16.mxu0 0
    %593 = vmatpush1.bf16.msra.mxu0 0
    %594 = vmatprep.subr.bf16.mxu0 0
    %595 = vmatpush1.bf16.msra.mxu0 0
    %596 = vmatprep.subr.bf16.mxu0 0
    %597 = vmatpush1.bf16.msra.mxu0 0
    %598 = vmatprep.subr.bf16.mxu0 0
    %599 = vmatpush1.bf16.msra.mxu0 0
    %600 = vmatprep.subr.bf16.mxu0 0
    %601 = vmatpush1.bf16.msra.mxu0 0
    %602 = vmatprep.subr.bf16.mxu0 0
    %603 = vmatpush1.bf16.msra.mxu0 0
    %604 = vmatprep.subr.bf16.mxu0 0
    %605 = vmatpush1.bf16.msra.mxu0 0
    %606 = vmatprep.subr.bf16.mxu0 0
    %607 = vmatpush1.bf16.msra.mxu0 0
    %608 = vmatprep.subr.bf16.mxu0 0
    %609 = vmatpush1.bf16.msra.mxu0 0
    %610 = vmatprep.subr.bf16.mxu0 0
    %611 = vmatpush1.bf16.msra.mxu0 0
    %612 = vmatprep.mubr.bf16.mxu0 0
    %613 = vmatmul.mubr.bf16.gmra.mrb[0].mxu0 %v578
    %v614 = vpop.f32.mrb[0].mxu0
    %v615 = vadd.f32 %v551, %v614
    %v616 = vpop.f32.mrb[0].mxu0
    %v617 = vpop.f32.mrb[0].mxu0
    %v618 = vpop.f32.mrb[0].mxu0
    %619 = vdwg.mxu0
    %v620 = vld [vmem:[#allocation29] sm:$0xff]
    %v621 = vld [vmem:[#allocation29 + $0x8] sm:$0xff]
    %v622 = vld [vmem:[#allocation29 + $0x10] sm:$0xff]
    %v623 = vld [vmem:[#allocation29 + $0x18] sm:$0xff]
    %v624 = vld [vmem:[#allocation29 + $0x20] sm:$0xff]
    %v625 = vld [vmem:[#allocation29 + $0x28] sm:$0xff]
    %v626 = vld [vmem:[#allocation29 + $0x30] sm:$0xff]
    %v627 = vld [vmem:[#allocation29 + $0x38] sm:$0xff]
    %v628 = vld [vmem:[#allocation31] sm:$0xf]
    %v629 = vlaneseq
    %v630 = vshrl.u32 %v629, 7
    %v631 = vsub.s32 0, %v630
    %v632 = vrot.slane %v533, %v631
    %v633 = vmul.f32 %v632, %v615
    %v635 = vsel %vm409, %v633, 0
    %637 = vmatprep.subr.mxu0 0.0
    %638 = vmatpush1.msra.mxu0 %v620
    %639 = vmatprep.subr.mxu0 0.0
    %640 = vmatpush1.msra.mxu0 %v621
    %641 = vmatprep.subr.mxu0 0.0
    %642 = vmatpush1.msra.mxu0 %v622
    %643 = vmatprep.subr.mxu0 0.0
    %644 = vmatpush1.msra.mxu0 %v623
    %645 = vmatprep.subr.mxu0 0.0
    %646 = vmatpush1.msra.mxu0 %v624
    %647 = vmatprep.subr.mxu0 0.0
    %648 = vmatpush1.msra.mxu0 %v625
    %649 = vmatprep.subr.mxu0 0.0
    %650 = vmatpush1.msra.mxu0 %v626
    %651 = vmatprep.subr.mxu0 0.0
    %652 = vmatpush1.msra.mxu0 %v627
    %653 = vmatprep.subr.mxu0 0.0
    %654 = vmatpush1.msra.mxu0 0.0
    %655 = vmatprep.subr.mxu0 0.0
    %656 = vmatpush1.msra.mxu0 0.0
    %657 = vmatprep.subr.mxu0 0.0
    %658 = vmatpush1.msra.mxu0 0.0
    %659 = vmatprep.subr.mxu0 0.0
    %660 = vmatpush1.msra.mxu0 0.0
    %661 = vmatprep.subr.mxu0 0.0
    %662 = vmatpush1.msra.mxu0 0.0
    %663 = vmatprep.subr.mxu0 0.0
    %664 = vmatpush1.msra.mxu0 0.0
    %665 = vmatprep.subr.mxu0 0.0
    %666 = vmatpush1.msra.mxu0 0.0
    %667 = vmatprep.subr.mxu0 0.0
    %668 = vmatpush1.msra.mxu0 0.0
    %669 = vmatprep.subr.mxu0 0.0
    %670 = vmatpush1.msra.mxu0 0.0
    %671 = vmatprep.subr.mxu0 0.0
    %672 = vmatpush1.msra.mxu0 0.0
    %673 = vmatprep.subr.mxu0 0.0
    %674 = vmatpush1.msra.mxu0 0.0
    %675 = vmatprep.subr.mxu0 0.0
    %676 = vmatpush1.msra.mxu0 0.0
    %677 = vmatprep.subr.mxu0 0.0
    %678 = vmatpush1.msra.mxu0 0.0
    %679 = vmatprep.subr.mxu0 0.0
    %680 = vmatpush1.msra.mxu0 0.0
    %681 = vmatprep.subr.mxu0 0.0
    %682 = vmatpush1.msra.mxu0 0.0
    %683 = vmatprep.subr.mxu0 0.0
    %684 = vmatpush1.msra.mxu0 0.0
    %685 = vmatprep.subr.mxu0 0.0
    %686 = vmatpush1.msra.mxu0 0.0
    %687 = vmatprep.subr.mxu0 0.0
    %688 = vmatpush1.msra.mxu0 0.0
    %689 = vmatprep.subr.mxu0 0.0
    %690 = vmatpush1.msra.mxu0 0.0
    %691 = vmatprep.subr.mxu0 0.0
    %692 = vmatpush1.msra.mxu0 0.0
    %693 = vmatprep.subr.mxu0 0.0
    %694 = vmatpush1.msra.mxu0 0.0
    %695 = vmatprep.subr.mxu0 0.0
    %696 = vmatpush1.msra.mxu0 0.0
    %697 = vmatprep.subr.mxu0 0.0
    %698 = vmatpush1.msra.mxu0 0.0
    %699 = vmatprep.subr.mxu0 0.0
    %700 = vmatpush1.msra.mxu0 0.0
    %701 = vmatprep.mubr.f32.mxu0 0.0
    %702 = vmatmul.mubr.f32.gmra.mrb[0].mxu0 %v635
    %v703 = vpop.f32.mrb[0].mxu0
    %v704 = vadd.f32 0.0, %v703
    %v705 = vpop.f32.mrb[0].mxu0
    %706 = vdwg.mxu0
    %v707 = vmul.f32 %v704, 0.25
    %vm708 = vcmask 27648
    %v709 = vsel %vm708, %v707, -inf
    %v710 = vrot.slane %v709, 4
    %v711 = vmax.f32 %v709, %v710
    %v712 = vrot.slane %v711, 2
    %v713 = vmax.f32 %v711, %v712
    %v714 = vrot.slane %v713, 1
    %v715 = vmax.f32 %v713, %v714
    %v716 = vsub.f32 %v707, %v715
    %v717 = vmul.f32 %v716, 1.442695
    %v718 = vpow.pop %v717
    %v719 = vsel %vm708, %v718, 0.0
    %v720 = vrot.slane %v719, 4
    %v721 = vadd.f32 %v719, %v720
    %v722 = vrot.slane %v721, 2
    %v723 = vadd.f32 %v721, %v722
    %v724 = vrot.slane %v723, 1
    %v725 = vadd.f32 %v723, %v724
    %v726 = vrcp.pop %v725
    %v727 = vmul.f32 %v718, %v726
    %vm728 = vcmask 31744
    %v730 = vsel %vm728, %v727, 0
    %vm732 = vcmask 1043456
    %v734 = vsel %vm732, %v628, 0
    %736 = vmatprep.subr.mxu0 0.0
    %737 = vmatpush1.msra.mxu0 %v734
    %738 = vmatprep.subr.mxu0 0.0
    %739 = vmatpush1.msra.mxu0 0.0
    %740 = vmatprep.subr.mxu0 0.0
    %741 = vmatpush1.msra.mxu0 0.0
    %742 = vmatprep.subr.mxu0 0.0
    %743 = vmatpush1.msra.mxu0 0.0
    %744 = vmatprep.subr.mxu0 0.0
    %745 = vmatpush1.msra.mxu0 0.0
    %746 = vmatprep.subr.mxu0 0.0
    %747 = vmatpush1.msra.mxu0 0.0
    %748 = vmatprep.subr.mxu0 0.0
    %749 = vmatpush1.msra.mxu0 0.0
    %750 = vmatprep.subr.mxu0 0.0
    %751 = vmatpush1.msra.mxu0 0.0
    %752 = vmatprep.subr.mxu0 0.0
    %753 = vmatpush1.msra.mxu0 0.0
    %754 = vmatprep.subr.mxu0 0.0
    %755 = vmatpush1.msra.mxu0 0.0
    %756 = vmatprep.subr.mxu0 0.0
    %757 = vmatpush1.msra.mxu0 0.0
    %758 = vmatprep.subr.mxu0 0.0
    %759 = vmatpush1.msra.mxu0 0.0
    %760 = vmatprep.subr.mxu0 0.0
    %761 = vmatpush1.msra.mxu0 0.0
    %762 = vmatprep.subr.mxu0 0.0
    %763 = vmatpush1.msra.mxu0 0.0
    %764 = vmatprep.subr.mxu0 0.0
    %765 = vmatpush1.msra.mxu0 0.0
    %766 = vmatprep.subr.mxu0 0.0
    %767 = vmatpush1.msra.mxu0 0.0
    %768 = vmatprep.subr.mxu0 0.0
    %769 = vmatpush1.msra.mxu0 0.0
    %770 = vmatprep.subr.mxu0 0.0
    %771 = vmatpush1.msra.mxu0 0.0
    %772 = vmatprep.subr.mxu0 0.0
    %773 = vmatpush1.msra.mxu0 0.0
    %774 = vmatprep.subr.mxu0 0.0
    %775 = vmatpush1.msra.mxu0 0.0
    %776 = vmatprep.subr.mxu0 0.0
    %777 = vmatpush1.msra.mxu0 0.0
    %778 = vmatprep.subr.mxu0 0.0
    %779 = vmatpush1.msra.mxu0 0.0
    %780 = vmatprep.subr.mxu0 0.0
    %781 = vmatpush1.msra.mxu0 0.0
    %782 = vmatprep.subr.mxu0 0.0
    %783 = vmatpush1.msra.mxu0 0.0
    %784 = vmatprep.subr.mxu0 0.0
    %785 = vmatpush1.msra.mxu0 0.0
    %786 = vmatprep.subr.mxu0 0.0
    %787 = vmatpush1.msra.mxu0 0.0
    %788 = vmatprep.subr.mxu0 0.0
    %789 = vmatpush1.msra.mxu0 0.0
    %790 = vmatprep.subr.mxu0 0.0
    %791 = vmatpush1.msra.mxu0 0.0
    %792 = vmatprep.subr.mxu0 0.0
    %793 = vmatpush1.msra.mxu0 0.0
    %794 = vmatprep.subr.mxu0 0.0
    %795 = vmatpush1.msra.mxu0 0.0
    %796 = vmatprep.subr.mxu0 0.0
    %797 = vmatpush1.msra.mxu0 0.0
    %798 = vmatprep.subr.mxu0 0.0
    %799 = vmatpush1.msra.mxu0 0.0
    %800 = vmatprep.mubr.f32.mxu0 0.0
    %801 = vmatmul.mubr.f32.gmra.mrb[0].mxu0 %v730
    %v802 = vpop.f32.mrb[0].mxu0
    %v803 = vadd.f32 0.0, %v802
    %v804 = vpop.f32.mrb[0].mxu0
    %805 = vdwg.mxu0
    %807 = vrot.lane.b32.xlu0 %v615, 64
    %v808 = vpop.permute.xlu0 %807
    %v810 = vmul.f32 %v803, %v808
    %vm811 = vcmask 519168
    %v812 = vsel %vm811, %v810, 0.0
    %v813 = vrot.slane %v812, 4
    %v814 = vadd.f32 %v812, %v813
    %v815 = vrot.slane %v814, 2
    %v816 = vadd.f32 %v814, %v815
    %v817 = vrot.slane %v816, 1
    %v818 = vadd.f32 %v816, %v817
    %v819 = vlaneseq
    %v820 = vshrl.u32 %v819, 7
    %v821 = vsub.s32 1, %v820
    %v822 = vrot.slane %v533, %v821
    %v823 = vmul.f32 %v822, %v615
    %v825 = vrot.slane %v823, 4
    %v826 = vsel %vm409, %v825, 0
    %828 = vmatprep.subr.mxu0 0.0
    %829 = vmatpush1.msra.mxu0 %v620
    %830 = vmatprep.subr.mxu0 0.0
    %831 = vmatpush1.msra.mxu0 %v621
    %832 = vmatprep.subr.mxu0 0.0
    %833 = vmatpush1.msra.mxu0 %v622
    %834 = vmatprep.subr.mxu0 0.0
    %835 = vmatpush1.msra.mxu0 %v623
    %836 = vmatprep.subr.mxu0 0.0
    %837 = vmatpush1.msra.mxu0 %v624
    %838 = vmatprep.subr.mxu0 0.0
    %839 = vmatpush1.msra.mxu0 %v625
    %840 = vmatprep.subr.mxu0 0.0
    %841 = vmatpush1.msra.mxu0 %v626
    %842 = vmatprep.subr.mxu0 0.0
    %843 = vmatpush1.msra.mxu0 %v627
    %844 = vmatprep.subr.mxu0 0.0
    %845 = vmatpush1.msra.mxu0 0.0
    %846 = vmatprep.subr.mxu0 0.0
    %847 = vmatpush1.msra.mxu0 0.0
    %848 = vmatprep.subr.mxu0 0.0
    %849 = vmatpush1.msra.mxu0 0.0
    %850 = vmatprep.subr.mxu0 0.0
    %851 = vmatpush1.msra.mxu0 0.0
    %852 = vmatprep.subr.mxu0 0.0
    %853 = vmatpush1.msra.mxu0 0.0
    %854 = vmatprep.subr.mxu0 0.0
    %855 = vmatpush1.msra.mxu0 0.0
    %856 = vmatprep.subr.mxu0 0.0
    %857 = vmatpush1.msra.mxu0 0.0
    %858 = vmatprep.subr.mxu0 0.0
    %859 = vmatpush1.msra.mxu0 0.0
    %860 = vmatprep.subr.mxu0 0.0
    %861 = vmatpush1.msra.mxu0 0.0
    %862 = vmatprep.subr.mxu0 0.0
    %863 = vmatpush1.msra.mxu0 0.0
    %864 = vmatprep.subr.mxu0 0.0
    %865 = vmatpush1.msra.mxu0 0.0
    %866 = vmatprep.subr.mxu0 0.0
    %867 = vmatpush1.msra.mxu0 0.0
    %868 = vmatprep.subr.mxu0 0.0
    %869 = vmatpush1.msra.mxu0 0.0
    %870 = vmatprep.subr.mxu0 0.0
    %871 = vmatpush1.msra.mxu0 0.0
    %872 = vmatprep.subr.mxu0 0.0
    %873 = vmatpush1.msra.mxu0 0.0
    %874 = vmatprep.subr.mxu0 0.0
    %875 = vmatpush1.msra.mxu0 0.0
    %876 = vmatprep.subr.mxu0 0.0
    %877 = vmatpush1.msra.mxu0 0.0
    %878 = vmatprep.subr.mxu0 0.0
    %879 = vmatpush1.msra.mxu0 0.0
    %880 = vmatprep.subr.mxu0 0.0
    %881 = vmatpush1.msra.mxu0 0.0
    %882 = vmatprep.subr.mxu0 0.0
    %883 = vmatpush1.msra.mxu0 0.0
    %884 = vmatprep.subr.mxu0 0.0
    %885 = vmatpush1.msra.mxu0 0.0
    %886 = vmatprep.subr.mxu0 0.0
    %887 = vmatpush1.msra.mxu0 0.0
    %888 = vmatprep.subr.mxu0 0.0
    %889 = vmatpush1.msra.mxu0 0.0
    %890 = vmatprep.subr.mxu0 0.0
    %891 = vmatpush1.msra.mxu0 0.0
    %892 = vmatprep.mubr.f32.mxu0 0.0
    %893 = vmatmul.mubr.f32.gmra.mrb[0].mxu0 %v826
    %v894 = vpop.f32.mrb[0].mxu0
    %v895 = vadd.f32 0.0, %v894
    %v896 = vpop.f32.mrb[0].mxu0
    %897 = vdwg.mxu0
    %v898 = vmul.f32 %v895, 0.25
    %v899 = vsel %vm708, %v898, -inf
    %v900 = vrot.slane %v899, 4
    %v901 = vmax.f32 %v899, %v900
    %v902 = vrot.slane %v901, 2
    %v903 = vmax.f32 %v901, %v902
    %v904 = vrot.slane %v903, 1
    %v905 = vmax.f32 %v903, %v904
    %v906 = vsub.f32 %v898, %v905
    %v907 = vmul.f32 %v906, 1.442695
    %v908 = vpow.pop %v907
    %v909 = vsel %vm708, %v908, 0.0
    %v910 = vrot.slane %v909, 4
    %v911 = vadd.f32 %v909, %v910
    %v912 = vrot.slane %v911, 2
    %v913 = vadd.f32 %v911, %v912
    %v914 = vrot.slane %v913, 1
    %v915 = vadd.f32 %v913, %v914
    %v916 = vrcp.pop %v915
    %v917 = vmul.f32 %v908, %v916
    %v919 = vsel %vm728, %v917, 0
    %921 = vmatprep.subr.mxu0 0.0
    %922 = vmatpush1.msra.mxu0 %v734
    %923 = vmatprep.subr.mxu0 0.0
    %924 = vmatpush1.msra.mxu0 0.0
    %925 = vmatprep.subr.mxu0 0.0
    %926 = vmatpush1.msra.mxu0 0.0
    %927 = vmatprep.subr.mxu0 0.0
    %928 = vmatpush1.msra.mxu0 0.0
    %929 = vmatprep.subr.mxu0 0.0
    %930 = vmatpush1.msra.mxu0 0.0
    %931 = vmatprep.subr.mxu0 0.0
    %932 = vmatpush1.msra.mxu0 0.0
    %933 = vmatprep.subr.mxu0 0.0
    %934 = vmatpush1.msra.mxu0 0.0
    %935 = vmatprep.subr.mxu0 0.0
    %936 = vmatpush1.msra.mxu0 0.0
    %937 = vmatprep.subr.mxu0 0.0
    %938 = vmatpush1.msra.mxu0 0.0
    %939 = vmatprep.subr.mxu0 0.0
    %940 = vmatpush1.msra.mxu0 0.0
    %941 = vmatprep.subr.mxu0 0.0
    %942 = vmatpush1.msra.mxu0 0.0
    %943 = vmatprep.subr.mxu0 0.0
    %944 = vmatpush1.msra.mxu0 0.0
    %945 = vmatprep.subr.mxu0 0.0
    %946 = vmatpush1.msra.mxu0 0.0
    %947 = vmatprep.subr.mxu0 0.0
    %948 = vmatpush1.msra.mxu0 0.0
    %949 = vmatprep.subr.mxu0 0.0
    %950 = vmatpush1.msra.mxu0 0.0
    %951 = vmatprep.subr.mxu0 0.0
    %952 = vmatpush1.msra.mxu0 0.0
    %953 = vmatprep.subr.mxu0 0.0
    %954 = vmatpush1.msra.mxu0 0.0
    %955 = vmatprep.subr.mxu0 0.0
    %956 = vmatpush1.msra.mxu0 0.0
    %957 = vmatprep.subr.mxu0 0.0
    %958 = vmatpush1.msra.mxu0 0.0
    %959 = vmatprep.subr.mxu0 0.0
    %960 = vmatpush1.msra.mxu0 0.0
    %961 = vmatprep.subr.mxu0 0.0
    %962 = vmatpush1.msra.mxu0 0.0
    %963 = vmatprep.subr.mxu0 0.0
    %964 = vmatpush1.msra.mxu0 0.0
    %965 = vmatprep.subr.mxu0 0.0
    %966 = vmatpush1.msra.mxu0 0.0
    %967 = vmatprep.subr.mxu0 0.0
    %968 = vmatpush1.msra.mxu0 0.0
    %969 = vmatprep.subr.mxu0 0.0
    %970 = vmatpush1.msra.mxu0 0.0
    %971 = vmatprep.subr.mxu0 0.0
    %972 = vmatpush1.msra.mxu0 0.0
    %973 = vmatprep.subr.mxu0 0.0
    %974 = vmatpush1.msra.mxu0 0.0
    %975 = vmatprep.subr.mxu0 0.0
    %976 = vmatpush1.msra.mxu0 0.0
    %977 = vmatprep.subr.mxu0 0.0
    %978 = vmatpush1.msra.mxu0 0.0
    %979 = vmatprep.subr.mxu0 0.0
    %980 = vmatpush1.msra.mxu0 0.0
    %981 = vmatprep.subr.mxu0 0.0
    %982 = vmatpush1.msra.mxu0 0.0
    %983 = vmatprep.subr.mxu0 0.0
    %984 = vmatpush1.msra.mxu0 0.0
    %985 = vmatprep.mubr.f32.mxu0 0.0
    %986 = vmatmul.mubr.f32.gmra.mrb[0].mxu0 %v919
    %v987 = vpop.f32.mrb[0].mxu0
    %v988 = vadd.f32 0.0, %v987
    %v989 = vpop.f32.mrb[0].mxu0
    %990 = vdwg.mxu0
    %v991 = vrot.slane %v615, 4
    %992 = vrot.lane.b32.xlu0 %v991, 64
    %v993 = vpop.permute.xlu0 %992
    %v995 = vmul.f32 %v988, %v993
    %v996 = vsel %vm811, %v995, 0.0
    %v997 = vrot.slane %v996, 4
    %v998 = vadd.f32 %v996, %v997
    %v999 = vrot.slane %v998, 2
    %v1000 = vadd.f32 %v998, %v999
    %v1001 = vrot.slane %v1000, 1
    %v1002 = vadd.f32 %v1000, %v1001
    %vm1003 = vcmask 1040384
    %v1004 = vsel %vm1003, %v818, %v1002
    %v1005 = vpack.c.bf16 %v1004, %v1004
    %v1006 = vld [vmem:[#allocation17] sm:$0xf]
    %v1007 = vld [vmem:[#allocation17 + $0x4] sm:$0xf]
    %v1008 = vld [vmem:[#allocation17 + $0x8] sm:$0xf]
    %v1009 = vld [vmem:[#allocation17 + $0xc] sm:$0xf]
    %v1010 = vld [vmem:[#allocation17 + $0x10] sm:$0xf]
    %v1011 = vld [vmem:[#allocation17 + $0x14] sm:$0xf]
    %v1012 = vld [vmem:[#allocation17 + $0x18] sm:$0xf]
    %v1013 = vld [vmem:[#allocation17 + $0x1c] sm:$0xf]
    %v1014 = vld [vmem:[#allocation19] sm:$0x1]
    %v1016 = vlaneseq
    %v1017 = vshrl.u32 %v1016, 7
    %v1018 = vsub.s32 0, %v1017
    %v1019 = vrot.slane %v1014, %v1018
    %v1029 = vunpack.c.l.b16 %v1006
    %v1030 = vunpack.c.l.b16 %v1007
    %v1031 = vunpack.c.l.b16 %v1008
    %v1032 = vunpack.c.l.b16 %v1009
    %v1033 = vunpack.c.l.b16 %v1010
    %v1034 = vunpack.c.l.b16 %v1011
    %v1035 = vunpack.c.l.b16 %v1012
    %v1036 = vunpack.c.l.b16 %v1013
    %v1037 = vpack.c.b16 %v1030, %v1029
    %v1038 = vpack.c.b16 %v1032, %v1031
    %v1039 = vpack.c.b16 %v1034, %v1033
    %v1040 = vpack.c.b16 %v1036, %v1035
    %v1046 = vsel %vm409, %v1005, 0
    %1048 = vmatprep.subr.bf16.mxu0 0
    %1049 = vmatpush1.bf16.msra.mxu0 %v1037
    %1050 = vmatprep.subr.bf16.mxu0 0
    %1051 = vmatpush1.bf16.msra.mxu0 %v1038
    %1052 = vmatprep.subr.bf16.mxu0 0
    %1053 = vmatpush1.bf16.msra.mxu0 %v1039
    %1054 = vmatprep.subr.bf16.mxu0 0
    %1055 = vmatpush1.bf16.msra.mxu0 %v1040
    %1056 = vmatprep.subr.bf16.mxu0 0
    %1057 = vmatpush1.bf16.msra.mxu0 0
    %1058 = vmatprep.subr.bf16.mxu0 0
    %1059 = vmatpush1.bf16.msra.mxu0 0
    %1060 = vmatprep.subr.bf16.mxu0 0
    %1061 = vmatpush1.bf16.msra.mxu0 0
    %1062 = vmatprep.subr.bf16.mxu0 0
    %1063 = vmatpush1.bf16.msra.mxu0 0
    %1064 = vmatprep.subr.bf16.mxu0 0
    %1065 = vmatpush1.bf16.msra.mxu0 0
    %1066 = vmatprep.subr.bf16.mxu0 0
    %1067 = vmatpush1.bf16.msra.mxu0 0
    %1068 = vmatprep.subr.bf16.mxu0 0
    %1069 = vmatpush1.bf16.msra.mxu0 0
    %1070 = vmatprep.subr.bf16.mxu0 0
    %1071 = vmatpush1.bf16.msra.mxu0 0
    %1072 = vmatprep.subr.bf16.mxu0 0
    %1073 = vmatpush1.bf16.msra.mxu0 0
    %1074 = vmatprep.subr.bf16.mxu0 0
    %1075 = vmatpush1.bf16.msra.mxu0 0
    %1076 = vmatprep.subr.bf16.mxu0 0
    %1077 = vmatpush1.bf16.msra.mxu0 0
    %1078 = vmatprep.subr.bf16.mxu0 0
    %1079 = vmatpush1.bf16.msra.mxu0 0
    %1080 = vmatprep.mubr.bf16.mxu0 0
    %1081 = vmatmul.mubr.bf16.gmra.mrb[0].mxu0 %v1046
    %v1082 = vpop.f32.mrb[0].mxu0
    %v1083 = vadd.f32 %v1019, %v1082
    %v1084 = vpop.f32.mrb[0].mxu0
    %v1085 = vpop.f32.mrb[0].mxu0
    %v1086 = vpop.f32.mrb[0].mxu0
    %1087 = vdwg.mxu0
    %v1088 = vadd.f32 %v402, %v1083
    %1089 = vst.msk [vmem:[#allocation33] sm:$0x3] %vm439, %v1088
    %v1090 = vld [vmem:[#allocation20] sm:$0x1]
    %v1091 = vld [vmem:[#allocation22] sm:$0x1]
    %v1093 = vlaneseq
    %v1094 = vshrl.u32 %v1093, 7
    %v1095 = vsub.s32 0, %v1094
    %v1096 = vrot.slane %v1090, %v1095
    %v1098 = vmul.f32 %v423, %v1096
    %v1100 = vlaneseq
    %v1101 = vshrl.u32 %v1100, 7
    %v1102 = vsub.s32 0, %v1101
    %v1103 = vrot.slane %v1091, %v1102
    %v1105 = vadd.f32 %v1098, %v1103
    %v1106 = vpack.c.bf16 %v1105, %v1105
    %v1107 = vld [vmem:[#allocation23] sm:$0xf]
    %v1108 = vld [vmem:[#allocation23 + $0x4] sm:$0xf]
    %v1109 = vld [vmem:[#allocation23 + $0x8] sm:$0xf]
    %v1110 = vld [vmem:[#allocation23 + $0xc] sm:$0xf]
    %v1111 = vld [vmem:[#allocation23 + $0x10] sm:$0xf]
    %v1112 = vld [vmem:[#allocation23 + $0x14] sm:$0xf]
    %v1113 = vld [vmem:[#allocation23 + $0x18] sm:$0xf]
    %v1114 = vld [vmem:[#allocation23 + $0x1c] sm:$0xf]
    %v1115 = vld [vmem:[#allocation25] sm:$0x1]
    %v1117 = vlaneseq
    %v1118 = vshrl.u32 %v1117, 7
    %v1119 = vsub.s32 0, %v1118
    %v1120 = vrot.slane %v1115, %v1119
    %v1130 = vunpack.c.l.b16 %v1107
    %v1131 = vunpack.c.l.b16 %v1108
    %v1132 = vunpack.c.l.b16 %v1109
    %v1133 = vunpack.c.l.b16 %v1110
    %v1134 = vunpack.c.l.b16 %v1111
    %v1135 = vunpack.c.l.b16 %v1112
    %v1136 = vunpack.c.l.b16 %v1113
    %v1137 = vunpack.c.l.b16 %v1114
    %v1138 = vpack.c.b16 %v1131, %v1130
    %v1139 = vpack.c.b16 %v1133, %v1132
    %v1140 = vpack.c.b16 %v1135, %v1134
    %v1141 = vpack.c.b16 %v1137, %v1136
    %v1147 = vsel %vm409, %v1106, 0
    %1149 = vmatprep.subr.bf16.mxu0 0
    %1150 = vmatpush1.bf16.msra.mxu0 %v1138
    %1151 = vmatprep.subr.bf16.mxu0 0
    %1152 = vmatpush1.bf16.msra.mxu0 %v1139
    %1153 = vmatprep.subr.bf16.mxu0 0
    %1154 = vmatpush1.bf16.msra.mxu0 %v1140
    %1155 = vmatprep.subr.bf16.mxu0 0
    %1156 = vmatpush1.bf16.msra.mxu0 %v1141
    %1157 = vmatprep.subr.bf16.mxu0 0
    %1158 = vmatpush1.bf16.msra.mxu0 0
    %1159 = vmatprep.subr.bf16.mxu0 0
    %1160 = vmatpush1.bf16.msra.mxu0 0
    %1161 = vmatprep.subr.bf16.mxu0 0
    %1162 = vmatpush1.bf16.msra.mxu0 0
    %1163 = vmatprep.subr.bf16.mxu0 0
    %1164 = vmatpush1.bf16.msra.mxu0 0
    %1165 = vmatprep.subr.bf16.mxu0 0
    %1166 = vmatpush1.bf16.msra.mxu0 0
    %1167 = vmatprep.subr.bf16.mxu0 0
    %1168 = vmatpush1.bf16.msra.mxu0 0
    %1169 = vmatprep.subr.bf16.mxu0 0
    %1170 = vmatpush1.bf16.msra.mxu0 0
    %1171 = vmatprep.subr.bf16.mxu0 0
    %1172 = vmatpush1.bf16.msra.mxu0 0
    %1173 = vmatprep.subr.bf16.mxu0 0
    %1174 = vmatpush1.bf16.msra.mxu0 0
    %1175 = vmatprep.subr.bf16.mxu0 0
    %1176 = vmatpush1.bf16.msra.mxu0 0
    %1177 = vmatprep.subr.bf16.mxu0 0
    %1178 = vmatpush1.bf16.msra.mxu0 0
    %1179 = vmatprep.subr.bf16.mxu0 0
    %1180 = vmatpush1.bf16.msra.mxu0 0
    %1181 = vmatprep.mubr.bf16.mxu0 0
    %1182 = vmatmul.mubr.bf16.gmra.mrb[0].mxu0 %v1147
    %v1183 = vpop.f32.mrb[0].mxu0
    %v1184 = vadd.f32 %v1120, %v1183
    %v1185 = vpop.f32.mrb[0].mxu0
    %v1186 = vpop.f32.mrb[0].mxu0
    %v1187 = vpop.f32.mrb[0].mxu0
    %1188 = vdwg.mxu0
    %v1189 = vmul.f32 %v1184, 0.5
    %v1190 = vmul.f32 %v1184, 0.044715
    %v1191 = vmul.f32 %v1190, %v1184
    %v1192 = vmul.f32 %v1191, %v1184
    %v1193 = vadd.f32 %v1184, %v1192
    %v1194 = vmul.f32 %v1193, 0.7978846
    %v1195 = vtanh.pop %v1194
    %v1196 = vadd.f32 %v1195, 1.0
    %v1197 = vmul.f32 %v1189, %v1196
    %v1198 = vpack.c.bf16 %v1197, %v1197
    %v1199 = vld [vmem:[#allocation26] sm:$0xf]
    %v1200 = vld [vmem:[#allocation26 + $0x4] sm:$0xf]
    %v1201 = vld [vmem:[#allocation26 + $0x8] sm:$0xf]
    %v1202 = vld [vmem:[#allocation26 + $0xc] sm:$0xf]
    %v1203 = vld [vmem:[#allocation26 + $0x10] sm:$0xf]
    %v1204 = vld [vmem:[#allocation26 + $0x14] sm:$0xf]
    %v1205 = vld [vmem:[#allocation26 + $0x18] sm:$0xf]
    %v1206 = vld [vmem:[#allocation26 + $0x1c] sm:$0xf]
    %v1207 = vld [vmem:[#allocation26 + $0x20] sm:$0xf]
    %v1208 = vld [vmem:[#allocation26 + $0x24] sm:$0xf]
    %v1209 = vld [vmem:[#allocation26 + $0x28] sm:$0xf]
    %v1210 = vld [vmem:[#allocation26 + $0x2c] sm:$0xf]
    %v1211 = vld [vmem:[#allocation26 + $0x30] sm:$0xf]
    %v1212 = vld [vmem:[#allocation26 + $0x34] sm:$0xf]
    %v1213 = vld [vmem:[#allocation26 + $0x38] sm:$0xf]
    %v1214 = vld [vmem:[#allocation26 + $0x3c] sm:$0xf]
    %v1215 = vld [vmem:[#allocation28] sm:$0x1]
    %v1217 = vlaneseq
    %v1218 = vshrl.u32 %v1217, 7
    %v1219 = vsub.s32 0, %v1218
    %v1220 = vrot.slane %v1215, %v1219
    %v1238 = vunpack.c.l.b16 %v1199
    %v1239 = vunpack.c.l.b16 %v1200
    %v1240 = vunpack.c.l.b16 %v1201
    %v1241 = vunpack.c.l.b16 %v1202
    %v1242 = vunpack.c.l.b16 %v1203
    %v1243 = vunpack.c.l.b16 %v1204
    %v1244 = vunpack.c.l.b16 %v1205
    %v1245 = vunpack.c.l.b16 %v1206
    %v1246 = vunpack.c.l.b16 %v1207
    %v1247 = vunpack.c.l.b16 %v1208
    %v1248 = vunpack.c.l.b16 %v1209
    %v1249 = vunpack.c.l.b16 %v1210
    %v1250 = vunpack.c.l.b16 %v1211
    %v1251 = vunpack.c.l.b16 %v1212
    %v1252 = vunpack.c.l.b16 %v1213
    %v1253 = vunpack.c.l.b16 %v1214
    %v1254 = vpack.c.b16 %v1239, %v1238
    %v1255 = vpack.c.b16 %v1241, %v1240
    %v1256 = vpack.c.b16 %v1243, %v1242
    %v1257 = vpack.c.b16 %v1245, %v1244
    %v1258 = vpack.c.b16 %v1247, %v1246
    %v1259 = vpack.c.b16 %v1249, %v1248
    %v1260 = vpack.c.b16 %v1251, %v1250
    %v1261 = vpack.c.b16 %v1253, %v1252
    %1270 = vmatprep.subr.bf16.mxu0 0
    %1271 = vmatpush1.bf16.msra.mxu0 %v1254
    %1272 = vmatprep.subr.bf16.mxu0 0
    %1273 = vmatpush1.bf16.msra.mxu0 %v1255
    %1274 = vmatprep.subr.bf16.mxu0 0
    %1275 = vmatpush1.bf16.msra.mxu0 %v1256
    %1276 = vmatprep.subr.bf16.mxu0 0
    %1277 = vmatpush1.bf16.msra.mxu0 %v1257
    %1278 = vmatprep.subr.bf16.mxu0 0
    %1279 = vmatpush1.bf16.msra.mxu0 %v1258
    %1280 = vmatprep.subr.bf16.mxu0 0
    %1281 = vmatpush1.bf16.msra.mxu0 %v1259
    %1282 = vmatprep.subr.bf16.mxu0 0
    %1283 = vmatpush1.bf16.msra.mxu0 %v1260
    %1284 = vmatprep.subr.bf16.mxu0 0
    %1285 = vmatpush1.bf16.msra.mxu0 %v1261
    %1286 = vmatprep.subr.bf16.mxu0 0
    %1287 = vmatpush1.bf16.msra.mxu0 0
    %1288 = vmatprep.subr.bf16.mxu0 0
    %1289 = vmatpush1.bf16.msra.mxu0 0
    %1290 = vmatprep.subr.bf16.mxu0 0
    %1291 = vmatpush1.bf16.msra.mxu0 0
    %1292 = vmatprep.subr.bf16.mxu0 0
    %1293 = vmatpush1.bf16.msra.mxu0 0
    %1294 = vmatprep.subr.bf16.mxu0 0
    %1295 = vmatpush1.bf16.msra.mxu0 0
    %1296 = vmatprep.subr.bf16.mxu0 0
    %1297 = vmatpush1.bf16.msra.mxu0 0
    %1298 = vmatprep.subr.bf16.mxu0 0
    %1299 = vmatpush1.bf16.msra.mxu0 0
    %1300 = vmatprep.subr.bf16.mxu0 0
    %1301 = vmatpush1.bf16.msra.mxu0 0
    %1302 = vmatprep.mubr.bf16.mxu0 0
    %1303 = vmatmul.mubr.bf16.gmra.mrb[0].mxu0 %v1198
    %v1304 = vpop.f32.mrb[0].mxu0
    %v1305 = vadd.f32 %v1220, %v1304
    %v1306 = vpop.f32.mrb[0].mxu0
    %v1307 = vpop.f32.mrb[0].mxu0
    %v1308 = vpop.f32.mrb[0].mxu0
    %1309 = vdwg.mxu0
    %v1310 = vadd.f32 %v358, %v1305
    %1311 = vst.msk [vmem:[#allocation32] sm:$0xff] %vm409, %v1310
    // Predicated region
    $region154: #{_lambda_.8} parent=1 // pred_check
      _
    $region155: #{_lambda_.8} parent=1 // pred_check_branch
      %1313 = sbr.rel (0) target = $region157
    $region156: #{_lambda_.8} parent=1 // pred_region
      %s1315 = ssub.s32 128, 128
      %1316 = vsyncadd [#allocation4], %s1315
      %s1318 = sshll.u32 [#allocation32], 4
      %s1319 = int_to_ptr.vmem [resolvable:$true] %s1318
      %1321 = dma.vmem_to_hbm [thread:$0]  %s1319, 128, %s19, [#allocation4]
    $region157: #{_lambda_.8} parent=1 // pred_fallthru
      _
    // Predicated region
    $region158: #{_lambda_.8} parent=1 // pred_check
      _
    $region159: #{_lambda_.8} parent=1 // pred_check_branch
      %1323 = sbr.rel (0) target = $region161
    $region160: #{_lambda_.8} parent=1 // pred_region
      %s1325 = ssub.s32 32, 32
      %1326 = vsyncadd [#allocation34], %s1325
      %s1328 = sshll.u32 [#allocation33], 4
      %s1329 = int_to_ptr.vmem [resolvable:$true] %s1328
      %1331 = dma.vmem_to_hbm [thread:$0]  %s1329, 32, %s20, [#allocation34]
    $region161: #{_lambda_.8} parent=1 // pred_fallthru
      _
    // Predicated region
    $region162: #{_lambda_.8} parent=1 // pred_check
      _
    $region163: #{_lambda_.8} parent=1 // pred_check_branch
      %1333 = sbr.rel (0) target = $region165
    $region164: #{_lambda_.8} parent=1 // pred_region
      %1334 = dma.done [#allocation4], 128
    $region165: #{_lambda_.8} parent=1 // pred_fallthru
      _
    // Predicated region
    $region166: #{_lambda_.8} parent=1 // pred_check
      _
    $region167: #{_lambda_.8} parent=1 // pred_check_branch
      %1336 = sbr.rel (0) target = $region169
    $region168: #{_lambda_.8} parent=1 // pred_region
      %1337 = dma.done [#allocation34], 32
    $region169: #{_lambda_.8} parent=1 // pred_fallthru
      _
    %1338 = vsyncpa [#allocation3], 1
    %1339 = vsyncpa [#allocation6], 1
    %1340 = vsyncpa [#allocation9], 1
    %1341 = vsyncpa [#allocation12], 1
    %1342 = vsyncpa [#allocation15], 1
    %1343 = vsyncpa [#allocation18], 1
    %1344 = vsyncpa [#allocation21], 1
    %1345 = vsyncpa [#allocation24], 1
    %1346 = vsyncpa [#allocation27], 1
    %1347 = vsyncpa [#allocation30], 1
    %1348 = vsyncpa [#allocation4], 1
    %1349 = vsyncpa [#allocation34], 1

// kernel: _lambda_.9
$region0: #{_lambda_.9}
  #allocation0 [shape = 'u32[]', space=smem, size = 0x4, offset = 0x4, fixed_abs, tag = 'smem constant byte address 0x4 - core index']
  #allocation1 [shape = 'u32[144,128]{1,0:T(1,128)}', space=vmem, size = 0x12000, scoped, tag = 'internal scratch']
  %s0 = inlined_call_operand.hbm [shape: f32[8,64], index: 0, kind: input, shape index: {}]
  %s1 = inlined_call_operand.hbm [shape: f32[2,64], index: 1, kind: input, shape index: {}]
  %s2 = inlined_call_operand.hbm [shape: f32[1,64], index: 2, kind: input, shape index: {}]
  %s3 = inlined_call_operand.hbm [shape: f32[1,64], index: 3, kind: input, shape index: {}]
  %s4 = inlined_call_operand.hbm [shape: bf16[64,64], index: 4, kind: input, shape index: {}]
  %s5 = inlined_call_operand.hbm [shape: f32[1,64], index: 5, kind: input, shape index: {}]
  %s6 = inlined_call_operand.hbm [shape: bf16[64,128], index: 6, kind: input, shape index: {}]
  %s7 = inlined_call_operand.hbm [shape: f32[1,128], index: 7, kind: input, shape index: {}]
  %s8 = inlined_call_operand.hbm [shape: bf16[64,64], index: 8, kind: input, shape index: {}]
  %s9 = inlined_call_operand.hbm [shape: f32[1,64], index: 9, kind: input, shape index: {}]
  %s10 = inlined_call_operand.hbm [shape: f32[1,64], index: 10, kind: input, shape index: {}]
  %s11 = inlined_call_operand.hbm [shape: f32[1,64], index: 11, kind: input, shape index: {}]
  %s12 = inlined_call_operand.hbm [shape: bf16[64,128], index: 12, kind: input, shape index: {}]
  %s13 = inlined_call_operand.hbm [shape: f32[1,128], index: 13, kind: input, shape index: {}]
  %s14 = inlined_call_operand.hbm [shape: bf16[128,64], index: 14, kind: input, shape index: {}]
  %s15 = inlined_call_operand.hbm [shape: f32[1,64], index: 15, kind: input, shape index: {}]
  %s16 = inlined_call_operand.hbm [shape: f32[64,4], index: 16, kind: input, shape index: {}]
  %s17 = inlined_call_operand.hbm [shape: f32[4,64], index: 17, kind: input, shape index: {}]
  %s18 = inlined_call_operand.hbm [shape: f32[1,64], index: 18, kind: input, shape index: {}]
  %s19 = inlined_call_operand.hbm [shape: f32[1,64], index: 19, kind: input, shape index: {}]
  %s20 = inlined_call_operand.hbm [shape: bf16[64,128], index: 20, kind: input, shape index: {}]
  %s21 = inlined_call_operand.hbm [shape: f32[1,128], index: 21, kind: input, shape index: {}]
  %s22 = inlined_call_operand.hbm [shape: f32[8,64], index: 22, kind: output, shape index: {0}]
  %s23 = inlined_call_operand.hbm [shape: f32[2,64], index: 23, kind: output, shape index: {1}]
  %s24 = inlined_call_operand.hbm [shape: f32[2,128], index: 24, kind: output, shape index: {2}]
  %25 = xla_tuple %s22, %s23, %s24
  %s26 = sld [smem:[#allocation0]]
  $region202: #{_lambda_.9} parent=0
    _
  %s28 = ssub.s32 1, %s26
  %s29 = scalar_select 0, %s28, %s26
  $region1: #{_lambda_.9} parent=0
    #allocation2 [shape = 'u8[4096]{0}', space=vmem, size = 0x1000, scoped, tag = 'input window, operand 0, single buffered']
    #allocation3 [shape = 's32[1]{0}', space=sflag, size = 0x4, scoped, tag = 'scoped memory for _lambda_.9']
    #allocation4 [shape = 's32[1]{0}', space=sflag, size = 0x4, scoped, tag = 'scoped memory for _lambda_.9']
    #allocation5 [shape = 'u8[1024]{0}', space=vmem, size = 0x400, scoped, tag = 'input window, operand 1, single buffered']
    #allocation6 [shape = 's32[1]{0}', space=sflag, size = 0x4, scoped, tag = 'scoped memory for _lambda_.9']
    #allocation7 [shape = 'u8[512]{0}', space=vmem, size = 0x400, scoped, tag = 'input window, operand 2, single buffered']
    #allocation8 [shape = 'u8[512]{0}', space=vmem, size = 0x400, scoped, tag = 'input window, operand 3, single buffered']
    #allocation9 [shape = 's32[1]{0}', space=sflag, size = 0x4, scoped, tag = 'scoped memory for _lambda_.9']
    #allocation10 [shape = 'u8[16384]{0}', space=vmem, size = 0x4000, scoped, tag = 'input window, operand 4, single buffered']
    #allocation11 [shape = 'u8[512]{0}', space=vmem, size = 0x400, scoped, tag = 'input window, operand 5, single buffered']
    #allocation12 [shape = 's32[1]{0}', space=sflag, size = 0x4, scoped, tag = 'scoped memory for _lambda_.9']
    #allocation13 [shape = 'u8[16384]{0}', space=vmem, size = 0x4000, scoped, tag = 'input window, operand 6, single buffered']
    #allocation14 [shape = 'u8[512]{0}', space=vmem, size = 0x400, scoped, tag = 'input window, operand 7, single buffered']
    #allocation15 [shape = 's32[1]{0}', space=sflag, size = 0x4, scoped, tag = 'scoped memory for _lambda_.9']
    #allocation16 [shape = 'u8[16384]{0}', space=vmem, size = 0x4000, scoped, tag = 'input window, operand 8, single buffered']
    #allocation17 [shape = 'u8[512]{0}', space=vmem, size = 0x400, scoped, tag = 'input window, operand 9, single buffered']
    #allocation18 [shape = 's32[1]{0}', space=sflag, size = 0x4, scoped, tag = 'scoped memory for _lambda_.9']
    #allocation19 [shape = 'u8[512]{0}', space=vmem, size = 0x400, scoped, tag = 'input window, operand 10, single buffered']
    #allocation20 [shape = 'u8[512]{0}', space=vmem, size = 0x400, scoped, tag = 'input window, operand 11, single buffered']
    #allocation21 [shape = 's32[1]{0}', space=sflag, size = 0x4, scoped, tag = 'scoped memory for _lambda_.9']
    #allocation22 [shape = 'u8[16384]{0}', space=vmem, size = 0x4000, scoped, tag = 'input window, operand 12, single buffered']
    #allocation23 [shape = 'u8[512]{0}', space=vmem, size = 0x400, scoped, tag = 'input window, operand 13, single buffered']
    #allocation24 [shape = 's32[1]{0}', space=sflag, size = 0x4, scoped, tag = 'scoped memory for _lambda_.9']
    #allocation25 [shape = 'u8[32768]{0}', space=vmem, size = 0x8000, scoped, tag = 'input window, operand 14, single buffered']
    #allocation26 [shape = 'u8[512]{0}', space=vmem, size = 0x400, scoped, tag = 'input window, operand 15, single buffered']
    #allocation27 [shape = 's32[1]{0}', space=sflag, size = 0x4, scoped, tag = 'scoped memory for _lambda_.9']
    #allocation28 [shape = 'u8[32768]{0}', space=vmem, size = 0x8000, scoped, tag = 'input window, operand 16, single buffered']
    #allocation29 [shape = 'u8[2048]{0}', space=vmem, size = 0x800, scoped, tag = 'input window, operand 17, single buffered']
    #allocation30 [shape = 's32[1]{0}', space=sflag, size = 0x4, scoped, tag = 'scoped memory for _lambda_.9']
    #allocation31 [shape = 'u8[512]{0}', space=vmem, size = 0x400, scoped, tag = 'input window, operand 18, single buffered']
    #allocation32 [shape = 'u8[512]{0}', space=vmem, size = 0x400, scoped, tag = 'input window, operand 19, single buffered']
    #allocation33 [shape = 's32[1]{0}', space=sflag, size = 0x4, scoped, tag = 'scoped memory for _lambda_.9']
    #allocation34 [shape = 'u8[16384]{0}', space=vmem, size = 0x4000, scoped, tag = 'input window, operand 20, single buffered']
    #allocation35 [shape = 'u8[512]{0}', space=vmem, size = 0x400, scoped, tag = 'input window, operand 21, single buffered']
    #allocation36 [shape = 's32[1]{0}', space=sflag, size = 0x4, scoped, tag = 'scoped memory for _lambda_.9']
    #allocation37 [shape = 'u8[4096]{0}', space=vmem, size = 0x1000, scoped, tag = 'output window, operand 0, single buffered']
    #allocation38 [shape = 'u8[1024]{0}', space=vmem, size = 0x400, scoped, tag = 'output window, operand 1, single buffered']
    #allocation39 [shape = 's32[1]{0}', space=sflag, size = 0x4, scoped, tag = 'scoped memory for _lambda_.9']
    #allocation40 [shape = 'u8[1024]{0}', space=vmem, size = 0x400, scoped, tag = 'output window, operand 2, single buffered']
    %30 = vsyncpa [#allocation3], 0
    %31 = vsyncpa [#allocation6], 0
    %32 = vsyncpa [#allocation9], 0
    %33 = vsyncpa [#allocation12], 0
    %34 = vsyncpa [#allocation15], 0
    %35 = vsyncpa [#allocation18], 0
    %36 = vsyncpa [#allocation21], 0
    %37 = vsyncpa [#allocation24], 0
    %38 = vsyncpa [#allocation27], 0
    %39 = vsyncpa [#allocation30], 0
    %40 = vsyncpa [#allocation33], 0
    %41 = vsyncpa [#allocation36], 0
    %42 = vsyncpa [#allocation4], 0
    %43 = vsyncpa [#allocation39], 0
    // Predicated region
    $region2: #{_lambda_.9} parent=1 // pred_check
      _
    $region3: #{_lambda_.9} parent=1 // pred_check_branch
      %45 = sbr.rel (0) target = $region5
    $region4: #{_lambda_.9} parent=1 // pred_region
      %s47 = ssub.s32 128, 128
      %48 = vsyncadd [#allocation3], %s47
      %s50 = sshll.u32 [#allocation2], 4
      %s51 = int_to_ptr.vmem [resolvable:$true] %s50
      %53 = dma.hbm_to_vmem [thread:$0]  %s0, 128, %s51, [#allocation3]
    $region5: #{_lambda_.9} parent=1 // pred_fallthru
      _
    // Predicated region
    $region6: #{_lambda_.9} parent=1 // pred_check
      _
    $region7: #{_lambda_.9} parent=1 // pred_check_branch
      %55 = sbr.rel (0) target = $region9
    $region8: #{_lambda_.9} parent=1 // pred_region
      %s57 = ssub.s32 32, 32
      %58 = vsyncadd [#allocation6], %s57
      %s60 = sshll.u32 [#allocation5], 4
      %s61 = int_to_ptr.vmem [resolvable:$true] %s60
      %63 = dma.hbm_to_vmem [thread:$0]  %s1, 32, %s61, [#allocation6]
    $region9: #{_lambda_.9} parent=1 // pred_fallthru
      _
    // Predicated region
    $region10: #{_lambda_.9} parent=1 // pred_check
      _
    $region11: #{_lambda_.9} parent=1 // pred_check_branch
      %65 = sbr.rel (0) target = $region13
    $region12: #{_lambda_.9} parent=1 // pred_region
      %s67 = ssub.s32 16, 16
      %68 = vsyncadd [#allocation6], %s67
      %s70 = sshll.u32 [#allocation7], 4
      %s71 = int_to_ptr.vmem [resolvable:$true] %s70
      %73 = dma.hbm_to_vmem [thread:$0]  %s2, 16, %s71, [#allocation6]
    $region13: #{_lambda_.9} parent=1 // pred_fallthru
      _
    // Predicated region
    $region14: #{_lambda_.9} parent=1 // pred_check
      _
    $region15: #{_lambda_.9} parent=1 // pred_check_branch
      %75 = sbr.rel (0) target = $region17
    $region16: #{_lambda_.9} parent=1 // pred_region
      %s77 = ssub.s32 16, 16
      %78 = vsyncadd [#allocation9], %s77
      %s80 = sshll.u32 [#allocation8], 4
      %s81 = int_to_ptr.vmem [resolvable:$true] %s80
      %83 = dma.hbm_to_vmem [thread:$0]  %s3, 16, %s81, [#allocation9]
    $region17: #{_lambda_.9} parent=1 // pred_fallthru
      _
    // Predicated region
    $region18: #{_lambda_.9} parent=1 // pred_check
      _
    $region19: #{_lambda_.9} parent=1 // pred_check_branch
      %85 = sbr.rel (0) target = $region21
    $region20: #{_lambda_.9} parent=1 // pred_region
      %s87 = ssub.s32 512, 512
      %88 = vsyncadd [#allocation9], %s87
      %s89 = sshll.u32 [#allocation10], 4
      %s90 = int_to_ptr.vmem [resolvable:$true] %s89
      %95 = dma.hbm_to_vmem [thread:$0]  %s4, 512, %s90, [#allocation9], 64, 64, 4
    $region21: #{_lambda_.9} parent=1 // pred_fallthru
      _
    // Predicated region
    $region22: #{_lambda_.9} parent=1 // pred_check
      _
    $region23: #{_lambda_.9} parent=1 // pred_check_branch
      %97 = sbr.rel (0) target = $region25
    $region24: #{_lambda_.9} parent=1 // pred_region
      %s99 = ssub.s32 16, 16
      %100 = vsyncadd [#allocation12], %s99
      %s102 = sshll.u32 [#allocation11], 4
      %s103 = int_to_ptr.vmem [resolvable:$true] %s102
      %105 = dma.hbm_to_vmem [thread:$0]  %s5, 16, %s103, [#allocation12]
    $region25: #{_lambda_.9} parent=1 // pred_fallthru
      _
    // Predicated region
    $region26: #{_lambda_.9} parent=1 // pred_check
      _
    $region27: #{_lambda_.9} parent=1 // pred_check_branch
      %107 = sbr.rel (0) target = $region29
    $region28: #{_lambda_.9} parent=1 // pred_region
      %s109 = ssub.s32 512, 512
      %110 = vsyncadd [#allocation12], %s109
      %s111 = sshll.u32 [#allocation13], 4
      %s112 = int_to_ptr.vmem [resolvable:$true] %s111
      %117 = dma.hbm_to_vmem [thread:$0]  %s6, 512, %s112, [#allocation12], 64, 64, 4
    $region29: #{_lambda_.9} parent=1 // pred_fallthru
      _
    // Predicated region
    $region30: #{_lambda_.9} parent=1 // pred_check
      _
    $region31: #{_lambda_.9} parent=1 // pred_check_branch
      %119 = sbr.rel (0) target = $region33
    $region32: #{_lambda_.9} parent=1 // pred_region
      %s121 = ssub.s32 16, 16
      %122 = vsyncadd [#allocation15], %s121
      %s124 = sshll.u32 [#allocation14], 4
      %s125 = int_to_ptr.vmem [resolvable:$true] %s124
      %127 = dma.hbm_to_vmem [thread:$0]  %s7, 16, %s125, [#allocation15]
    $region33: #{_lambda_.9} parent=1 // pred_fallthru
      _
    // Predicated region
    $region34: #{_lambda_.9} parent=1 // pred_check
      _
    $region35: #{_lambda_.9} parent=1 // pred_check_branch
      %129 = sbr.rel (0) target = $region37
    $region36: #{_lambda_.9} parent=1 // pred_region
      %s131 = ssub.s32 512, 512
      %132 = vsyncadd [#allocation15], %s131
      %s133 = sshll.u32 [#allocation16], 4
      %s134 = int_to_ptr.vmem [resolvable:$true] %s133
      %139 = dma.hbm_to_vmem [thread:$0]  %s8, 512, %s134, [#allocation15], 64, 64, 4
    $region37: #{_lambda_.9} parent=1 // pred_fallthru
      _
    // Predicated region
    $region38: #{_lambda_.9} parent=1 // pred_check
      _
    $region39: #{_lambda_.9} parent=1 // pred_check_branch
      %141 = sbr.rel (0) target = $region41
    $region40: #{_lambda_.9} parent=1 // pred_region
      %s143 = ssub.s32 16, 16
      %144 = vsyncadd [#allocation18], %s143
      %s146 = sshll.u32 [#allocation17], 4
      %s147 = int_to_ptr.vmem [resolvable:$true] %s146
      %149 = dma.hbm_to_vmem [thread:$0]  %s9, 16, %s147, [#allocation18]
    $region41: #{_lambda_.9} parent=1 // pred_fallthru
      _
    // Predicated region
    $region42: #{_lambda_.9} parent=1 // pred_check
      _
    $region43: #{_lambda_.9} parent=1 // pred_check_branch
      %151 = sbr.rel (0) target = $region45
    $region44: #{_lambda_.9} parent=1 // pred_region
      %s153 = ssub.s32 16, 16
      %154 = vsyncadd [#allocation18], %s153
      %s156 = sshll.u32 [#allocation19], 4
      %s157 = int_to_ptr.vmem [resolvable:$true] %s156
      %159 = dma.hbm_to_vmem [thread:$0]  %s10, 16, %s157, [#allocation18]
    $region45: #{_lambda_.9} parent=1 // pred_fallthru
      _
    // Predicated region
    $region46: #{_lambda_.9} parent=1 // pred_check
      _
    $region47: #{_lambda_.9} parent=1 // pred_check_branch
      %161 = sbr.rel (0) target = $region49
    $region48: #{_lambda_.9} parent=1 // pred_region
      %s163 = ssub.s32 16, 16
      %164 = vsyncadd [#allocation21], %s163
      %s166 = sshll.u32 [#allocation20], 4
      %s167 = int_to_ptr.vmem [resolvable:$true] %s166
      %169 = dma.hbm_to_vmem [thread:$0]  %s11, 16, %s167, [#allocation21]
    $region49: #{_lambda_.9} parent=1 // pred_fallthru
      _
    // Predicated region
    $region50: #{_lambda_.9} parent=1 // pred_check
      _
    $region51: #{_lambda_.9} parent=1 // pred_check_branch
      %171 = sbr.rel (0) target = $region53
    $region52: #{_lambda_.9} parent=1 // pred_region
      %s173 = ssub.s32 512, 512
      %174 = vsyncadd [#allocation21], %s173
      %s175 = sshll.u32 [#allocation22], 4
      %s176 = int_to_ptr.vmem [resolvable:$true] %s175
      %181 = dma.hbm_to_vmem [thread:$0]  %s12, 512, %s176, [#allocation21], 64, 64, 4
    $region53: #{_lambda_.9} parent=1 // pred_fallthru
      _
    // Predicated region
    $region54: #{_lambda_.9} parent=1 // pred_check
      _
    $region55: #{_lambda_.9} parent=1 // pred_check_branch
      %183 = sbr.rel (0) target = $region57
    $region56: #{_lambda_.9} parent=1 // pred_region
      %s185 = ssub.s32 16, 16
      %186 = vsyncadd [#allocation24], %s185
      %s188 = sshll.u32 [#allocation23], 4
      %s189 = int_to_ptr.vmem [resolvable:$true] %s188
      %191 = dma.hbm_to_vmem [thread:$0]  %s13, 16, %s189, [#allocation24]
    $region57: #{_lambda_.9} parent=1 // pred_fallthru
      _
    // Predicated region
    $region58: #{_lambda_.9} parent=1 // pred_check
      _
    $region59: #{_lambda_.9} parent=1 // pred_check_branch
      %193 = sbr.rel (0) target = $region61
    $region60: #{_lambda_.9} parent=1 // pred_region
      %s195 = ssub.s32 1024, 1024
      %196 = vsyncadd [#allocation24], %s195
      %s197 = sshll.u32 [#allocation25], 4
      %s198 = int_to_ptr.vmem [resolvable:$true] %s197
      %203 = dma.hbm_to_vmem [thread:$0]  %s14, 1024, %s198, [#allocation24], 64, 64, 4
    $region61: #{_lambda_.9} parent=1 // pred_fallthru
      _
    // Predicated region
    $region62: #{_lambda_.9} parent=1 // pred_check
      _
    $region63: #{_lambda_.9} parent=1 // pred_check_branch
      %205 = sbr.rel (0) target = $region65
    $region64: #{_lambda_.9} parent=1 // pred_region
      %s207 = ssub.s32 16, 16
      %208 = vsyncadd [#allocation27], %s207
      %s210 = sshll.u32 [#allocation26], 4
      %s211 = int_to_ptr.vmem [resolvable:$true] %s210
      %213 = dma.hbm_to_vmem [thread:$0]  %s15, 16, %s211, [#allocation27]
    $region65: #{_lambda_.9} parent=1 // pred_fallthru
      _
    // Predicated region
    $region66: #{_lambda_.9} parent=1 // pred_check
      _
    $region67: #{_lambda_.9} parent=1 // pred_check_branch
      %215 = sbr.rel (0) target = $region69
    $region68: #{_lambda_.9} parent=1 // pred_region
      %s217 = ssub.s32 1024, 1024
      %218 = vsyncadd [#allocation27], %s217
      %s219 = sshll.u32 [#allocation28], 4
      %s220 = int_to_ptr.vmem [resolvable:$true] %s219
      %225 = dma.hbm_to_vmem [thread:$0]  %s16, 1024, %s220, [#allocation27], 128, 128, 8
    $region69: #{_lambda_.9} parent=1 // pred_fallthru
      _
    // Predicated region
    $region70: #{_lambda_.9} parent=1 // pred_check
      _
    $region71: #{_lambda_.9} parent=1 // pred_check_branch
      %227 = sbr.rel (0) target = $region73
    $region72: #{_lambda_.9} parent=1 // pred_region
      %s229 = ssub.s32 64, 64
      %230 = vsyncadd [#allocation30], %s229
      %s232 = sshll.u32 [#allocation29], 4
      %s233 = int_to_ptr.vmem [resolvable:$true] %s232
      %235 = dma.hbm_to_vmem [thread:$0]  %s17, 64, %s233, [#allocation30]
    $region73: #{_lambda_.9} parent=1 // pred_fallthru
      _
    // Predicated region
    $region74: #{_lambda_.9} parent=1 // pred_check
      _
    $region75: #{_lambda_.9} parent=1 // pred_check_branch
      %237 = sbr.rel (0) target = $region77
    $region76: #{_lambda_.9} parent=1 // pred_region
      %s239 = ssub.s32 16, 16
      %240 = vsyncadd [#allocation30], %s239
      %s242 = sshll.u32 [#allocation31], 4
      %s243 = int_to_ptr.vmem [resolvable:$true] %s242
      %245 = dma.hbm_to_vmem [thread:$0]  %s18, 16, %s243, [#allocation30]
    $region77: #{_lambda_.9} parent=1 // pred_fallthru
      _
    // Predicated region
    $region78: #{_lambda_.9} parent=1 // pred_check
      _
    $region79: #{_lambda_.9} parent=1 // pred_check_branch
      %247 = sbr.rel (0) target = $region81
    $region80: #{_lambda_.9} parent=1 // pred_region
      %s249 = ssub.s32 16, 16
      %250 = vsyncadd [#allocation33], %s249
      %s252 = sshll.u32 [#allocation32], 4
      %s253 = int_to_ptr.vmem [resolvable:$true] %s252
      %255 = dma.hbm_to_vmem [thread:$0]  %s19, 16, %s253, [#allocation33]
    $region81: #{_lambda_.9} parent=1 // pred_fallthru
      _
    // Predicated region
    $region82: #{_lambda_.9} parent=1 // pred_check
      _
    $region83: #{_lambda_.9} parent=1 // pred_check_branch
      %257 = sbr.rel (0) target = $region85
    $region84: #{_lambda_.9} parent=1 // pred_region
      %s259 = ssub.s32 512, 512
      %260 = vsyncadd [#allocation33], %s259
      %s261 = sshll.u32 [#allocation34], 4
      %s262 = int_to_ptr.vmem [resolvable:$true] %s261
      %267 = dma.hbm_to_vmem [thread:$0]  %s20, 512, %s262, [#allocation33], 64, 64, 4
    $region85: #{_lambda_.9} parent=1 // pred_fallthru
      _
    // Predicated region
    $region86: #{_lambda_.9} parent=1 // pred_check
      _
    $region87: #{_lambda_.9} parent=1 // pred_check_branch
      %269 = sbr.rel (0) target = $region89
    $region88: #{_lambda_.9} parent=1 // pred_region
      %s271 = ssub.s32 16, 16
      %272 = vsyncadd [#allocation36], %s271
      %s274 = sshll.u32 [#allocation35], 4
      %s275 = int_to_ptr.vmem [resolvable:$true] %s274
      %277 = dma.hbm_to_vmem [thread:$0]  %s21, 16, %s275, [#allocation36]
    $region89: #{_lambda_.9} parent=1 // pred_fallthru
      _
    // Predicated region
    $region90: #{_lambda_.9} parent=1 // pred_check
      _
    $region91: #{_lambda_.9} parent=1 // pred_check_branch
      %279 = sbr.rel (0) target = $region93
    $region92: #{_lambda_.9} parent=1 // pred_region
      %280 = dma.done [#allocation3], 128
    $region93: #{_lambda_.9} parent=1 // pred_fallthru
      _
    // Predicated region
    $region94: #{_lambda_.9} parent=1 // pred_check
      _
    $region95: #{_lambda_.9} parent=1 // pred_check_branch
      %282 = sbr.rel (0) target = $region97
    $region96: #{_lambda_.9} parent=1 // pred_region
      %283 = dma.done [#allocation6], 32
    $region97: #{_lambda_.9} parent=1 // pred_fallthru
      _
    // Predicated region
    $region98: #{_lambda_.9} parent=1 // pred_check
      _
    $region99: #{_lambda_.9} parent=1 // pred_check_branch
      %285 = sbr.rel (0) target = $region101
    $region100: #{_lambda_.9} parent=1 // pred_region
      %286 = dma.done [#allocation6], 16
    $region101: #{_lambda_.9} parent=1 // pred_fallthru
      _
    // Predicated region
    $region102: #{_lambda_.9} parent=1 // pred_check
      _
    $region103: #{_lambda_.9} parent=1 // pred_check_branch
      %288 = sbr.rel (0) target = $region105
    $region104: #{_lambda_.9} parent=1 // pred_region
      %289 = dma.done [#allocation9], 16
    $region105: #{_lambda_.9} parent=1 // pred_fallthru
      _
    // Predicated region
    $region106: #{_lambda_.9} parent=1 // pred_check
      _
    $region107: #{_lambda_.9} parent=1 // pred_check_branch
      %291 = sbr.rel (0) target = $region109
    $region108: #{_lambda_.9} parent=1 // pred_region
      %292 = dma.done [#allocation9], 512
    $region109: #{_lambda_.9} parent=1 // pred_fallthru
      _
    // Predicated region
    $region110: #{_lambda_.9} parent=1 // pred_check
      _
    $region111: #{_lambda_.9} parent=1 // pred_check_branch
      %294 = sbr.rel (0) target = $region113
    $region112: #{_lambda_.9} parent=1 // pred_region
      %295 = dma.done [#allocation12], 16
    $region113: #{_lambda_.9} parent=1 // pred_fallthru
      _
    // Predicated region
    $region114: #{_lambda_.9} parent=1 // pred_check
      _
    $region115: #{_lambda_.9} parent=1 // pred_check_branch
      %297 = sbr.rel (0) target = $region117
    $region116: #{_lambda_.9} parent=1 // pred_region
      %298 = dma.done [#allocation12], 512
    $region117: #{_lambda_.9} parent=1 // pred_fallthru
      _
    // Predicated region
    $region118: #{_lambda_.9} parent=1 // pred_check
      _
    $region119: #{_lambda_.9} parent=1 // pred_check_branch
      %300 = sbr.rel (0) target = $region121
    $region120: #{_lambda_.9} parent=1 // pred_region
      %301 = dma.done [#allocation15], 16
    $region121: #{_lambda_.9} parent=1 // pred_fallthru
      _
    // Predicated region
    $region122: #{_lambda_.9} parent=1 // pred_check
      _
    $region123: #{_lambda_.9} parent=1 // pred_check_branch
      %303 = sbr.rel (0) target = $region125
    $region124: #{_lambda_.9} parent=1 // pred_region
      %304 = dma.done [#allocation15], 512
    $region125: #{_lambda_.9} parent=1 // pred_fallthru
      _
    // Predicated region
    $region126: #{_lambda_.9} parent=1 // pred_check
      _
    $region127: #{_lambda_.9} parent=1 // pred_check_branch
      %306 = sbr.rel (0) target = $region129
    $region128: #{_lambda_.9} parent=1 // pred_region
      %307 = dma.done [#allocation18], 16
    $region129: #{_lambda_.9} parent=1 // pred_fallthru
      _
    // Predicated region
    $region130: #{_lambda_.9} parent=1 // pred_check
      _
    $region131: #{_lambda_.9} parent=1 // pred_check_branch
      %309 = sbr.rel (0) target = $region133
    $region132: #{_lambda_.9} parent=1 // pred_region
      %310 = dma.done [#allocation18], 16
    $region133: #{_lambda_.9} parent=1 // pred_fallthru
      _
    // Predicated region
    $region134: #{_lambda_.9} parent=1 // pred_check
      _
    $region135: #{_lambda_.9} parent=1 // pred_check_branch
      %312 = sbr.rel (0) target = $region137
    $region136: #{_lambda_.9} parent=1 // pred_region
      %313 = dma.done [#allocation21], 16
    $region137: #{_lambda_.9} parent=1 // pred_fallthru
      _
    // Predicated region
    $region138: #{_lambda_.9} parent=1 // pred_check
      _
    $region139: #{_lambda_.9} parent=1 // pred_check_branch
      %315 = sbr.rel (0) target = $region141
    $region140: #{_lambda_.9} parent=1 // pred_region
      %316 = dma.done [#allocation21], 512
    $region141: #{_lambda_.9} parent=1 // pred_fallthru
      _
    // Predicated region
    $region142: #{_lambda_.9} parent=1 // pred_check
      _
    $region143: #{_lambda_.9} parent=1 // pred_check_branch
      %318 = sbr.rel (0) target = $region145
    $region144: #{_lambda_.9} parent=1 // pred_region
      %319 = dma.done [#allocation24], 16
    $region145: #{_lambda_.9} parent=1 // pred_fallthru
      _
    // Predicated region
    $region146: #{_lambda_.9} parent=1 // pred_check
      _
    $region147: #{_lambda_.9} parent=1 // pred_check_branch
      %321 = sbr.rel (0) target = $region149
    $region148: #{_lambda_.9} parent=1 // pred_region
      %322 = dma.done [#allocation24], 1024
    $region149: #{_lambda_.9} parent=1 // pred_fallthru
      _
    // Predicated region
    $region150: #{_lambda_.9} parent=1 // pred_check
      _
    $region151: #{_lambda_.9} parent=1 // pred_check_branch
      %324 = sbr.rel (0) target = $region153
    $region152: #{_lambda_.9} parent=1 // pred_region
      %325 = dma.done [#allocation27], 16
    $region153: #{_lambda_.9} parent=1 // pred_fallthru
      _
    // Predicated region
    $region154: #{_lambda_.9} parent=1 // pred_check
      _
    $region155: #{_lambda_.9} parent=1 // pred_check_branch
      %327 = sbr.rel (0) target = $region157
    $region156: #{_lambda_.9} parent=1 // pred_region
      %328 = dma.done [#allocation27], 1024
    $region157: #{_lambda_.9} parent=1 // pred_fallthru
      _
    // Predicated region
    $region158: #{_lambda_.9} parent=1 // pred_check
      _
    $region159: #{_lambda_.9} parent=1 // pred_check_branch
      %330 = sbr.rel (0) target = $region161
    $region160: #{_lambda_.9} parent=1 // pred_region
      %331 = dma.done [#allocation30], 64
    $region161: #{_lambda_.9} parent=1 // pred_fallthru
      _
    // Predicated region
    $region162: #{_lambda_.9} parent=1 // pred_check
      _
    $region163: #{_lambda_.9} parent=1 // pred_check_branch
      %333 = sbr.rel (0) target = $region165
    $region164: #{_lambda_.9} parent=1 // pred_region
      %334 = dma.done [#allocation30], 16
    $region165: #{_lambda_.9} parent=1 // pred_fallthru
      _
    // Predicated region
    $region166: #{_lambda_.9} parent=1 // pred_check
      _
    $region167: #{_lambda_.9} parent=1 // pred_check_branch
      %336 = sbr.rel (0) target = $region169
    $region168: #{_lambda_.9} parent=1 // pred_region
      %337 = dma.done [#allocation33], 16
    $region169: #{_lambda_.9} parent=1 // pred_fallthru
      _
    // Predicated region
    $region170: #{_lambda_.9} parent=1 // pred_check
      _
    $region171: #{_lambda_.9} parent=1 // pred_check_branch
      %339 = sbr.rel (0) target = $region173
    $region172: #{_lambda_.9} parent=1 // pred_region
      %340 = dma.done [#allocation33], 512
    $region173: #{_lambda_.9} parent=1 // pred_fallthru
      _
    // Predicated region
    $region174: #{_lambda_.9} parent=1 // pred_check
      _
    $region175: #{_lambda_.9} parent=1 // pred_check_branch
      %342 = sbr.rel (0) target = $region177
    $region176: #{_lambda_.9} parent=1 // pred_region
      %343 = dma.done [#allocation36], 16
    $region177: #{_lambda_.9} parent=1 // pred_fallthru
      _
    %v345 = vld [vmem:[#allocation2] sm:$0xff]
    %v346 = vld [vmem:[#allocation5] sm:$0x3]
    %v347 = vld [vmem:[#allocation7] sm:$0x1]
    %v348 = vld [vmem:[#allocation8] sm:$0x1]
    %vm349 = vcmask 523264
    %v350 = vsel %vm349, %v345, 0.0
    %351 = vadd.xlane.f32.xlu0 %v350
    %v352 = vpop.xlane.xlu0 %351
    %v353 = vrcp.pop 64.0
    %v354 = vmul.f32 %v352, %v353
    %v355 = vsub.f32 %v345, %v354
    %v356 = vmul.f32 %v355, %v355
    %v357 = vsel %vm349, %v356, 0.0
    %358 = vadd.xlane.f32.xlu0 %v357
    %v359 = vpop.xlane.xlu0 %358
    %v360 = vmul.f32 %v359, %v353
    %v361 = vadd.f32 %v360, 1e-06
    %v362 = vrsqrt.pop %v361
    %v363 = vmul.f32 %v355, %v362
    %v365 = vlaneseq
    %v366 = vshrl.u32 %v365, 7
    %v367 = vsub.s32 0, %v366
    %v368 = vrot.slane %v347, %v367
    %v370 = vmul.f32 %v363, %v368
    %v372 = vlaneseq
    %v373 = vshrl.u32 %v372, 7
    %v374 = vsub.s32 0, %v373
    %v375 = vrot.slane %v348, %v374
    %v377 = vadd.f32 %v370, %v375
    %v378 = vpack.c.bf16 %v377, %v377
    %vm379 = vcmask 517120
    %v380 = vsel %vm379, %v346, 0.0
    %381 = vadd.xlane.f32.xlu0 %v380
    %v382 = vpop.xlane.xlu0 %381
    %v383 = vmul.f32 %v382, %v353
    %v384 = vsub.f32 %v346, %v383
    %v385 = vmul.f32 %v384, %v384
    %v386 = vsel %vm379, %v385, 0.0
    %387 = vadd.xlane.f32.xlu0 %v386
    %v388 = vpop.xlane.xlu0 %387
    %v389 = vmul.f32 %v388, %v353
    %v390 = vadd.f32 %v389, 1e-06
    %v391 = vrsqrt.pop %v390
    %v392 = vmul.f32 %v384, %v391
    %v393 = vmul.f32 %v392, %v368
    %v394 = vadd.f32 %v393, %v375
    %v395 = vpack.c.bf16 %v394, %v394
    %v396 = vld [vmem:[#allocation10] sm:$0xf]
    %v397 = vld [vmem:[#allocation10 + $0x4] sm:$0xf]
    %v398 = vld [vmem:[#allocation10 + $0x8] sm:$0xf]
    %v399 = vld [vmem:[#allocation10 + $0xc] sm:$0xf]
    %v400 = vld [vmem:[#allocation10 + $0x10] sm:$0xf]
    %v401 = vld [vmem:[#allocation10 + $0x14] sm:$0xf]
    %v402 = vld [vmem:[#allocation10 + $0x18] sm:$0xf]
    %v403 = vld [vmem:[#allocation10 + $0x1c] sm:$0xf]
    %v404 = vld [vmem:[#allocation11] sm:$0x1]
    %v406 = vlaneseq
    %v407 = vshrl.u32 %v406, 7
    %v408 = vsub.s32 0, %v407
    %v409 = vrot.slane %v404, %v408
    %v419 = vunpack.c.l.b16 %v396
    %v420 = vunpack.c.l.b16 %v397
    %v421 = vunpack.c.l.b16 %v398
    %v422 = vunpack.c.l.b16 %v399
    %v423 = vunpack.c.l.b16 %v400
    %v424 = vunpack.c.l.b16 %v401
    %v425 = vunpack.c.l.b16 %v402
    %v426 = vunpack.c.l.b16 %v403
    %v427 = vpack.c.b16 %v420, %v419
    %v428 = vpack.c.b16 %v422, %v421
    %v429 = vpack.c.b16 %v424, %v423
    %v430 = vpack.c.b16 %v426, %v425
    %v436 = vsel %vm349, %v395, 0
    %438 = vmatprep.subr.bf16.mxu0 0
    %439 = vmatpush1.bf16.msra.mxu0 %v427
    %440 = vmatprep.subr.bf16.mxu0 0
    %441 = vmatpush1.bf16.msra.mxu0 %v428
    %442 = vmatprep.subr.bf16.mxu0 0
    %443 = vmatpush1.bf16.msra.mxu0 %v429
    %444 = vmatprep.subr.bf16.mxu0 0
    %445 = vmatpush1.bf16.msra.mxu0 %v430
    %446 = vmatprep.subr.bf16.mxu0 0
    %447 = vmatpush1.bf16.msra.mxu0 0
    %448 = vmatprep.subr.bf16.mxu0 0
    %449 = vmatpush1.bf16.msra.mxu0 0
    %450 = vmatprep.subr.bf16.mxu0 0
    %451 = vmatpush1.bf16.msra.mxu0 0
    %452 = vmatprep.subr.bf16.mxu0 0
    %453 = vmatpush1.bf16.msra.mxu0 0
    %454 = vmatprep.subr.bf16.mxu0 0
    %455 = vmatpush1.bf16.msra.mxu0 0
    %456 = vmatprep.subr.bf16.mxu0 0
    %457 = vmatpush1.bf16.msra.mxu0 0
    %458 = vmatprep.subr.bf16.mxu0 0
    %459 = vmatpush1.bf16.msra.mxu0 0
    %460 = vmatprep.subr.bf16.mxu0 0
    %461 = vmatpush1.bf16.msra.mxu0 0
    %462 = vmatprep.subr.bf16.mxu0 0
    %463 = vmatpush1.bf16.msra.mxu0 0
    %464 = vmatprep.subr.bf16.mxu0 0
    %465 = vmatpush1.bf16.msra.mxu0 0
    %466 = vmatprep.subr.bf16.mxu0 0
    %467 = vmatpush1.bf16.msra.mxu0 0
    %468 = vmatprep.subr.bf16.mxu0 0
    %469 = vmatpush1.bf16.msra.mxu0 0
    %470 = vmatprep.mubr.bf16.mxu0 0
    %471 = vmatmul.mubr.bf16.gmra.mrb[0].mxu0 %v436
    %v472 = vpop.f32.mrb[0].mxu0
    %v473 = vadd.f32 %v409, %v472
    %v474 = vpop.f32.mrb[0].mxu0
    %v475 = vpop.f32.mrb[0].mxu0
    %v476 = vpop.f32.mrb[0].mxu0
    %477 = vdwg.mxu0
    %v478 = vld [vmem:[#allocation13] sm:$0xf]
    %v479 = vld [vmem:[#allocation13 + $0x4] sm:$0xf]
    %v480 = vld [vmem:[#allocation13 + $0x8] sm:$0xf]
    %v481 = vld [vmem:[#allocation13 + $0xc] sm:$0xf]
    %v482 = vld [vmem:[#allocation13 + $0x10] sm:$0xf]
    %v483 = vld [vmem:[#allocation13 + $0x14] sm:$0xf]
    %v484 = vld [vmem:[#allocation13 + $0x18] sm:$0xf]
    %v485 = vld [vmem:[#allocation13 + $0x1c] sm:$0xf]
    %v486 = vld [vmem:[#allocation14] sm:$0x1]
    %v488 = vlaneseq
    %v489 = vshrl.u32 %v488, 7
    %v490 = vsub.s32 0, %v489
    %v491 = vrot.slane %v486, %v490
    %v501 = vunpack.c.l.b16 %v478
    %v502 = vunpack.c.l.b16 %v479
    %v503 = vunpack.c.l.b16 %v480
    %v504 = vunpack.c.l.b16 %v481
    %v505 = vunpack.c.l.b16 %v482
    %v506 = vunpack.c.l.b16 %v483
    %v507 = vunpack.c.l.b16 %v484
    %v508 = vunpack.c.l.b16 %v485
    %v509 = vpack.c.b16 %v502, %v501
    %v510 = vpack.c.b16 %v504, %v503
    %v511 = vpack.c.b16 %v506, %v505
    %v512 = vpack.c.b16 %v508, %v507
    %v518 = vsel %vm349, %v378, 0
    %520 = vmatprep.subr.bf16.mxu0 0
    %521 = vmatpush1.bf16.msra.mxu0 %v509
    %522 = vmatprep.subr.bf16.mxu0 0
    %523 = vmatpush1.bf16.msra.mxu0 %v510
    %524 = vmatprep.subr.bf16.mxu0 0
    %525 = vmatpush1.bf16.msra.mxu0 %v511
    %526 = vmatprep.subr.bf16.mxu0 0
    %527 = vmatpush1.bf16.msra.mxu0 %v512
    %528 = vmatprep.subr.bf16.mxu0 0
    %529 = vmatpush1.bf16.msra.mxu0 0
    %530 = vmatprep.subr.bf16.mxu0 0
    %531 = vmatpush1.bf16.msra.mxu0 0
    %532 = vmatprep.subr.bf16.mxu0 0
    %533 = vmatpush1.bf16.msra.mxu0 0
    %534 = vmatprep.subr.bf16.mxu0 0
    %535 = vmatpush1.bf16.msra.mxu0 0
    %536 = vmatprep.subr.bf16.mxu0 0
    %537 = vmatpush1.bf16.msra.mxu0 0
    %538 = vmatprep.subr.bf16.mxu0 0
    %539 = vmatpush1.bf16.msra.mxu0 0
    %540 = vmatprep.subr.bf16.mxu0 0
    %541 = vmatpush1.bf16.msra.mxu0 0
    %542 = vmatprep.subr.bf16.mxu0 0
    %543 = vmatpush1.bf16.msra.mxu0 0
    %544 = vmatprep.subr.bf16.mxu0 0
    %545 = vmatpush1.bf16.msra.mxu0 0
    %546 = vmatprep.subr.bf16.mxu0 0
    %547 = vmatpush1.bf16.msra.mxu0 0
    %548 = vmatprep.subr.bf16.mxu0 0
    %549 = vmatpush1.bf16.msra.mxu0 0
    %550 = vmatprep.subr.bf16.mxu0 0
    %551 = vmatpush1.bf16.msra.mxu0 0
    %552 = vmatprep.mubr.bf16.mxu0 0
    %553 = vmatmul.mubr.bf16.gmra.mrb[0].mxu0 %v518
    %v554 = vpop.f32.mrb[0].mxu0
    %v555 = vadd.f32 %v491, %v554
    %v556 = vpop.f32.mrb[0].mxu0
    %v557 = vpop.f32.mrb[0].mxu0
    %v558 = vpop.f32.mrb[0].mxu0
    %559 = vdwg.mxu0
    %v560 = vld [vmem:[#allocation28] sm:$0xff]
    %v561 = vld [vmem:[#allocation28 + $0x8] sm:$0xff]
    %v562 = vld [vmem:[#allocation28 + $0x10] sm:$0xff]
    %v563 = vld [vmem:[#allocation28 + $0x18] sm:$0xff]
    %v564 = vld [vmem:[#allocation28 + $0x20] sm:$0xff]
    %v565 = vld [vmem:[#allocation28 + $0x28] sm:$0xff]
    %v566 = vld [vmem:[#allocation28 + $0x30] sm:$0xff]
    %v567 = vld [vmem:[#allocation28 + $0x38] sm:$0xff]
    %v568 = vld [vmem:[#allocation29] sm:$0xf]
    %v569 = vlaneseq
    %v570 = vshrl.u32 %v569, 7
    %v571 = vsub.s32 0, %v570
    %v572 = vrot.slane %v473, %v571
    %v573 = vmul.f32 %v572, %v555
    %v575 = vsel %vm349, %v573, 0
    %577 = vmatprep.subr.mxu0 0.0
    %578 = vmatpush1.msra.mxu0 %v560
    %579 = vmatprep.subr.mxu0 0.0
    %580 = vmatpush1.msra.mxu0 %v561
    %581 = vmatprep.subr.mxu0 0.0
    %582 = vmatpush1.msra.mxu0 %v562
    %583 = vmatprep.subr.mxu0 0.0
    %584 = vmatpush1.msra.mxu0 %v563
    %585 = vmatprep.subr.mxu0 0.0
    %586 = vmatpush1.msra.mxu0 %v564
    %587 = vmatprep.subr.mxu0 0.0
    %588 = vmatpush1.msra.mxu0 %v565
    %589 = vmatprep.subr.mxu0 0.0
    %590 = vmatpush1.msra.mxu0 %v566
    %591 = vmatprep.subr.mxu0 0.0
    %592 = vmatpush1.msra.mxu0 %v567
    %593 = vmatprep.subr.mxu0 0.0
    %594 = vmatpush1.msra.mxu0 0.0
    %595 = vmatprep.subr.mxu0 0.0
    %596 = vmatpush1.msra.mxu0 0.0
    %597 = vmatprep.subr.mxu0 0.0
    %598 = vmatpush1.msra.mxu0 0.0
    %599 = vmatprep.subr.mxu0 0.0
    %600 = vmatpush1.msra.mxu0 0.0
    %601 = vmatprep.subr.mxu0 0.0
    %602 = vmatpush1.msra.mxu0 0.0
    %603 = vmatprep.subr.mxu0 0.0
    %604 = vmatpush1.msra.mxu0 0.0
    %605 = vmatprep.subr.mxu0 0.0
    %606 = vmatpush1.msra.mxu0 0.0
    %607 = vmatprep.subr.mxu0 0.0
    %608 = vmatpush1.msra.mxu0 0.0
    %609 = vmatprep.subr.mxu0 0.0
    %610 = vmatpush1.msra.mxu0 0.0
    %611 = vmatprep.subr.mxu0 0.0
    %612 = vmatpush1.msra.mxu0 0.0
    %613 = vmatprep.subr.mxu0 0.0
    %614 = vmatpush1.msra.mxu0 0.0
    %615 = vmatprep.subr.mxu0 0.0
    %616 = vmatpush1.msra.mxu0 0.0
    %617 = vmatprep.subr.mxu0 0.0
    %618 = vmatpush1.msra.mxu0 0.0
    %619 = vmatprep.subr.mxu0 0.0
    %620 = vmatpush1.msra.mxu0 0.0
    %621 = vmatprep.subr.mxu0 0.0
    %622 = vmatpush1.msra.mxu0 0.0
    %623 = vmatprep.subr.mxu0 0.0
    %624 = vmatpush1.msra.mxu0 0.0
    %625 = vmatprep.subr.mxu0 0.0
    %626 = vmatpush1.msra.mxu0 0.0
    %627 = vmatprep.subr.mxu0 0.0
    %628 = vmatpush1.msra.mxu0 0.0
    %629 = vmatprep.subr.mxu0 0.0
    %630 = vmatpush1.msra.mxu0 0.0
    %631 = vmatprep.subr.mxu0 0.0
    %632 = vmatpush1.msra.mxu0 0.0
    %633 = vmatprep.subr.mxu0 0.0
    %634 = vmatpush1.msra.mxu0 0.0
    %635 = vmatprep.subr.mxu0 0.0
    %636 = vmatpush1.msra.mxu0 0.0
    %637 = vmatprep.subr.mxu0 0.0
    %638 = vmatpush1.msra.mxu0 0.0
    %639 = vmatprep.subr.mxu0 0.0
    %640 = vmatpush1.msra.mxu0 0.0
    %641 = vmatprep.mubr.f32.mxu0 0.0
    %642 = vmatmul.mubr.f32.gmra.mrb[0].mxu0 %v575
    %v643 = vpop.f32.mrb[0].mxu0
    %v644 = vadd.f32 0.0, %v643
    %v645 = vpop.f32.mrb[0].mxu0
    %646 = vdwg.mxu0
    %v647 = vmul.f32 %v644, 0.25
    %vm648 = vcmask 27648
    %v649 = vsel %vm648, %v647, -inf
    %v650 = vrot.slane %v649, 4
    %v651 = vmax.f32 %v649, %v650
    %v652 = vrot.slane %v651, 2
    %v653 = vmax.f32 %v651, %v652
    %v654 = vrot.slane %v653, 1
    %v655 = vmax.f32 %v653, %v654
    %v656 = vsub.f32 %v647, %v655
    %v657 = vmul.f32 %v656, 1.442695
    %v658 = vpow.pop %v657
    %v659 = vsel %vm648, %v658, 0.0
    %v660 = vrot.slane %v659, 4
    %v661 = vadd.f32 %v659, %v660
    %v662 = vrot.slane %v661, 2
    %v663 = vadd.f32 %v661, %v662
    %v664 = vrot.slane %v663, 1
    %v665 = vadd.f32 %v663, %v664
    %v666 = vrcp.pop %v665
    %v667 = vmul.f32 %v658, %v666
    %vm668 = vcmask 31744
    %v670 = vsel %vm668, %v667, 0
    %vm672 = vcmask 1043456
    %v674 = vsel %vm672, %v568, 0
    %676 = vmatprep.subr.mxu0 0.0
    %677 = vmatpush1.msra.mxu0 %v674
    %678 = vmatprep.subr.mxu0 0.0
    %679 = vmatpush1.msra.mxu0 0.0
    %680 = vmatprep.subr.mxu0 0.0
    %681 = vmatpush1.msra.mxu0 0.0
    %682 = vmatprep.subr.mxu0 0.0
    %683 = vmatpush1.msra.mxu0 0.0
    %684 = vmatprep.subr.mxu0 0.0
    %685 = vmatpush1.msra.mxu0 0.0
    %686 = vmatprep.subr.mxu0 0.0
    %687 = vmatpush1.msra.mxu0 0.0
    %688 = vmatprep.subr.mxu0 0.0
    %689 = vmatpush1.msra.mxu0 0.0
    %690 = vmatprep.subr.mxu0 0.0
    %691 = vmatpush1.msra.mxu0 0.0
    %692 = vmatprep.subr.mxu0 0.0
    %693 = vmatpush1.msra.mxu0 0.0
    %694 = vmatprep.subr.mxu0 0.0
    %695 = vmatpush1.msra.mxu0 0.0
    %696 = vmatprep.subr.mxu0 0.0
    %697 = vmatpush1.msra.mxu0 0.0
    %698 = vmatprep.subr.mxu0 0.0
    %699 = vmatpush1.msra.mxu0 0.0
    %700 = vmatprep.subr.mxu0 0.0
    %701 = vmatpush1.msra.mxu0 0.0
    %702 = vmatprep.subr.mxu0 0.0
    %703 = vmatpush1.msra.mxu0 0.0
    %704 = vmatprep.subr.mxu0 0.0
    %705 = vmatpush1.msra.mxu0 0.0
    %706 = vmatprep.subr.mxu0 0.0
    %707 = vmatpush1.msra.mxu0 0.0
    %708 = vmatprep.subr.mxu0 0.0
    %709 = vmatpush1.msra.mxu0 0.0
    %710 = vmatprep.subr.mxu0 0.0
    %711 = vmatpush1.msra.mxu0 0.0
    %712 = vmatprep.subr.mxu0 0.0
    %713 = vmatpush1.msra.mxu0 0.0
    %714 = vmatprep.subr.mxu0 0.0
    %715 = vmatpush1.msra.mxu0 0.0
    %716 = vmatprep.subr.mxu0 0.0
    %717 = vmatpush1.msra.mxu0 0.0
    %718 = vmatprep.subr.mxu0 0.0
    %719 = vmatpush1.msra.mxu0 0.0
    %720 = vmatprep.subr.mxu0 0.0
    %721 = vmatpush1.msra.mxu0 0.0
    %722 = vmatprep.subr.mxu0 0.0
    %723 = vmatpush1.msra.mxu0 0.0
    %724 = vmatprep.subr.mxu0 0.0
    %725 = vmatpush1.msra.mxu0 0.0
    %726 = vmatprep.subr.mxu0 0.0
    %727 = vmatpush1.msra.mxu0 0.0
    %728 = vmatprep.subr.mxu0 0.0
    %729 = vmatpush1.msra.mxu0 0.0
    %730 = vmatprep.subr.mxu0 0.0
    %731 = vmatpush1.msra.mxu0 0.0
    %732 = vmatprep.subr.mxu0 0.0
    %733 = vmatpush1.msra.mxu0 0.0
    %734 = vmatprep.subr.mxu0 0.0
    %735 = vmatpush1.msra.mxu0 0.0
    %736 = vmatprep.subr.mxu0 0.0
    %737 = vmatpush1.msra.mxu0 0.0
    %738 = vmatprep.subr.mxu0 0.0
    %739 = vmatpush1.msra.mxu0 0.0
    %740 = vmatprep.mubr.f32.mxu0 0.0
    %741 = vmatmul.mubr.f32.gmra.mrb[0].mxu0 %v670
    %v742 = vpop.f32.mrb[0].mxu0
    %v743 = vadd.f32 0.0, %v742
    %v744 = vpop.f32.mrb[0].mxu0
    %745 = vdwg.mxu0
    %747 = vrot.lane.b32.xlu0 %v555, 64
    %v748 = vpop.permute.xlu0 %747
    %v750 = vmul.f32 %v743, %v748
    %vm751 = vcmask 519168
    %v752 = vsel %vm751, %v750, 0.0
    %v753 = vrot.slane %v752, 4
    %v754 = vadd.f32 %v752, %v753
    %v755 = vrot.slane %v754, 2
    %v756 = vadd.f32 %v754, %v755
    %v757 = vrot.slane %v756, 1
    %v758 = vadd.f32 %v756, %v757
    %v759 = vlaneseq
    %v760 = vshrl.u32 %v759, 7
    %v761 = vsub.s32 1, %v760
    %v762 = vrot.slane %v473, %v761
    %v763 = vmul.f32 %v762, %v555
    %v765 = vrot.slane %v763, 4
    %v766 = vsel %vm349, %v765, 0
    %768 = vmatprep.subr.mxu0 0.0
    %769 = vmatpush1.msra.mxu0 %v560
    %770 = vmatprep.subr.mxu0 0.0
    %771 = vmatpush1.msra.mxu0 %v561
    %772 = vmatprep.subr.mxu0 0.0
    %773 = vmatpush1.msra.mxu0 %v562
    %774 = vmatprep.subr.mxu0 0.0
    %775 = vmatpush1.msra.mxu0 %v563
    %776 = vmatprep.subr.mxu0 0.0
    %777 = vmatpush1.msra.mxu0 %v564
    %778 = vmatprep.subr.mxu0 0.0
    %779 = vmatpush1.msra.mxu0 %v565
    %780 = vmatprep.subr.mxu0 0.0
    %781 = vmatpush1.msra.mxu0 %v566
    %782 = vmatprep.subr.mxu0 0.0
    %783 = vmatpush1.msra.mxu0 %v567
    %784 = vmatprep.subr.mxu0 0.0
    %785 = vmatpush1.msra.mxu0 0.0
    %786 = vmatprep.subr.mxu0 0.0
    %787 = vmatpush1.msra.mxu0 0.0
    %788 = vmatprep.subr.mxu0 0.0
    %789 = vmatpush1.msra.mxu0 0.0
    %790 = vmatprep.subr.mxu0 0.0
    %791 = vmatpush1.msra.mxu0 0.0
    %792 = vmatprep.subr.mxu0 0.0
    %793 = vmatpush1.msra.mxu0 0.0
    %794 = vmatprep.subr.mxu0 0.0
    %795 = vmatpush1.msra.mxu0 0.0
    %796 = vmatprep.subr.mxu0 0.0
    %797 = vmatpush1.msra.mxu0 0.0
    %798 = vmatprep.subr.mxu0 0.0
    %799 = vmatpush1.msra.mxu0 0.0
    %800 = vmatprep.subr.mxu0 0.0
    %801 = vmatpush1.msra.mxu0 0.0
    %802 = vmatprep.subr.mxu0 0.0
    %803 = vmatpush1.msra.mxu0 0.0
    %804 = vmatprep.subr.mxu0 0.0
    %805 = vmatpush1.msra.mxu0 0.0
    %806 = vmatprep.subr.mxu0 0.0
    %807 = vmatpush1.msra.mxu0 0.0
    %808 = vmatprep.subr.mxu0 0.0
    %809 = vmatpush1.msra.mxu0 0.0
    %810 = vmatprep.subr.mxu0 0.0
    %811 = vmatpush1.msra.mxu0 0.0
    %812 = vmatprep.subr.mxu0 0.0
    %813 = vmatpush1.msra.mxu0 0.0
    %814 = vmatprep.subr.mxu0 0.0
    %815 = vmatpush1.msra.mxu0 0.0
    %816 = vmatprep.subr.mxu0 0.0
    %817 = vmatpush1.msra.mxu0 0.0
    %818 = vmatprep.subr.mxu0 0.0
    %819 = vmatpush1.msra.mxu0 0.0
    %820 = vmatprep.subr.mxu0 0.0
    %821 = vmatpush1.msra.mxu0 0.0
    %822 = vmatprep.subr.mxu0 0.0
    %823 = vmatpush1.msra.mxu0 0.0
    %824 = vmatprep.subr.mxu0 0.0
    %825 = vmatpush1.msra.mxu0 0.0
    %826 = vmatprep.subr.mxu0 0.0
    %827 = vmatpush1.msra.mxu0 0.0
    %828 = vmatprep.subr.mxu0 0.0
    %829 = vmatpush1.msra.mxu0 0.0
    %830 = vmatprep.subr.mxu0 0.0
    %831 = vmatpush1.msra.mxu0 0.0
    %832 = vmatprep.mubr.f32.mxu0 0.0
    %833 = vmatmul.mubr.f32.gmra.mrb[0].mxu0 %v766
    %v834 = vpop.f32.mrb[0].mxu0
    %v835 = vadd.f32 0.0, %v834
    %v836 = vpop.f32.mrb[0].mxu0
    %837 = vdwg.mxu0
    %v838 = vmul.f32 %v835, 0.25
    %v839 = vsel %vm648, %v838, -inf
    %v840 = vrot.slane %v839, 4
    %v841 = vmax.f32 %v839, %v840
    %v842 = vrot.slane %v841, 2
    %v843 = vmax.f32 %v841, %v842
    %v844 = vrot.slane %v843, 1
    %v845 = vmax.f32 %v843, %v844
    %v846 = vsub.f32 %v838, %v845
    %v847 = vmul.f32 %v846, 1.442695
    %v848 = vpow.pop %v847
    %v849 = vsel %vm648, %v848, 0.0
    %v850 = vrot.slane %v849, 4
    %v851 = vadd.f32 %v849, %v850
    %v852 = vrot.slane %v851, 2
    %v853 = vadd.f32 %v851, %v852
    %v854 = vrot.slane %v853, 1
    %v855 = vadd.f32 %v853, %v854
    %v856 = vrcp.pop %v855
    %v857 = vmul.f32 %v848, %v856
    %v859 = vsel %vm668, %v857, 0
    %861 = vmatprep.subr.mxu0 0.0
    %862 = vmatpush1.msra.mxu0 %v674
    %863 = vmatprep.subr.mxu0 0.0
    %864 = vmatpush1.msra.mxu0 0.0
    %865 = vmatprep.subr.mxu0 0.0
    %866 = vmatpush1.msra.mxu0 0.0
    %867 = vmatprep.subr.mxu0 0.0
    %868 = vmatpush1.msra.mxu0 0.0
    %869 = vmatprep.subr.mxu0 0.0
    %870 = vmatpush1.msra.mxu0 0.0
    %871 = vmatprep.subr.mxu0 0.0
    %872 = vmatpush1.msra.mxu0 0.0
    %873 = vmatprep.subr.mxu0 0.0
    %874 = vmatpush1.msra.mxu0 0.0
    %875 = vmatprep.subr.mxu0 0.0
    %876 = vmatpush1.msra.mxu0 0.0
    %877 = vmatprep.subr.mxu0 0.0
    %878 = vmatpush1.msra.mxu0 0.0
    %879 = vmatprep.subr.mxu0 0.0
    %880 = vmatpush1.msra.mxu0 0.0
    %881 = vmatprep.subr.mxu0 0.0
    %882 = vmatpush1.msra.mxu0 0.0
    %883 = vmatprep.subr.mxu0 0.0
    %884 = vmatpush1.msra.mxu0 0.0
    %885 = vmatprep.subr.mxu0 0.0
    %886 = vmatpush1.msra.mxu0 0.0
    %887 = vmatprep.subr.mxu0 0.0
    %888 = vmatpush1.msra.mxu0 0.0
    %889 = vmatprep.subr.mxu0 0.0
    %890 = vmatpush1.msra.mxu0 0.0
    %891 = vmatprep.subr.mxu0 0.0
    %892 = vmatpush1.msra.mxu0 0.0
    %893 = vmatprep.subr.mxu0 0.0
    %894 = vmatpush1.msra.mxu0 0.0
    %895 = vmatprep.subr.mxu0 0.0
    %896 = vmatpush1.msra.mxu0 0.0
    %897 = vmatprep.subr.mxu0 0.0
    %898 = vmatpush1.msra.mxu0 0.0
    %899 = vmatprep.subr.mxu0 0.0
    %900 = vmatpush1.msra.mxu0 0.0
    %901 = vmatprep.subr.mxu0 0.0
    %902 = vmatpush1.msra.mxu0 0.0
    %903 = vmatprep.subr.mxu0 0.0
    %904 = vmatpush1.msra.mxu0 0.0
    %905 = vmatprep.subr.mxu0 0.0
    %906 = vmatpush1.msra.mxu0 0.0
    %907 = vmatprep.subr.mxu0 0.0
    %908 = vmatpush1.msra.mxu0 0.0
    %909 = vmatprep.subr.mxu0 0.0
    %910 = vmatpush1.msra.mxu0 0.0
    %911 = vmatprep.subr.mxu0 0.0
    %912 = vmatpush1.msra.mxu0 0.0
    %913 = vmatprep.subr.mxu0 0.0
    %914 = vmatpush1.msra.mxu0 0.0
    %915 = vmatprep.subr.mxu0 0.0
    %916 = vmatpush1.msra.mxu0 0.0
    %917 = vmatprep.subr.mxu0 0.0
    %918 = vmatpush1.msra.mxu0 0.0
    %919 = vmatprep.subr.mxu0 0.0
    %920 = vmatpush1.msra.mxu0 0.0
    %921 = vmatprep.subr.mxu0 0.0
    %922 = vmatpush1.msra.mxu0 0.0
    %923 = vmatprep.subr.mxu0 0.0
    %924 = vmatpush1.msra.mxu0 0.0
    %925 = vmatprep.mubr.f32.mxu0 0.0
    %926 = vmatmul.mubr.f32.gmra.mrb[0].mxu0 %v859
    %v927 = vpop.f32.mrb[0].mxu0
    %v928 = vadd.f32 0.0, %v927
    %v929 = vpop.f32.mrb[0].mxu0
    %930 = vdwg.mxu0
    %v931 = vrot.slane %v555, 4
    %932 = vrot.lane.b32.xlu0 %v931, 64
    %v933 = vpop.permute.xlu0 %932
    %v935 = vmul.f32 %v928, %v933
    %v936 = vsel %vm751, %v935, 0.0
    %v937 = vrot.slane %v936, 4
    %v938 = vadd.f32 %v936, %v937
    %v939 = vrot.slane %v938, 2
    %v940 = vadd.f32 %v938, %v939
    %v941 = vrot.slane %v940, 1
    %v942 = vadd.f32 %v940, %v941
    %vm943 = vcmask 1040384
    %v944 = vsel %vm943, %v758, %v942
    %v945 = vpack.c.bf16 %v944, %v944
    %v946 = vld [vmem:[#allocation16] sm:$0xf]
    %v947 = vld [vmem:[#allocation16 + $0x4] sm:$0xf]
    %v948 = vld [vmem:[#allocation16 + $0x8] sm:$0xf]
    %v949 = vld [vmem:[#allocation16 + $0xc] sm:$0xf]
    %v950 = vld [vmem:[#allocation16 + $0x10] sm:$0xf]
    %v951 = vld [vmem:[#allocation16 + $0x14] sm:$0xf]
    %v952 = vld [vmem:[#allocation16 + $0x18] sm:$0xf]
    %v953 = vld [vmem:[#allocation16 + $0x1c] sm:$0xf]
    %v954 = vld [vmem:[#allocation17] sm:$0x1]
    %v956 = vlaneseq
    %v957 = vshrl.u32 %v956, 7
    %v958 = vsub.s32 0, %v957
    %v959 = vrot.slane %v954, %v958
    %v969 = vunpack.c.l.b16 %v946
    %v970 = vunpack.c.l.b16 %v947
    %v971 = vunpack.c.l.b16 %v948
    %v972 = vunpack.c.l.b16 %v949
    %v973 = vunpack.c.l.b16 %v950
    %v974 = vunpack.c.l.b16 %v951
    %v975 = vunpack.c.l.b16 %v952
    %v976 = vunpack.c.l.b16 %v953
    %v977 = vpack.c.b16 %v970, %v969
    %v978 = vpack.c.b16 %v972, %v971
    %v979 = vpack.c.b16 %v974, %v973
    %v980 = vpack.c.b16 %v976, %v975
    %v986 = vsel %vm349, %v945, 0
    %988 = vmatprep.subr.bf16.mxu0 0
    %989 = vmatpush1.bf16.msra.mxu0 %v977
    %990 = vmatprep.subr.bf16.mxu0 0
    %991 = vmatpush1.bf16.msra.mxu0 %v978
    %992 = vmatprep.subr.bf16.mxu0 0
    %993 = vmatpush1.bf16.msra.mxu0 %v979
    %994 = vmatprep.subr.bf16.mxu0 0
    %995 = vmatpush1.bf16.msra.mxu0 %v980
    %996 = vmatprep.subr.bf16.mxu0 0
    %997 = vmatpush1.bf16.msra.mxu0 0
    %998 = vmatprep.subr.bf16.mxu0 0
    %999 = vmatpush1.bf16.msra.mxu0 0
    %1000 = vmatprep.subr.bf16.mxu0 0
    %1001 = vmatpush1.bf16.msra.mxu0 0
    %1002 = vmatprep.subr.bf16.mxu0 0
    %1003 = vmatpush1.bf16.msra.mxu0 0
    %1004 = vmatprep.subr.bf16.mxu0 0
    %1005 = vmatpush1.bf16.msra.mxu0 0
    %1006 = vmatprep.subr.bf16.mxu0 0
    %1007 = vmatpush1.bf16.msra.mxu0 0
    %1008 = vmatprep.subr.bf16.mxu0 0
    %1009 = vmatpush1.bf16.msra.mxu0 0
    %1010 = vmatprep.subr.bf16.mxu0 0
    %1011 = vmatpush1.bf16.msra.mxu0 0
    %1012 = vmatprep.subr.bf16.mxu0 0
    %1013 = vmatpush1.bf16.msra.mxu0 0
    %1014 = vmatprep.subr.bf16.mxu0 0
    %1015 = vmatpush1.bf16.msra.mxu0 0
    %1016 = vmatprep.subr.bf16.mxu0 0
    %1017 = vmatpush1.bf16.msra.mxu0 0
    %1018 = vmatprep.subr.bf16.mxu0 0
    %1019 = vmatpush1.bf16.msra.mxu0 0
    %1020 = vmatprep.mubr.bf16.mxu0 0
    %1021 = vmatmul.mubr.bf16.gmra.mrb[0].mxu0 %v986
    %v1022 = vpop.f32.mrb[0].mxu0
    %v1023 = vadd.f32 %v959, %v1022
    %v1024 = vpop.f32.mrb[0].mxu0
    %v1025 = vpop.f32.mrb[0].mxu0
    %v1026 = vpop.f32.mrb[0].mxu0
    %1027 = vdwg.mxu0
    %v1028 = vadd.f32 %v346, %v1023
    %1029 = vst.msk [vmem:[#allocation38] sm:$0x3] %vm379, %v1028
    %v1030 = vld [vmem:[#allocation19] sm:$0x1]
    %v1031 = vld [vmem:[#allocation20] sm:$0x1]
    %v1033 = vlaneseq
    %v1034 = vshrl.u32 %v1033, 7
    %v1035 = vsub.s32 0, %v1034
    %v1036 = vrot.slane %v1030, %v1035
    %v1038 = vmul.f32 %v363, %v1036
    %v1040 = vlaneseq
    %v1041 = vshrl.u32 %v1040, 7
    %v1042 = vsub.s32 0, %v1041
    %v1043 = vrot.slane %v1031, %v1042
    %v1045 = vadd.f32 %v1038, %v1043
    %v1046 = vpack.c.bf16 %v1045, %v1045
    %v1047 = vld [vmem:[#allocation22] sm:$0xf]
    %v1048 = vld [vmem:[#allocation22 + $0x4] sm:$0xf]
    %v1049 = vld [vmem:[#allocation22 + $0x8] sm:$0xf]
    %v1050 = vld [vmem:[#allocation22 + $0xc] sm:$0xf]
    %v1051 = vld [vmem:[#allocation22 + $0x10] sm:$0xf]
    %v1052 = vld [vmem:[#allocation22 + $0x14] sm:$0xf]
    %v1053 = vld [vmem:[#allocation22 + $0x18] sm:$0xf]
    %v1054 = vld [vmem:[#allocation22 + $0x1c] sm:$0xf]
    %v1055 = vld [vmem:[#allocation23] sm:$0x1]
    %v1057 = vlaneseq
    %v1058 = vshrl.u32 %v1057, 7
    %v1059 = vsub.s32 0, %v1058
    %v1060 = vrot.slane %v1055, %v1059
    %v1070 = vunpack.c.l.b16 %v1047
    %v1071 = vunpack.c.l.b16 %v1048
    %v1072 = vunpack.c.l.b16 %v1049
    %v1073 = vunpack.c.l.b16 %v1050
    %v1074 = vunpack.c.l.b16 %v1051
    %v1075 = vunpack.c.l.b16 %v1052
    %v1076 = vunpack.c.l.b16 %v1053
    %v1077 = vunpack.c.l.b16 %v1054
    %v1078 = vpack.c.b16 %v1071, %v1070
    %v1079 = vpack.c.b16 %v1073, %v1072
    %v1080 = vpack.c.b16 %v1075, %v1074
    %v1081 = vpack.c.b16 %v1077, %v1076
    %v1087 = vsel %vm349, %v1046, 0
    %1089 = vmatprep.subr.bf16.mxu0 0
    %1090 = vmatpush1.bf16.msra.mxu0 %v1078
    %1091 = vmatprep.subr.bf16.mxu0 0
    %1092 = vmatpush1.bf16.msra.mxu0 %v1079
    %1093 = vmatprep.subr.bf16.mxu0 0
    %1094 = vmatpush1.bf16.msra.mxu0 %v1080
    %1095 = vmatprep.subr.bf16.mxu0 0
    %1096 = vmatpush1.bf16.msra.mxu0 %v1081
    %1097 = vmatprep.subr.bf16.mxu0 0
    %1098 = vmatpush1.bf16.msra.mxu0 0
    %1099 = vmatprep.subr.bf16.mxu0 0
    %1100 = vmatpush1.bf16.msra.mxu0 0
    %1101 = vmatprep.subr.bf16.mxu0 0
    %1102 = vmatpush1.bf16.msra.mxu0 0
    %1103 = vmatprep.subr.bf16.mxu0 0
    %1104 = vmatpush1.bf16.msra.mxu0 0
    %1105 = vmatprep.subr.bf16.mxu0 0
    %1106 = vmatpush1.bf16.msra.mxu0 0
    %1107 = vmatprep.subr.bf16.mxu0 0
    %1108 = vmatpush1.bf16.msra.mxu0 0
    %1109 = vmatprep.subr.bf16.mxu0 0
    %1110 = vmatpush1.bf16.msra.mxu0 0
    %1111 = vmatprep.subr.bf16.mxu0 0
    %1112 = vmatpush1.bf16.msra.mxu0 0
    %1113 = vmatprep.subr.bf16.mxu0 0
    %1114 = vmatpush1.bf16.msra.mxu0 0
    %1115 = vmatprep.subr.bf16.mxu0 0
    %1116 = vmatpush1.bf16.msra.mxu0 0
    %1117 = vmatprep.subr.bf16.mxu0 0
    %1118 = vmatpush1.bf16.msra.mxu0 0
    %1119 = vmatprep.subr.bf16.mxu0 0
    %1120 = vmatpush1.bf16.msra.mxu0 0
    %1121 = vmatprep.mubr.bf16.mxu0 0
    %1122 = vmatmul.mubr.bf16.gmra.mrb[0].mxu0 %v1087
    %v1123 = vpop.f32.mrb[0].mxu0
    %v1124 = vadd.f32 %v1060, %v1123
    %v1125 = vpop.f32.mrb[0].mxu0
    %v1126 = vpop.f32.mrb[0].mxu0
    %v1127 = vpop.f32.mrb[0].mxu0
    %1128 = vdwg.mxu0
    %v1129 = vmul.f32 %v1124, 0.5
    %v1130 = vmul.f32 %v1124, 0.044715
    %v1131 = vmul.f32 %v1130, %v1124
    %v1132 = vmul.f32 %v1131, %v1124
    %v1133 = vadd.f32 %v1124, %v1132
    %v1134 = vmul.f32 %v1133, 0.7978846
    %v1135 = vtanh.pop %v1134
    %v1136 = vadd.f32 %v1135, 1.0
    %v1137 = vmul.f32 %v1129, %v1136
    %v1138 = vpack.c.bf16 %v1137, %v1137
    %v1139 = vld [vmem:[#allocation25] sm:$0xf]
    %v1140 = vld [vmem:[#allocation25 + $0x4] sm:$0xf]
    %v1141 = vld [vmem:[#allocation25 + $0x8] sm:$0xf]
    %v1142 = vld [vmem:[#allocation25 + $0xc] sm:$0xf]
    %v1143 = vld [vmem:[#allocation25 + $0x10] sm:$0xf]
    %v1144 = vld [vmem:[#allocation25 + $0x14] sm:$0xf]
    %v1145 = vld [vmem:[#allocation25 + $0x18] sm:$0xf]
    %v1146 = vld [vmem:[#allocation25 + $0x1c] sm:$0xf]
    %v1147 = vld [vmem:[#allocation25 + $0x20] sm:$0xf]
    %v1148 = vld [vmem:[#allocation25 + $0x24] sm:$0xf]
    %v1149 = vld [vmem:[#allocation25 + $0x28] sm:$0xf]
    %v1150 = vld [vmem:[#allocation25 + $0x2c] sm:$0xf]
    %v1151 = vld [vmem:[#allocation25 + $0x30] sm:$0xf]
    %v1152 = vld [vmem:[#allocation25 + $0x34] sm:$0xf]
    %v1153 = vld [vmem:[#allocation25 + $0x38] sm:$0xf]
    %v1154 = vld [vmem:[#allocation25 + $0x3c] sm:$0xf]
    %v1155 = vld [vmem:[#allocation26] sm:$0x1]
    %v1157 = vlaneseq
    %v1158 = vshrl.u32 %v1157, 7
    %v1159 = vsub.s32 0, %v1158
    %v1160 = vrot.slane %v1155, %v1159
    %v1178 = vunpack.c.l.b16 %v1139
    %v1179 = vunpack.c.l.b16 %v1140
    %v1180 = vunpack.c.l.b16 %v1141
    %v1181 = vunpack.c.l.b16 %v1142
    %v1182 = vunpack.c.l.b16 %v1143
    %v1183 = vunpack.c.l.b16 %v1144
    %v1184 = vunpack.c.l.b16 %v1145
    %v1185 = vunpack.c.l.b16 %v1146
    %v1186 = vunpack.c.l.b16 %v1147
    %v1187 = vunpack.c.l.b16 %v1148
    %v1188 = vunpack.c.l.b16 %v1149
    %v1189 = vunpack.c.l.b16 %v1150
    %v1190 = vunpack.c.l.b16 %v1151
    %v1191 = vunpack.c.l.b16 %v1152
    %v1192 = vunpack.c.l.b16 %v1153
    %v1193 = vunpack.c.l.b16 %v1154
    %v1194 = vpack.c.b16 %v1179, %v1178
    %v1195 = vpack.c.b16 %v1181, %v1180
    %v1196 = vpack.c.b16 %v1183, %v1182
    %v1197 = vpack.c.b16 %v1185, %v1184
    %v1198 = vpack.c.b16 %v1187, %v1186
    %v1199 = vpack.c.b16 %v1189, %v1188
    %v1200 = vpack.c.b16 %v1191, %v1190
    %v1201 = vpack.c.b16 %v1193, %v1192
    %1210 = vmatprep.subr.bf16.mxu0 0
    %1211 = vmatpush1.bf16.msra.mxu0 %v1194
    %1212 = vmatprep.subr.bf16.mxu0 0
    %1213 = vmatpush1.bf16.msra.mxu0 %v1195
    %1214 = vmatprep.subr.bf16.mxu0 0
    %1215 = vmatpush1.bf16.msra.mxu0 %v1196
    %1216 = vmatprep.subr.bf16.mxu0 0
    %1217 = vmatpush1.bf16.msra.mxu0 %v1197
    %1218 = vmatprep.subr.bf16.mxu0 0
    %1219 = vmatpush1.bf16.msra.mxu0 %v1198
    %1220 = vmatprep.subr.bf16.mxu0 0
    %1221 = vmatpush1.bf16.msra.mxu0 %v1199
    %1222 = vmatprep.subr.bf16.mxu0 0
    %1223 = vmatpush1.bf16.msra.mxu0 %v1200
    %1224 = vmatprep.subr.bf16.mxu0 0
    %1225 = vmatpush1.bf16.msra.mxu0 %v1201
    %1226 = vmatprep.subr.bf16.mxu0 0
    %1227 = vmatpush1.bf16.msra.mxu0 0
    %1228 = vmatprep.subr.bf16.mxu0 0
    %1229 = vmatpush1.bf16.msra.mxu0 0
    %1230 = vmatprep.subr.bf16.mxu0 0
    %1231 = vmatpush1.bf16.msra.mxu0 0
    %1232 = vmatprep.subr.bf16.mxu0 0
    %1233 = vmatpush1.bf16.msra.mxu0 0
    %1234 = vmatprep.subr.bf16.mxu0 0
    %1235 = vmatpush1.bf16.msra.mxu0 0
    %1236 = vmatprep.subr.bf16.mxu0 0
    %1237 = vmatpush1.bf16.msra.mxu0 0
    %1238 = vmatprep.subr.bf16.mxu0 0
    %1239 = vmatpush1.bf16.msra.mxu0 0
    %1240 = vmatprep.subr.bf16.mxu0 0
    %1241 = vmatpush1.bf16.msra.mxu0 0
    %1242 = vmatprep.mubr.bf16.mxu0 0
    %1243 = vmatmul.mubr.bf16.gmra.mrb[0].mxu0 %v1138
    %v1244 = vpop.f32.mrb[0].mxu0
    %v1245 = vadd.f32 %v1160, %v1244
    %v1246 = vpop.f32.mrb[0].mxu0
    %v1247 = vpop.f32.mrb[0].mxu0
    %v1248 = vpop.f32.mrb[0].mxu0
    %1249 = vdwg.mxu0
    %v1250 = vadd.f32 %v345, %v1245
    %1251 = vst.msk [vmem:[#allocation37] sm:$0xff] %vm349, %v1250
    %v1252 = vld [vmem:[#allocation31] sm:$0x1]
    %v1253 = vld [vmem:[#allocation32] sm:$0x1]
    %v1254 = vsel %vm379, %v1028, 0.0
    %1255 = vadd.xlane.f32.xlu0 %v1254
    %v1256 = vpop.xlane.xlu0 %1255
    %v1257 = vmul.f32 %v1256, %v353
    %v1258 = vsub.f32 %v1028, %v1257
    %v1259 = vmul.f32 %v1258, %v1258
    %v1260 = vsel %vm379, %v1259, 0.0
    %1261 = vadd.xlane.f32.xlu0 %v1260
    %v1262 = vpop.xlane.xlu0 %1261
    %v1263 = vmul.f32 %v1262, %v353
    %v1264 = vadd.f32 %v1263, 1e-06
    %v1265 = vrsqrt.pop %v1264
    %v1266 = vmul.f32 %v1258, %v1265
    %v1268 = vlaneseq
    %v1269 = vshrl.u32 %v1268, 7
    %v1270 = vsub.s32 0, %v1269
    %v1271 = vrot.slane %v1252, %v1270
    %v1273 = vmul.f32 %v1266, %v1271
    %v1275 = vlaneseq
    %v1276 = vshrl.u32 %v1275, 7
    %v1277 = vsub.s32 0, %v1276
    %v1278 = vrot.slane %v1253, %v1277
    %v1280 = vadd.f32 %v1273, %v1278
    %v1281 = vpack.c.bf16 %v1280, %v1280
    %v1282 = vld [vmem:[#allocation34] sm:$0xf]
    %v1283 = vld [vmem:[#allocation34 + $0x4] sm:$0xf]
    %v1284 = vld [vmem:[#allocation34 + $0x8] sm:$0xf]
    %v1285 = vld [vmem:[#allocation34 + $0xc] sm:$0xf]
    %v1286 = vld [vmem:[#allocation34 + $0x10] sm:$0xf]
    %v1287 = vld [vmem:[#allocation34 + $0x14] sm:$0xf]
    %v1288 = vld [vmem:[#allocation34 + $0x18] sm:$0xf]
    %v1289 = vld [vmem:[#allocation34 + $0x1c] sm:$0xf]
    %v1290 = vld [vmem:[#allocation35] sm:$0x1]
    %v1292 = vlaneseq
    %v1293 = vshrl.u32 %v1292, 7
    %v1294 = vsub.s32 0, %v1293
    %v1295 = vrot.slane %v1290, %v1294
    %v1305 = vunpack.c.l.b16 %v1282
    %v1306 = vunpack.c.l.b16 %v1283
    %v1307 = vunpack.c.l.b16 %v1284
    %v1308 = vunpack.c.l.b16 %v1285
    %v1309 = vunpack.c.l.b16 %v1286
    %v1310 = vunpack.c.l.b16 %v1287
    %v1311 = vunpack.c.l.b16 %v1288
    %v1312 = vunpack.c.l.b16 %v1289
    %v1313 = vpack.c.b16 %v1306, %v1305
    %v1314 = vpack.c.b16 %v1308, %v1307
    %v1315 = vpack.c.b16 %v1310, %v1309
    %v1316 = vpack.c.b16 %v1312, %v1311
    %v1322 = vsel %vm349, %v1281, 0
    %1324 = vmatprep.subr.bf16.mxu0 0
    %1325 = vmatpush1.bf16.msra.mxu0 %v1313
    %1326 = vmatprep.subr.bf16.mxu0 0
    %1327 = vmatpush1.bf16.msra.mxu0 %v1314
    %1328 = vmatprep.subr.bf16.mxu0 0
    %1329 = vmatpush1.bf16.msra.mxu0 %v1315
    %1330 = vmatprep.subr.bf16.mxu0 0
    %1331 = vmatpush1.bf16.msra.mxu0 %v1316
    %1332 = vmatprep.subr.bf16.mxu0 0
    %1333 = vmatpush1.bf16.msra.mxu0 0
    %1334 = vmatprep.subr.bf16.mxu0 0
    %1335 = vmatpush1.bf16.msra.mxu0 0
    %1336 = vmatprep.subr.bf16.mxu0 0
    %1337 = vmatpush1.bf16.msra.mxu0 0
    %1338 = vmatprep.subr.bf16.mxu0 0
    %1339 = vmatpush1.bf16.msra.mxu0 0
    %1340 = vmatprep.subr.bf16.mxu0 0
    %1341 = vmatpush1.bf16.msra.mxu0 0
    %1342 = vmatprep.subr.bf16.mxu0 0
    %1343 = vmatpush1.bf16.msra.mxu0 0
    %1344 = vmatprep.subr.bf16.mxu0 0
    %1345 = vmatpush1.bf16.msra.mxu0 0
    %1346 = vmatprep.subr.bf16.mxu0 0
    %1347 = vmatpush1.bf16.msra.mxu0 0
    %1348 = vmatprep.subr.bf16.mxu0 0
    %1349 = vmatpush1.bf16.msra.mxu0 0
    %1350 = vmatprep.subr.bf16.mxu0 0
    %1351 = vmatpush1.bf16.msra.mxu0 0
    %1352 = vmatprep.subr.bf16.mxu0 0
    %1353 = vmatpush1.bf16.msra.mxu0 0
    %1354 = vmatprep.subr.bf16.mxu0 0
    %1355 = vmatpush1.bf16.msra.mxu0 0
    %1356 = vmatprep.mubr.bf16.mxu0 0
    %1357 = vmatmul.mubr.bf16.gmra.mrb[0].mxu0 %v1322
    %v1358 = vpop.f32.mrb[0].mxu0
    %v1359 = vadd.f32 %v1295, %v1358
    %v1360 = vpop.f32.mrb[0].mxu0
    %v1361 = vpop.f32.mrb[0].mxu0
    %v1362 = vpop.f32.mrb[0].mxu0
    %1363 = vdwg.mxu0
    %1364 = vst [vmem:[#allocation40] sm:$0x3] %v1359
    // Predicated region
    $region178: #{_lambda_.9} parent=1 // pred_check
      _
    $region179: #{_lambda_.9} parent=1 // pred_check_branch
      %1366 = sbr.rel (0) target = $region181
    $region180: #{_lambda_.9} parent=1 // pred_region
      %s1368 = ssub.s32 128, 128
      %1369 = vsyncadd [#allocation4], %s1368
      %s1371 = sshll.u32 [#allocation37], 4
      %s1372 = int_to_ptr.vmem [resolvable:$true] %s1371
      %1374 = dma.vmem_to_hbm [thread:$0]  %s1372, 128, %s22, [#allocation4]
    $region181: #{_lambda_.9} parent=1 // pred_fallthru
      _
    // Predicated region
    $region182: #{_lambda_.9} parent=1 // pred_check
      _
    $region183: #{_lambda_.9} parent=1 // pred_check_branch
      %1376 = sbr.rel (0) target = $region185
    $region184: #{_lambda_.9} parent=1 // pred_region
      %s1378 = ssub.s32 32, 32
      %1379 = vsyncadd [#allocation39], %s1378
      %s1381 = sshll.u32 [#allocation38], 4
      %s1382 = int_to_ptr.vmem [resolvable:$true] %s1381
      %1384 = dma.vmem_to_hbm [thread:$0]  %s1382, 32, %s23, [#allocation39]
    $region185: #{_lambda_.9} parent=1 // pred_fallthru
      _
    // Predicated region
    $region186: #{_lambda_.9} parent=1 // pred_check
      _
    $region187: #{_lambda_.9} parent=1 // pred_check_branch
      %1386 = sbr.rel (0) target = $region189
    $region188: #{_lambda_.9} parent=1 // pred_region
      %s1388 = ssub.s32 32, 32
      %1389 = vsyncadd [#allocation39], %s1388
      %s1391 = sshll.u32 [#allocation40], 4
      %s1392 = int_to_ptr.vmem [resolvable:$true] %s1391
      %1394 = dma.vmem_to_hbm [thread:$0]  %s1392, 32, %s24, [#allocation39]
    $region189: #{_lambda_.9} parent=1 // pred_fallthru
      _
    // Predicated region
    $region190: #{_lambda_.9} parent=1 // pred_check
      _
    $region191: #{_lambda_.9} parent=1 // pred_check_branch
      %1396 = sbr.rel (0) target = $region193
    $region192: #{_lambda_.9} parent=1 // pred_region
      %1397 = dma.done [#allocation4], 128
    $region193: #{_lambda_.9} parent=1 // pred_fallthru
      _
    // Predicated region
    $region194: #{_lambda_.9} parent=1 // pred_check
      _
    $region195: #{_lambda_.9} parent=1 // pred_check_branch
      %1399 = sbr.rel (0) target = $region197
    $region196: #{_lambda_.9} parent=1 // pred_region
      %1400 = dma.done [#allocation39], 32
    $region197: #{_lambda_.9} parent=1 // pred_fallthru
      _
    // Predicated region
    $region198: #{_lambda_.9} parent=1 // pred_check
      _
    $region199: #{_lambda_.9} parent=1 // pred_check_branch
      %1402 = sbr.rel (0) target = $region201
    $region200: #{_lambda_.9} parent=1 // pred_region
      %1403 = dma.done [#allocation39], 32
    $region201: #{_lambda_.9} parent=1 // pred_fallthru
      _
    %1404 = vsyncpa [#allocation3], 1
    %1405 = vsyncpa [#allocation6], 1
    %1406 = vsyncpa [#allocation9], 1
    %1407 = vsyncpa [#allocation12], 1
    %1408 = vsyncpa [#allocation15], 1
    %1409 = vsyncpa [#allocation18], 1
    %1410 = vsyncpa [#allocation21], 1
    %1411 = vsyncpa [#allocation24], 1
    %1412 = vsyncpa [#allocation27], 1
    %1413 = vsyncpa [#allocation30], 1
    %1414 = vsyncpa [#allocation33], 1
    %1415 = vsyncpa [#allocation36], 1
    %1416 = vsyncpa [#allocation4], 1
    %1417 = vsyncpa [#allocation39], 1

</llo_original>
